<compile_context>
chip_gen: v5e
topology: v5e:2x2
jax: 0.10.0
libtpu: 0.0.40
codegen_flags: <defaults>
</compile_context>

<pallas_src>
import functools

import jax
import jax.numpy as jnp
from jax.experimental import pallas as pl
from jax.experimental.pallas import tpu as pltpu

# Row-tile for the tiled path: 256 fits comfortably in v5e/v6e VMEM (128 MiB); halve
# it on v7x (64 MiB) or for very wide graphs.
_ROW_TILE = 256
# Below this node count the whole 3-layer forward fits in VMEM -> use the fused kernel.
_FUSE_MAX_NODES = 512


# --------------------------------------------------------------------------- helpers

def _leaky_relu(x, slope=0.2):
    return jnp.where(x > 0, x, slope * x)


def _block_diag_att(att):
    """(heads, out_dim) attention vector -> (heads, heads*out_dim) block-diagonal.

    Row h holds att[h] in columns [h*out_dim, (h+1)*out_dim) and zeros elsewhere, so a
    single A @ xw^T (or xw @ A^T) matmul yields the per-head scores for ALL heads at
    once, replacing 2*heads tiny M=1 matmuls per layer."""
    heads, out_dim = att.shape
    eye = jnp.eye(heads, dtype=att.dtype)
    return (eye[:, :, None] * att[None, :, :]).reshape(heads, heads * out_dim)


def _gat_attention(xw_all, xw_rows, adj_rows, att_src_blk, att_dst_blk, bias,
                   *, heads, out_dim, apply_relu):
    """Multi-head masked attention + aggregation for a block of target rows.

    xw_all    : (N, H*D) f32  projected features of ALL source nodes
    xw_rows   : (M, H*D) f32  projected features of the M target rows of this tile
    adj_rows  : (M, N)        adj_rows[i, j] > 0  iff edge j -> i (self-loops included,
                              so every softmax row has >= 1 unmasked entry -> no NaN)
    att_*_blk : (H, H*D)      block-diagonal attention vectors (_block_diag_att)
    """
    neg = jnp.float32(-1e30)            # fp32 mask value; logits/softmax stay fp32

    # Attention scores for ALL heads in two MXU calls (A @ B^T contractions).
    # s_src[h, j] = <xw_all[j, hD:(h+1)D], att_src[h]>   -> (H, N)   row layout
    s_src = jax.lax.dot_general(att_src_blk, xw_all, (((1,), (1,)), ((), ())),
                                preferred_element_type=jnp.float32)
    # s_dst[i, h] = <xw_rows[i, hD:(h+1)D], att_dst[h]>  -> (M, H)   column layout
    s_dst = jax.lax.dot_general(xw_rows, att_dst_blk, (((1,), (1,)), ((), ())),
                                preferred_element_type=jnp.float32)

    mask = adj_rows > 0
    xw_bf = xw_all.astype(jnp.bfloat16)   # bf16 MXU operand for the aggregation

    outs = []
    for h in range(heads):   # small static unroll; (M, N) temporaries die per head
        e = _leaky_relu(s_dst[:, h:h + 1] + s_src[h:h + 1, :])            # (M, N)
        e = jnp.where(mask, e, neg)
        e = e - jnp.max(e, axis=-1, keepdims=True)
        p = jnp.exp(e)
        # EUP reciprocal instead of a VALU divide.
        attn = p * pl.reciprocal(jnp.sum(p, axis=-1, keepdims=True), approx=True)
        outs.append(jnp.dot(attn.astype(jnp.bfloat16),
                            xw_bf[:, h * out_dim:(h + 1) * out_dim],
                            preferred_element_type=jnp.float32))          # (M, D)

    out = jnp.concatenate(outs, axis=-1) + bias     # single lane-dense result + bias
    if apply_relu:
        out = jnp.maximum(out, 0.0)
    return out


# --------------------------------------------------------------------------- kernels

def _proj_kernel(x_ref, w_ref, xw_ref):
    # Full-width projection: one (TM, F_in) @ (F_in, H*D) bf16 matmul, fp32 accum.
    xw_ref[...] = jnp.dot(x_ref[...].astype(jnp.bfloat16),
                          w_ref[...].astype(jnp.bfloat16),
                          preferred_element_type=jnp.float32)


def _gat_attn_kernel(xw_all_ref, xw_tile_ref, asb_ref, adb_ref, b_ref, adj_ref,
                     out_ref, *, heads, out_dim, apply_relu):
    out_ref[...] = _gat_attention(
        xw_all_ref[...], xw_tile_ref[...], adj_ref[...],
        asb_ref[...], adb_ref[...], b_ref[...],
        heads=heads, out_dim=out_dim, apply_relu=apply_relu)


def _gat_fused_kernel(x_ref, adj_ref,
                      w1_ref, as1_ref, ad1_ref, b1_ref,
                      w2_ref, as2_ref, ad2_ref, b2_ref,
                      w3_ref, as3_ref, ad3_ref, b3_ref,
                      out_ref, *, layer_dims):
    """Whole 3-layer GAT forward; adj and activations stay resident in VMEM."""
    adj = adj_ref[...]
    h = x_ref[...]
    layers = ((w1_ref, as1_ref, ad1_ref, b1_ref),
              (w2_ref, as2_ref, ad2_ref, b2_ref),
              (w3_ref, as3_ref, ad3_ref, b3_ref))
    for (w_ref, as_ref, ad_ref, b_ref), (heads, out_dim, relu) in zip(layers, layer_dims):
        xw = jnp.dot(h.astype(jnp.bfloat16), w_ref[...].astype(jnp.bfloat16),
                     preferred_element_type=jnp.float32)
        h = _gat_attention(xw, xw, adj, as_ref[...], ad_ref[...], b_ref[...],
                           heads=heads, out_dim=out_dim, apply_relu=relu)
        # dropout(p=0.1) between layers: identity in eval mode
    out_ref[...] = h


# --------------------------------------------------------------------------- wrappers

def gat_conv(x, adj, p, *, apply_relu, row_tile=_ROW_TILE):
    """One GATConv layer: projection kernel + row-tiled attention kernel."""
    n, f_in = x.shape
    heads, out_dim = p["att_src"].shape    # static (from shapes) -> jit-safe
    hd = heads * out_dim
    tm = n if n <= row_tile else row_tile
    grid_m = pl.cdiv(n, tm)

    asb = _block_diag_att(p["att_src"])    # (heads, hd)
    adb = _block_diag_att(p["att_dst"])    # (heads, hd)

    parallel = pltpu.CompilerParams(dimension_semantics=("parallel",))

    # Projection hoisted out of the head loop / attention kernel: computed once.
    xw = pl.pallas_call(
        _proj_kernel,
        out_shape=jax.ShapeDtypeStruct((n, hd), jnp.float32),
        grid=(grid_m,),
        in_specs=[pl.BlockSpec((tm, f_in), lambda i: (i, 0)),
                  pl.BlockSpec((f_in, hd), lambda i: (0, 0))],
        out_specs=pl.BlockSpec((tm, hd), lambda i: (i, 0)),
        compiler_params=parallel,
        cost_estimate=pl.CostEstimate(
            flops=2 * n * f_in * hd, transcendentals=0,
            bytes_accessed=4 * (n * f_in + f_in * hd + n * hd)),
    )(x, p["w"])

    attn_kernel = functools.partial(_gat_attn_kernel, heads=heads, out_dim=out_dim,
                                    apply_relu=apply_relu)
    return pl.pallas_call(
        attn_kernel,
        out_shape=jax.ShapeDtypeStruct((n, hd), jnp.float32),
        grid=(grid_m,),
        in_specs=[pl.BlockSpec((n, hd), lambda i: (0, 0)),     # xw of all source nodes
                  pl.BlockSpec((tm, hd), lambda i: (i, 0)),    # xw of the target rows
                  pl.BlockSpec((heads, hd), lambda i: (0, 0)),
                  pl.BlockSpec((heads, hd), lambda i: (0, 0)),
                  pl.BlockSpec((1, hd), lambda i: (0, 0)),
                  pl.BlockSpec((tm, n), lambda i: (i, 0))],    # adj row tile (bf16)
        out_specs=pl.BlockSpec((tm, hd), lambda i: (i, 0)),
        compiler_params=parallel,
        cost_estimate=pl.CostEstimate(
            flops=4 * n * hd * heads + 2 * heads * n * n * out_dim + 8 * heads * n * n,
            transcendentals=heads * n * n,
            bytes_accessed=2 * n * n + 4 * (2 * n * hd + 2 * heads * hd + n * hd)),
    )(xw, xw, asb, adb, p["bias"], adj)


def gat_forward_fused(x, adj, layer_params):
    """All 3 GATConv layers in one pallas_call (small-graph regime)."""
    n, f_in = x.shape
    relus = (True, True, False)
    flat, layer_dims = [x, adj], []
    flops, trans, prev = 0, 0, f_in
    for p, relu in zip(layer_params, relus):
        heads, out_dim = p["att_src"].shape
        hd = heads * out_dim
        layer_dims.append((heads, out_dim, relu))
        flat.extend([p["w"], _block_diag_att(p["att_src"]),
                     _block_diag_att(p["att_dst"]), p["bias"]])
        flops += 2 * n * prev * hd + 2 * heads * n * n * out_dim + 8 * heads * n * n
        trans += heads * n * n
        prev = hd
    num_out = prev
    bytes_accessed = sum(int(a.size) * a.dtype.itemsize for a in flat) + 4 * n * num_out

    kernel = functools.partial(_gat_fused_kernel, layer_dims=tuple(layer_dims))
    return pl.pallas_call(
        kernel,
        out_shape=jax.ShapeDtypeStruct((n, num_out), jnp.float32),
        grid=(1,),
        in_specs=[pl.BlockSpec(a.shape, lambda i: (0, 0)) for a in flat],
        out_specs=pl.BlockSpec((n, num_out), lambda i: (0, 0)),
        cost_estimate=pl.CostEstimate(flops=flops, transcendentals=trans,
                                      bytes_accessed=bytes_accessed),
    )(*flat)


def dense_adjacency(edge_index, num_nodes):
    """adj[target, source] = 1 for every edge, plus self-loops (PyG default).

    Stored as bfloat16 (only used as a >0 mask) to halve HBM->VMEM traffic.  The
    self-loops guarantee no all-masked softmax row (no 0-denominator / NaN)."""
    src, dst = edge_index[0], edge_index[1]
    adj = jnp.zeros((num_nodes, num_nodes), jnp.bfloat16)
    adj = adj.at[dst, src].set(1.0)
    idx = jnp.arange(num_nodes)
    adj = adj.at[idx, idx].set(1.0)
    return adj


def _glorot(key, shape):
    fan_in, fan_out = shape[-2], shape[-1]
    scale = jnp.sqrt(2.0 / (fan_in + fan_out))
    return scale * jax.random.normal(key, shape, dtype=jnp.float32)


def init_gat_params(key, num_node_features, hidden_dim, num_classes):
    """GATConv parameter shapes.  heads/out_dim are carried by the att_* SHAPES, not
    as python ints inside the jitted pytree (that was the previous trace error)."""
    keys = jax.random.split(key, 9)

    def conv(kw, ks, kd, f_in, out_dim, heads):
        return dict(
            w=_glorot(kw, (f_in, heads * out_dim)),
            att_src=_glorot(ks, (heads, out_dim)),
            att_dst=_glorot(kd, (heads, out_dim)),
            bias=jnp.zeros((1, heads * out_dim), jnp.float32),
        )

    return {
        "conv1": conv(keys[0], keys[1], keys[2], num_node_features, hidden_dim, 4),
        "conv2": conv(keys[3], keys[4], keys[5], 4 * hidden_dim, hidden_dim, 4),
        "conv3": conv(keys[6], keys[7], keys[8], 4 * hidden_dim, num_classes, 1),
    }


def gat_forward(params, x, edge_index, *, fuse_small_graph=True):
    """x = relu(conv1(x)); x = dropout(x); x = relu(conv2(x)); x = dropout(x); conv3(x)."""
    n = x.shape[0]
    adj = dense_adjacency(edge_index, n)        # built once, reused by all three layers
    p1, p2, p3 = params["conv1"], params["conv2"], params["conv3"]
    if fuse_small_graph and n <= _FUSE_MAX_NODES:
        return gat_forward_fused(x, adj, (p1, p2, p3))
    h = gat_conv(x, adj, p1, apply_relu=True)
    # dropout(p=0.1): identity in eval mode
    h = gat_conv(h, adj, p2, apply_relu=True)
    # dropout(p=0.1): identity in eval mode
    return gat_conv(h, adj, p3, apply_relu=False)


if __name__ == "__main__":
    # Small, deterministic problem (shapes consistent with the module: hidden_dim=64,
    # num_classes=5; 64 nodes, 16 input features, 256 random edges).
    num_nodes = 64
    num_node_features = 16
    hidden_dim = 64
    num_classes = 5
    num_edges = 256

    root = jax.random.PRNGKey(0)
    k_x, k_src, k_dst, k_params = jax.random.split(root, 4)

    x = jax.random.normal(k_x, (num_nodes, num_node_features), dtype=jnp.float32)
    edge_index = jnp.stack([
        jax.random.randint(k_src, (num_edges,), 0, num_nodes),
        jax.random.randint(k_dst, (num_edges,), 0, num_nodes),
    ]).astype(jnp.int32)                                   # (2, E)

    params = init_gat_params(k_params, num_node_features, hidden_dim, num_classes)

    fwd_fused = jax.jit(functools.partial(gat_forward, fuse_small_graph=True))
    fwd_tiled = jax.jit(functools.partial(gat_forward, fuse_small_graph=False))

    out_fused = jax.block_until_ready(fwd_fused(params, x, edge_index))
    out_tiled = jax.block_until_ready(fwd_tiled(params, x, edge_index))

    assert out_fused.shape == (num_nodes, num_classes)
    assert out_tiled.shape == (num_nodes, num_classes)
    assert bool(jnp.all(jnp.isfinite(out_fused)))
    assert bool(jnp.all(jnp.isfinite(out_tiled)))
    assert bool(jnp.allclose(out_fused, out_tiled, atol=1e-2, rtol=1e-2))
    print("KERNEL_OK")
</pallas_src>

<mosaic_0001>
module attributes {stable_mosaic.version = 11 : i64} {
  func.func @_gat_fused_kernel(%arg0: i32, %arg1: memref<64x16xf32, #tpu.memory_space<vmem>>, %arg2: memref<64x64xbf16, #tpu.memory_space<vmem>>, %arg3: memref<16x256xf32, #tpu.memory_space<vmem>>, %arg4: memref<4x256xf32, #tpu.memory_space<vmem>>, %arg5: memref<4x256xf32, #tpu.memory_space<vmem>>, %arg6: memref<1x256xf32, #tpu.memory_space<vmem>>, %arg7: memref<256x256xf32, #tpu.memory_space<vmem>>, %arg8: memref<4x256xf32, #tpu.memory_space<vmem>>, %arg9: memref<4x256xf32, #tpu.memory_space<vmem>>, %arg10: memref<1x256xf32, #tpu.memory_space<vmem>>, %arg11: memref<256x5xf32, #tpu.memory_space<vmem>>, %arg12: memref<1x5xf32, #tpu.memory_space<vmem>>, %arg13: memref<1x5xf32, #tpu.memory_space<vmem>>, %arg14: memref<1x5xf32, #tpu.memory_space<vmem>>, %arg15: memref<64x5xf32, #tpu.memory_space<vmem>>) attributes {dimension_semantics = [#tpu.dimension_semantics<arbitrary>], iteration_bounds = array<i64: 1>, scalar_prefetch = 0 : i64, scratch_operands = 0 : i64, tpu.core_type = #tpu.core_type<tc>, window_params = [{pipeline_mode = #tpu.pipeline_mode<synchronous>, transform_indices = @transform_0, window_bounds = array<i64: 64, 16>}, {pipeline_mode = #tpu.pipeline_mode<synchronous>, transform_indices = @transform_1, window_bounds = array<i64: 64, 64>}, {pipeline_mode = #tpu.pipeline_mode<synchronous>, transform_indices = @transform_2, window_bounds = array<i64: 16, 256>}, {pipeline_mode = #tpu.pipeline_mode<synchronous>, transform_indices = @transform_3, window_bounds = array<i64: 4, 256>}, {pipeline_mode = #tpu.pipeline_mode<synchronous>, transform_indices = @transform_4, window_bounds = array<i64: 4, 256>}, {pipeline_mode = #tpu.pipeline_mode<synchronous>, transform_indices = @transform_5, window_bounds = array<i64: 1, 256>}, {pipeline_mode = #tpu.pipeline_mode<synchronous>, transform_indices = @transform_6, window_bounds = array<i64: 256, 256>}, {pipeline_mode = #tpu.pipeline_mode<synchronous>, transform_indices = @transform_7, window_bounds = array<i64: 4, 256>}, {pipeline_mode = #tpu.pipeline_mode<synchronous>, transform_indices = @transform_8, window_bounds = array<i64: 4, 256>}, {pipeline_mode = #tpu.pipeline_mode<synchronous>, transform_indices = @transform_9, window_bounds = array<i64: 1, 256>}, {pipeline_mode = #tpu.pipeline_mode<synchronous>, transform_indices = @transform_10, window_bounds = array<i64: 256, 5>}, {pipeline_mode = #tpu.pipeline_mode<synchronous>, transform_indices = @transform_11, window_bounds = array<i64: 1, 5>}, {pipeline_mode = #tpu.pipeline_mode<synchronous>, transform_indices = @transform_12, window_bounds = array<i64: 1, 5>}, {pipeline_mode = #tpu.pipeline_mode<synchronous>, transform_indices = @transform_13, window_bounds = array<i64: 1, 5>}, {pipeline_mode = #tpu.pipeline_mode<synchronous>, transform_indices = @transform_14, window_bounds = array<i64: 64, 5>}]} {
    %c0 = arith.constant 0 : index
    %c0_0 = arith.constant 0 : index
    %0 = vector.load %arg2[%c0, %c0_0] : memref<64x64xbf16, #tpu.memory_space<vmem>>, vector<64x64xbf16>
    %c0_1 = arith.constant 0 : index
    %c0_2 = arith.constant 0 : index
    %1 = vector.load %arg1[%c0_1, %c0_2] : memref<64x16xf32, #tpu.memory_space<vmem>>, vector<64x16xf32>
    %2 = arith.truncf %1 : vector<64x16xf32> to vector<64x16xbf16>
    %c0_3 = arith.constant 0 : index
    %c0_4 = arith.constant 0 : index
    %3 = vector.load %arg3[%c0_3, %c0_4] : memref<16x256xf32, #tpu.memory_space<vmem>>, vector<16x256xf32>
    %4 = arith.truncf %3 : vector<16x256xf32> to vector<16x256xbf16>
    %cst = arith.constant dense<0.000000e+00> : vector<64x256xf32>
    %5 = tpu.matmul %2, %4, %cst {dimension_numbers = #tpu.dot_dimension_numbers<[1], [0], [0], [1], [0, 0, 1, 1], [], []>} : vector<64x16xbf16>, vector<16x256xbf16>, vector<64x256xf32> -> vector<64x256xf32>
    %c0_5 = arith.constant 0 : index
    %c0_6 = arith.constant 0 : index
    %6 = vector.load %arg4[%c0_5, %c0_6] : memref<4x256xf32, #tpu.memory_space<vmem>>, vector<4x256xf32>
    %c0_7 = arith.constant 0 : index
    %c0_8 = arith.constant 0 : index
    %7 = vector.load %arg5[%c0_7, %c0_8] : memref<4x256xf32, #tpu.memory_space<vmem>>, vector<4x256xf32>
    %c0_9 = arith.constant 0 : index
    %c0_10 = arith.constant 0 : index
    %8 = vector.load %arg6[%c0_9, %c0_10] : memref<1x256xf32, #tpu.memory_space<vmem>>, vector<1x256xf32>
    %cst_11 = arith.constant dense<0.000000e+00> : vector<4x64xf32>
    %9 = tpu.matmul %6, %5, %cst_11 {dimension_numbers = #tpu.dot_dimension_numbers<[1], [1], [0], [0], [0, 0, 1, 0], [], []>} : vector<4x256xf32>, vector<64x256xf32>, vector<4x64xf32> -> vector<4x64xf32>
    %cst_12 = arith.constant dense<0.000000e+00> : vector<64x4xf32>
    %10 = tpu.matmul %5, %7, %cst_12 {dimension_numbers = #tpu.dot_dimension_numbers<[1], [1], [0], [0], [0, 0, 1, 0], [], []>} : vector<64x256xf32>, vector<4x256xf32>, vector<64x4xf32> -> vector<64x4xf32>
    %cst_13 = arith.constant 0.000000e+00 : bf16
    %11 = vector.broadcast %cst_13 : bf16 to vector<64x64xbf16>
    %12 = arith.cmpf ogt, %0, %11 : vector<64x64xbf16>
    %13 = arith.truncf %5 : vector<64x256xf32> to vector<64x256xbf16>
    %14 = vector.extract_strided_slice %10 {offsets = [0, 0], sizes = [64, 1], strides = [1, 1]} : vector<64x4xf32> to vector<64x1xf32>
    %15 = vector.extract_strided_slice %9 {offsets = [0, 0], sizes = [1, 64], strides = [1, 1]} : vector<4x64xf32> to vector<1x64xf32>
    %16 = vector.broadcast %14 : vector<64x1xf32> to vector<64x64xf32>
    %17 = vector.broadcast %15 : vector<1x64xf32> to vector<64x64xf32>
    %18 = arith.addf %16, %17 : vector<64x64xf32>
    %cst_14 = arith.constant 0.000000e+00 : f32
    %19 = vector.broadcast %cst_14 : f32 to vector<64x64xf32>
    %20 = arith.cmpf ogt, %18, %19 : vector<64x64xf32>
    %cst_15 = arith.constant 2.000000e-01 : f32
    %21 = vector.broadcast %cst_15 : f32 to vector<64x64xf32>
    %22 = arith.mulf %21, %18 : vector<64x64xf32>
    %23 = arith.select %20, %18, %22 : vector<64x64xi1>, vector<64x64xf32>
    %cst_16 = arith.constant -1.000000e+30 : f32
    %24 = vector.broadcast %cst_16 : f32 to vector<64x64xf32>
    %25 = arith.select %12, %23, %24 : vector<64x64xi1>, vector<64x64xf32>
    %cst_17 = arith.constant dense<0xFF800000> : vector<64xf32>
    %26 = vector.multi_reduction <maximumf>, %25, %cst_17 [1] : vector<64x64xf32> to vector<64xf32>
    %27 = vector.shape_cast %26 : vector<64xf32> to vector<64x1xf32>
    %28 = vector.broadcast %27 : vector<64x1xf32> to vector<64x64xf32>
    %29 = arith.subf %25, %28 : vector<64x64xf32>
    %30 = math.exp %29 : vector<64x64xf32>
    %cst_18 = arith.constant dense<0.000000e+00> : vector<64xf32>
    %31 = vector.multi_reduction <add>, %30, %cst_18 [1] : vector<64x64xf32> to vector<64xf32>
    %32 = vector.shape_cast %31 : vector<64xf32> to vector<64x1xf32>
    %33 = tpu.reciprocal %32 {approx = true} : vector<64x1xf32> -> vector<64x1xf32>
    %34 = vector.broadcast %33 : vector<64x1xf32> to vector<64x64xf32>
    %35 = arith.mulf %30, %34 : vector<64x64xf32>
    %36 = arith.truncf %35 : vector<64x64xf32> to vector<64x64xbf16>
    %37 = vector.extract_strided_slice %13 {offsets = [0, 0], sizes = [64, 64], strides = [1, 1]} : vector<64x256xbf16> to vector<64x64xbf16>
    %cst_19 = arith.constant dense<0.000000e+00> : vector<64x64xf32>
    %38 = tpu.matmul %36, %37, %cst_19 {dimension_numbers = #tpu.dot_dimension_numbers<[1], [0], [0], [1], [0, 0, 1, 1], [], []>} : vector<64x64xbf16>, vector<64x64xbf16>, vector<64x64xf32> -> vector<64x64xf32>
    %39 = vector.extract_strided_slice %10 {offsets = [0, 1], sizes = [64, 1], strides = [1, 1]} : vector<64x4xf32> to vector<64x1xf32>
    %40 = vector.extract_strided_slice %9 {offsets = [1, 0], sizes = [1, 64], strides = [1, 1]} : vector<4x64xf32> to vector<1x64xf32>
    %41 = vector.broadcast %39 : vector<64x1xf32> to vector<64x64xf32>
    %42 = vector.broadcast %40 : vector<1x64xf32> to vector<64x64xf32>
    %43 = arith.addf %41, %42 : vector<64x64xf32>
    %cst_20 = arith.constant 0.000000e+00 : f32
    %44 = vector.broadcast %cst_20 : f32 to vector<64x64xf32>
    %45 = arith.cmpf ogt, %43, %44 : vector<64x64xf32>
    %cst_21 = arith.constant 2.000000e-01 : f32
    %46 = vector.broadcast %cst_21 : f32 to vector<64x64xf32>
    %47 = arith.mulf %46, %43 : vector<64x64xf32>
    %48 = arith.select %45, %43, %47 : vector<64x64xi1>, vector<64x64xf32>
    %cst_22 = arith.constant -1.000000e+30 : f32
    %49 = vector.broadcast %cst_22 : f32 to vector<64x64xf32>
    %50 = arith.select %12, %48, %49 : vector<64x64xi1>, vector<64x64xf32>
    %cst_23 = arith.constant dense<0xFF800000> : vector<64xf32>
    %51 = vector.multi_reduction <maximumf>, %50, %cst_23 [1] : vector<64x64xf32> to vector<64xf32>
    %52 = vector.shape_cast %51 : vector<64xf32> to vector<64x1xf32>
    %53 = vector.broadcast %52 : vector<64x1xf32> to vector<64x64xf32>
    %54 = arith.subf %50, %53 : vector<64x64xf32>
    %55 = math.exp %54 : vector<64x64xf32>
    %cst_24 = arith.constant dense<0.000000e+00> : vector<64xf32>
    %56 = vector.multi_reduction <add>, %55, %cst_24 [1] : vector<64x64xf32> to vector<64xf32>
    %57 = vector.shape_cast %56 : vector<64xf32> to vector<64x1xf32>
    %58 = tpu.reciprocal %57 {approx = true} : vector<64x1xf32> -> vector<64x1xf32>
    %59 = vector.broadcast %58 : vector<64x1xf32> to vector<64x64xf32>
    %60 = arith.mulf %55, %59 : vector<64x64xf32>
    %61 = arith.truncf %60 : vector<64x64xf32> to vector<64x64xbf16>
    %62 = vector.extract_strided_slice %13 {offsets = [0, 64], sizes = [64, 64], strides = [1, 1]} : vector<64x256xbf16> to vector<64x64xbf16>
    %cst_25 = arith.constant dense<0.000000e+00> : vector<64x64xf32>
    %63 = tpu.matmul %61, %62, %cst_25 {dimension_numbers = #tpu.dot_dimension_numbers<[1], [0], [0], [1], [0, 0, 1, 1], [], []>} : vector<64x64xbf16>, vector<64x64xbf16>, vector<64x64xf32> -> vector<64x64xf32>
    %64 = vector.extract_strided_slice %10 {offsets = [0, 2], sizes = [64, 1], strides = [1, 1]} : vector<64x4xf32> to vector<64x1xf32>
    %65 = vector.extract_strided_slice %9 {offsets = [2, 0], sizes = [1, 64], strides = [1, 1]} : vector<4x64xf32> to vector<1x64xf32>
    %66 = vector.broadcast %64 : vector<64x1xf32> to vector<64x64xf32>
    %67 = vector.broadcast %65 : vector<1x64xf32> to vector<64x64xf32>
    %68 = arith.addf %66, %67 : vector<64x64xf32>
    %cst_26 = arith.constant 0.000000e+00 : f32
    %69 = vector.broadcast %cst_26 : f32 to vector<64x64xf32>
    %70 = arith.cmpf ogt, %68, %69 : vector<64x64xf32>
    %cst_27 = arith.constant 2.000000e-01 : f32
    %71 = vector.broadcast %cst_27 : f32 to vector<64x64xf32>
    %72 = arith.mulf %71, %68 : vector<64x64xf32>
    %73 = arith.select %70, %68, %72 : vector<64x64xi1>, vector<64x64xf32>
    %cst_28 = arith.constant -1.000000e+30 : f32
    %74 = vector.broadcast %cst_28 : f32 to vector<64x64xf32>
    %75 = arith.select %12, %73, %74 : vector<64x64xi1>, vector<64x64xf32>
    %cst_29 = arith.constant dense<0xFF800000> : vector<64xf32>
    %76 = vector.multi_reduction <maximumf>, %75, %cst_29 [1] : vector<64x64xf32> to vector<64xf32>
    %77 = vector.shape_cast %76 : vector<64xf32> to vector<64x1xf32>
    %78 = vector.broadcast %77 : vector<64x1xf32> to vector<64x64xf32>
    %79 = arith.subf %75, %78 : vector<64x64xf32>
    %80 = math.exp %79 : vector<64x64xf32>
    %cst_30 = arith.constant dense<0.000000e+00> : vector<64xf32>
    %81 = vector.multi_reduction <add>, %80, %cst_30 [1] : vector<64x64xf32> to vector<64xf32>
    %82 = vector.shape_cast %81 : vector<64xf32> to vector<64x1xf32>
    %83 = tpu.reciprocal %82 {approx = true} : vector<64x1xf32> -> vector<64x1xf32>
    %84 = vector.broadcast %83 : vector<64x1xf32> to vector<64x64xf32>
    %85 = arith.mulf %80, %84 : vector<64x64xf32>
    %86 = arith.truncf %85 : vector<64x64xf32> to vector<64x64xbf16>
    %87 = vector.extract_strided_slice %13 {offsets = [0, 128], sizes = [64, 64], strides = [1, 1]} : vector<64x256xbf16> to vector<64x64xbf16>
    %cst_31 = arith.constant dense<0.000000e+00> : vector<64x64xf32>
    %88 = tpu.matmul %86, %87, %cst_31 {dimension_numbers = #tpu.dot_dimension_numbers<[1], [0], [0], [1], [0, 0, 1, 1], [], []>} : vector<64x64xbf16>, vector<64x64xbf16>, vector<64x64xf32> -> vector<64x64xf32>
    %89 = vector.extract_strided_slice %10 {offsets = [0, 3], sizes = [64, 1], strides = [1, 1]} : vector<64x4xf32> to vector<64x1xf32>
    %90 = vector.extract_strided_slice %9 {offsets = [3, 0], sizes = [1, 64], strides = [1, 1]} : vector<4x64xf32> to vector<1x64xf32>
    %91 = vector.broadcast %89 : vector<64x1xf32> to vector<64x64xf32>
    %92 = vector.broadcast %90 : vector<1x64xf32> to vector<64x64xf32>
    %93 = arith.addf %91, %92 : vector<64x64xf32>
    %cst_32 = arith.constant 0.000000e+00 : f32
    %94 = vector.broadcast %cst_32 : f32 to vector<64x64xf32>
    %95 = arith.cmpf ogt, %93, %94 : vector<64x64xf32>
    %cst_33 = arith.constant 2.000000e-01 : f32
    %96 = vector.broadcast %cst_33 : f32 to vector<64x64xf32>
    %97 = arith.mulf %96, %93 : vector<64x64xf32>
    %98 = arith.select %95, %93, %97 : vector<64x64xi1>, vector<64x64xf32>
    %cst_34 = arith.constant -1.000000e+30 : f32
    %99 = vector.broadcast %cst_34 : f32 to vector<64x64xf32>
    %100 = arith.select %12, %98, %99 : vector<64x64xi1>, vector<64x64xf32>
    %cst_35 = arith.constant dense<0xFF800000> : vector<64xf32>
    %101 = vector.multi_reduction <maximumf>, %100, %cst_35 [1] : vector<64x64xf32> to vector<64xf32>
    %102 = vector.shape_cast %101 : vector<64xf32> to vector<64x1xf32>
    %103 = vector.broadcast %102 : vector<64x1xf32> to vector<64x64xf32>
    %104 = arith.subf %100, %103 : vector<64x64xf32>
    %105 = math.exp %104 : vector<64x64xf32>
    %cst_36 = arith.constant dense<0.000000e+00> : vector<64xf32>
    %106 = vector.multi_reduction <add>, %105, %cst_36 [1] : vector<64x64xf32> to vector<64xf32>
    %107 = vector.shape_cast %106 : vector<64xf32> to vector<64x1xf32>
    %108 = tpu.reciprocal %107 {approx = true} : vector<64x1xf32> -> vector<64x1xf32>
    %109 = vector.broadcast %108 : vector<64x1xf32> to vector<64x64xf32>
    %110 = arith.mulf %105, %109 : vector<64x64xf32>
    %111 = arith.truncf %110 : vector<64x64xf32> to vector<64x64xbf16>
    %112 = vector.extract_strided_slice %13 {offsets = [0, 192], sizes = [64, 64], strides = [1, 1]} : vector<64x256xbf16> to vector<64x64xbf16>
    %cst_37 = arith.constant dense<0.000000e+00> : vector<64x64xf32>
    %113 = tpu.matmul %111, %112, %cst_37 {dimension_numbers = #tpu.dot_dimension_numbers<[1], [0], [0], [1], [0, 0, 1, 1], [], []>} : vector<64x64xbf16>, vector<64x64xbf16>, vector<64x64xf32> -> vector<64x64xf32>
    %114 = tpu.concatenate %38, %63, %88, %113 in 1 : vector<64x64xf32>, vector<64x64xf32>, vector<64x64xf32>, vector<64x64xf32> -> vector<64x256xf32>
    %115 = vector.broadcast %8 : vector<1x256xf32> to vector<64x256xf32>
    %116 = arith.addf %114, %115 : vector<64x256xf32>
    %cst_38 = arith.constant 0.000000e+00 : f32
    %117 = vector.broadcast %cst_38 : f32 to vector<64x256xf32>
    %118 = arith.maximumf %116, %117 : vector<64x256xf32>
    %119 = arith.truncf %118 : vector<64x256xf32> to vector<64x256xbf16>
    %c0_39 = arith.constant 0 : index
    %c0_40 = arith.constant 0 : index
    %120 = vector.load %arg7[%c0_39, %c0_40] : memref<256x256xf32, #tpu.memory_space<vmem>>, vector<256x256xf32>
    %121 = arith.truncf %120 : vector<256x256xf32> to vector<256x256xbf16>
    %cst_41 = arith.constant dense<0.000000e+00> : vector<64x256xf32>
    %122 = tpu.matmul %119, %121, %cst_41 {dimension_numbers = #tpu.dot_dimension_numbers<[1], [0], [0], [1], [0, 0, 1, 1], [], []>} : vector<64x256xbf16>, vector<256x256xbf16>, vector<64x256xf32> -> vector<64x256xf32>
    %c0_42 = arith.constant 0 : index
    %c0_43 = arith.constant 0 : index
    %123 = vector.load %arg8[%c0_42, %c0_43] : memref<4x256xf32, #tpu.memory_space<vmem>>, vector<4x256xf32>
    %c0_44 = arith.constant 0 : index
    %c0_45 = arith.constant 0 : index
    %124 = vector.load %arg9[%c0_44, %c0_45] : memref<4x256xf32, #tpu.memory_space<vmem>>, vector<4x256xf32>
    %c0_46 = arith.constant 0 : index
    %c0_47 = arith.constant 0 : index
    %125 = vector.load %arg10[%c0_46, %c0_47] : memref<1x256xf32, #tpu.memory_space<vmem>>, vector<1x256xf32>
    %cst_48 = arith.constant dense<0.000000e+00> : vector<4x64xf32>
    %126 = tpu.matmul %123, %122, %cst_48 {dimension_numbers = #tpu.dot_dimension_numbers<[1], [1], [0], [0], [0, 0, 1, 0], [], []>} : vector<4x256xf32>, vector<64x256xf32>, vector<4x64xf32> -> vector<4x64xf32>
    %cst_49 = arith.constant dense<0.000000e+00> : vector<64x4xf32>
    %127 = tpu.matmul %122, %124, %cst_49 {dimension_numbers = #tpu.dot_dimension_numbers<[1], [1], [0], [0], [0, 0, 1, 0], [], []>} : vector<64x256xf32>, vector<4x256xf32>, vector<64x4xf32> -> vector<64x4xf32>
    %cst_50 = arith.constant 0.000000e+00 : bf16
    %128 = vector.broadcast %cst_50 : bf16 to vector<64x64xbf16>
    %129 = arith.cmpf ogt, %0, %128 : vector<64x64xbf16>
    %130 = arith.truncf %122 : vector<64x256xf32> to vector<64x256xbf16>
    %131 = vector.extract_strided_slice %127 {offsets = [0, 0], sizes = [64, 1], strides = [1, 1]} : vector<64x4xf32> to vector<64x1xf32>
    %132 = vector.extract_strided_slice %126 {offsets = [0, 0], sizes = [1, 64], strides = [1, 1]} : vector<4x64xf32> to vector<1x64xf32>
    %133 = vector.broadcast %131 : vector<64x1xf32> to vector<64x64xf32>
    %134 = vector.broadcast %132 : vector<1x64xf32> to vector<64x64xf32>
    %135 = arith.addf %133, %134 : vector<64x64xf32>
    %cst_51 = arith.constant 0.000000e+00 : f32
    %136 = vector.broadcast %cst_51 : f32 to vector<64x64xf32>
    %137 = arith.cmpf ogt, %135, %136 : vector<64x64xf32>
    %cst_52 = arith.constant 2.000000e-01 : f32
    %138 = vector.broadcast %cst_52 : f32 to vector<64x64xf32>
    %139 = arith.mulf %138, %135 : vector<64x64xf32>
    %140 = arith.select %137, %135, %139 : vector<64x64xi1>, vector<64x64xf32>
    %cst_53 = arith.constant -1.000000e+30 : f32
    %141 = vector.broadcast %cst_53 : f32 to vector<64x64xf32>
    %142 = arith.select %129, %140, %141 : vector<64x64xi1>, vector<64x64xf32>
    %cst_54 = arith.constant dense<0xFF800000> : vector<64xf32>
    %143 = vector.multi_reduction <maximumf>, %142, %cst_54 [1] : vector<64x64xf32> to vector<64xf32>
    %144 = vector.shape_cast %143 : vector<64xf32> to vector<64x1xf32>
    %145 = vector.broadcast %144 : vector<64x1xf32> to vector<64x64xf32>
    %146 = arith.subf %142, %145 : vector<64x64xf32>
    %147 = math.exp %146 : vector<64x64xf32>
    %cst_55 = arith.constant dense<0.000000e+00> : vector<64xf32>
    %148 = vector.multi_reduction <add>, %147, %cst_55 [1] : vector<64x64xf32> to vector<64xf32>
    %149 = vector.shape_cast %148 : vector<64xf32> to vector<64x1xf32>
    %150 = tpu.reciprocal %149 {approx = true} : vector<64x1xf32> -> vector<64x1xf32>
    %151 = vector.broadcast %150 : vector<64x1xf32> to vector<64x64xf32>
    %152 = arith.mulf %147, %151 : vector<64x64xf32>
    %153 = arith.truncf %152 : vector<64x64xf32> to vector<64x64xbf16>
    %154 = vector.extract_strided_slice %130 {offsets = [0, 0], sizes = [64, 64], strides = [1, 1]} : vector<64x256xbf16> to vector<64x64xbf16>
    %cst_56 = arith.constant dense<0.000000e+00> : vector<64x64xf32>
    %155 = tpu.matmul %153, %154, %cst_56 {dimension_numbers = #tpu.dot_dimension_numbers<[1], [0], [0], [1], [0, 0, 1, 1], [], []>} : vector<64x64xbf16>, vector<64x64xbf16>, vector<64x64xf32> -> vector<64x64xf32>
    %156 = vector.extract_strided_slice %127 {offsets = [0, 1], sizes = [64, 1], strides = [1, 1]} : vector<64x4xf32> to vector<64x1xf32>
    %157 = vector.extract_strided_slice %126 {offsets = [1, 0], sizes = [1, 64], strides = [1, 1]} : vector<4x64xf32> to vector<1x64xf32>
    %158 = vector.broadcast %156 : vector<64x1xf32> to vector<64x64xf32>
    %159 = vector.broadcast %157 : vector<1x64xf32> to vector<64x64xf32>
    %160 = arith.addf %158, %159 : vector<64x64xf32>
    %cst_57 = arith.constant 0.000000e+00 : f32
    %161 = vector.broadcast %cst_57 : f32 to vector<64x64xf32>
    %162 = arith.cmpf ogt, %160, %161 : vector<64x64xf32>
    %cst_58 = arith.constant 2.000000e-01 : f32
    %163 = vector.broadcast %cst_58 : f32 to vector<64x64xf32>
    %164 = arith.mulf %163, %160 : vector<64x64xf32>
    %165 = arith.select %162, %160, %164 : vector<64x64xi1>, vector<64x64xf32>
    %cst_59 = arith.constant -1.000000e+30 : f32
    %166 = vector.broadcast %cst_59 : f32 to vector<64x64xf32>
    %167 = arith.select %129, %165, %166 : vector<64x64xi1>, vector<64x64xf32>
    %cst_60 = arith.constant dense<0xFF800000> : vector<64xf32>
    %168 = vector.multi_reduction <maximumf>, %167, %cst_60 [1] : vector<64x64xf32> to vector<64xf32>
    %169 = vector.shape_cast %168 : vector<64xf32> to vector<64x1xf32>
    %170 = vector.broadcast %169 : vector<64x1xf32> to vector<64x64xf32>
    %171 = arith.subf %167, %170 : vector<64x64xf32>
    %172 = math.exp %171 : vector<64x64xf32>
    %cst_61 = arith.constant dense<0.000000e+00> : vector<64xf32>
    %173 = vector.multi_reduction <add>, %172, %cst_61 [1] : vector<64x64xf32> to vector<64xf32>
    %174 = vector.shape_cast %173 : vector<64xf32> to vector<64x1xf32>
    %175 = tpu.reciprocal %174 {approx = true} : vector<64x1xf32> -> vector<64x1xf32>
    %176 = vector.broadcast %175 : vector<64x1xf32> to vector<64x64xf32>
    %177 = arith.mulf %172, %176 : vector<64x64xf32>
    %178 = arith.truncf %177 : vector<64x64xf32> to vector<64x64xbf16>
    %179 = vector.extract_strided_slice %130 {offsets = [0, 64], sizes = [64, 64], strides = [1, 1]} : vector<64x256xbf16> to vector<64x64xbf16>
    %cst_62 = arith.constant dense<0.000000e+00> : vector<64x64xf32>
    %180 = tpu.matmul %178, %179, %cst_62 {dimension_numbers = #tpu.dot_dimension_numbers<[1], [0], [0], [1], [0, 0, 1, 1], [], []>} : vector<64x64xbf16>, vector<64x64xbf16>, vector<64x64xf32> -> vector<64x64xf32>
    %181 = vector.extract_strided_slice %127 {offsets = [0, 2], sizes = [64, 1], strides = [1, 1]} : vector<64x4xf32> to vector<64x1xf32>
    %182 = vector.extract_strided_slice %126 {offsets = [2, 0], sizes = [1, 64], strides = [1, 1]} : vector<4x64xf32> to vector<1x64xf32>
    %183 = vector.broadcast %181 : vector<64x1xf32> to vector<64x64xf32>
    %184 = vector.broadcast %182 : vector<1x64xf32> to vector<64x64xf32>
    %185 = arith.addf %183, %184 : vector<64x64xf32>
    %cst_63 = arith.constant 0.000000e+00 : f32
    %186 = vector.broadcast %cst_63 : f32 to vector<64x64xf32>
    %187 = arith.cmpf ogt, %185, %186 : vector<64x64xf32>
    %cst_64 = arith.constant 2.000000e-01 : f32
    %188 = vector.broadcast %cst_64 : f32 to vector<64x64xf32>
    %189 = arith.mulf %188, %185 : vector<64x64xf32>
    %190 = arith.select %187, %185, %189 : vector<64x64xi1>, vector<64x64xf32>
    %cst_65 = arith.constant -1.000000e+30 : f32
    %191 = vector.broadcast %cst_65 : f32 to vector<64x64xf32>
    %192 = arith.select %129, %190, %191 : vector<64x64xi1>, vector<64x64xf32>
    %cst_66 = arith.constant dense<0xFF800000> : vector<64xf32>
    %193 = vector.multi_reduction <maximumf>, %192, %cst_66 [1] : vector<64x64xf32> to vector<64xf32>
    %194 = vector.shape_cast %193 : vector<64xf32> to vector<64x1xf32>
    %195 = vector.broadcast %194 : vector<64x1xf32> to vector<64x64xf32>
    %196 = arith.subf %192, %195 : vector<64x64xf32>
    %197 = math.exp %196 : vector<64x64xf32>
    %cst_67 = arith.constant dense<0.000000e+00> : vector<64xf32>
    %198 = vector.multi_reduction <add>, %197, %cst_67 [1] : vector<64x64xf32> to vector<64xf32>
    %199 = vector.shape_cast %198 : vector<64xf32> to vector<64x1xf32>
    %200 = tpu.reciprocal %199 {approx = true} : vector<64x1xf32> -> vector<64x1xf32>
    %201 = vector.broadcast %200 : vector<64x1xf32> to vector<64x64xf32>
    %202 = arith.mulf %197, %201 : vector<64x64xf32>
    %203 = arith.truncf %202 : vector<64x64xf32> to vector<64x64xbf16>
    %204 = vector.extract_strided_slice %130 {offsets = [0, 128], sizes = [64, 64], strides = [1, 1]} : vector<64x256xbf16> to vector<64x64xbf16>
    %cst_68 = arith.constant dense<0.000000e+00> : vector<64x64xf32>
    %205 = tpu.matmul %203, %204, %cst_68 {dimension_numbers = #tpu.dot_dimension_numbers<[1], [0], [0], [1], [0, 0, 1, 1], [], []>} : vector<64x64xbf16>, vector<64x64xbf16>, vector<64x64xf32> -> vector<64x64xf32>
    %206 = vector.extract_strided_slice %127 {offsets = [0, 3], sizes = [64, 1], strides = [1, 1]} : vector<64x4xf32> to vector<64x1xf32>
    %207 = vector.extract_strided_slice %126 {offsets = [3, 0], sizes = [1, 64], strides = [1, 1]} : vector<4x64xf32> to vector<1x64xf32>
    %208 = vector.broadcast %206 : vector<64x1xf32> to vector<64x64xf32>
    %209 = vector.broadcast %207 : vector<1x64xf32> to vector<64x64xf32>
    %210 = arith.addf %208, %209 : vector<64x64xf32>
    %cst_69 = arith.constant 0.000000e+00 : f32
    %211 = vector.broadcast %cst_69 : f32 to vector<64x64xf32>
    %212 = arith.cmpf ogt, %210, %211 : vector<64x64xf32>
    %cst_70 = arith.constant 2.000000e-01 : f32
    %213 = vector.broadcast %cst_70 : f32 to vector<64x64xf32>
    %214 = arith.mulf %213, %210 : vector<64x64xf32>
    %215 = arith.select %212, %210, %214 : vector<64x64xi1>, vector<64x64xf32>
    %cst_71 = arith.constant -1.000000e+30 : f32
    %216 = vector.broadcast %cst_71 : f32 to vector<64x64xf32>
    %217 = arith.select %129, %215, %216 : vector<64x64xi1>, vector<64x64xf32>
    %cst_72 = arith.constant dense<0xFF800000> : vector<64xf32>
    %218 = vector.multi_reduction <maximumf>, %217, %cst_72 [1] : vector<64x64xf32> to vector<64xf32>
    %219 = vector.shape_cast %218 : vector<64xf32> to vector<64x1xf32>
    %220 = vector.broadcast %219 : vector<64x1xf32> to vector<64x64xf32>
    %221 = arith.subf %217, %220 : vector<64x64xf32>
    %222 = math.exp %221 : vector<64x64xf32>
    %cst_73 = arith.constant dense<0.000000e+00> : vector<64xf32>
    %223 = vector.multi_reduction <add>, %222, %cst_73 [1] : vector<64x64xf32> to vector<64xf32>
    %224 = vector.shape_cast %223 : vector<64xf32> to vector<64x1xf32>
    %225 = tpu.reciprocal %224 {approx = true} : vector<64x1xf32> -> vector<64x1xf32>
    %226 = vector.broadcast %225 : vector<64x1xf32> to vector<64x64xf32>
    %227 = arith.mulf %222, %226 : vector<64x64xf32>
    %228 = arith.truncf %227 : vector<64x64xf32> to vector<64x64xbf16>
    %229 = vector.extract_strided_slice %130 {offsets = [0, 192], sizes = [64, 64], strides = [1, 1]} : vector<64x256xbf16> to vector<64x64xbf16>
    %cst_74 = arith.constant dense<0.000000e+00> : vector<64x64xf32>
    %230 = tpu.matmul %228, %229, %cst_74 {dimension_numbers = #tpu.dot_dimension_numbers<[1], [0], [0], [1], [0, 0, 1, 1], [], []>} : vector<64x64xbf16>, vector<64x64xbf16>, vector<64x64xf32> -> vector<64x64xf32>
    %231 = tpu.concatenate %155, %180, %205, %230 in 1 : vector<64x64xf32>, vector<64x64xf32>, vector<64x64xf32>, vector<64x64xf32> -> vector<64x256xf32>
    %232 = vector.broadcast %125 : vector<1x256xf32> to vector<64x256xf32>
    %233 = arith.addf %231, %232 : vector<64x256xf32>
    %cst_75 = arith.constant 0.000000e+00 : f32
    %234 = vector.broadcast %cst_75 : f32 to vector<64x256xf32>
    %235 = arith.maximumf %233, %234 : vector<64x256xf32>
    %236 = arith.truncf %235 : vector<64x256xf32> to vector<64x256xbf16>
    %c0_76 = arith.constant 0 : index
    %c0_77 = arith.constant 0 : index
    %237 = vector.load %arg11[%c0_76, %c0_77] : memref<256x5xf32, #tpu.memory_space<vmem>>, vector<256x5xf32>
    %238 = arith.truncf %237 : vector<256x5xf32> to vector<256x5xbf16>
    %cst_78 = arith.constant dense<0.000000e+00> : vector<64x5xf32>
    %239 = tpu.matmul %236, %238, %cst_78 {dimension_numbers = #tpu.dot_dimension_numbers<[1], [0], [0], [1], [0, 0, 1, 1], [], []>} : vector<64x256xbf16>, vector<256x5xbf16>, vector<64x5xf32> -> vector<64x5xf32>
    %c0_79 = arith.constant 0 : index
    %c0_80 = arith.constant 0 : index
    %240 = vector.load %arg12[%c0_79, %c0_80] : memref<1x5xf32, #tpu.memory_space<vmem>>, vector<1x5xf32>
    %c0_81 = arith.constant 0 : index
    %c0_82 = arith.constant 0 : index
    %241 = vector.load %arg13[%c0_81, %c0_82] : memref<1x5xf32, #tpu.memory_space<vmem>>, vector<1x5xf32>
    %c0_83 = arith.constant 0 : index
    %c0_84 = arith.constant 0 : index
    %242 = vector.load %arg14[%c0_83, %c0_84] : memref<1x5xf32, #tpu.memory_space<vmem>>, vector<1x5xf32>
    %cst_85 = arith.constant dense<0.000000e+00> : vector<1x64xf32>
    %243 = tpu.matmul %240, %239, %cst_85 {dimension_numbers = #tpu.dot_dimension_numbers<[1], [1], [0], [0], [0, 0, 1, 0], [], []>} : vector<1x5xf32>, vector<64x5xf32>, vector<1x64xf32> -> vector<1x64xf32>
    %cst_86 = arith.constant dense<0.000000e+00> : vector<64x1xf32>
    %244 = tpu.matmul %239, %241, %cst_86 {dimension_numbers = #tpu.dot_dimension_numbers<[1], [1], [0], [0], [0, 0, 1, 0], [], []>} : vector<64x5xf32>, vector<1x5xf32>, vector<64x1xf32> -> vector<64x1xf32>
    %cst_87 = arith.constant 0.000000e+00 : bf16
    %245 = vector.broadcast %cst_87 : bf16 to vector<64x64xbf16>
    %246 = arith.cmpf ogt, %0, %245 : vector<64x64xbf16>
    %247 = arith.truncf %239 : vector<64x5xf32> to vector<64x5xbf16>
    %248 = vector.broadcast %244 : vector<64x1xf32> to vector<64x64xf32>
    %249 = vector.broadcast %243 : vector<1x64xf32> to vector<64x64xf32>
    %250 = arith.addf %248, %249 : vector<64x64xf32>
    %cst_88 = arith.constant 0.000000e+00 : f32
    %251 = vector.broadcast %cst_88 : f32 to vector<64x64xf32>
    %252 = arith.cmpf ogt, %250, %251 : vector<64x64xf32>
    %cst_89 = arith.constant 2.000000e-01 : f32
    %253 = vector.broadcast %cst_89 : f32 to vector<64x64xf32>
    %254 = arith.mulf %253, %250 : vector<64x64xf32>
    %255 = arith.select %252, %250, %254 : vector<64x64xi1>, vector<64x64xf32>
    %cst_90 = arith.constant -1.000000e+30 : f32
    %256 = vector.broadcast %cst_90 : f32 to vector<64x64xf32>
    %257 = arith.select %246, %255, %256 : vector<64x64xi1>, vector<64x64xf32>
    %cst_91 = arith.constant dense<0xFF800000> : vector<64xf32>
    %258 = vector.multi_reduction <maximumf>, %257, %cst_91 [1] : vector<64x64xf32> to vector<64xf32>
    %259 = vector.shape_cast %258 : vector<64xf32> to vector<64x1xf32>
    %260 = vector.broadcast %259 : vector<64x1xf32> to vector<64x64xf32>
    %261 = arith.subf %257, %260 : vector<64x64xf32>
    %262 = math.exp %261 : vector<64x64xf32>
    %cst_92 = arith.constant dense<0.000000e+00> : vector<64xf32>
    %263 = vector.multi_reduction <add>, %262, %cst_92 [1] : vector<64x64xf32> to vector<64xf32>
    %264 = vector.shape_cast %263 : vector<64xf32> to vector<64x1xf32>
    %265 = tpu.reciprocal %264 {approx = true} : vector<64x1xf32> -> vector<64x1xf32>
    %266 = vector.broadcast %265 : vector<64x1xf32> to vector<64x64xf32>
    %267 = arith.mulf %262, %266 : vector<64x64xf32>
    %268 = arith.truncf %267 : vector<64x64xf32> to vector<64x64xbf16>
    %cst_93 = arith.constant dense<0.000000e+00> : vector<64x5xf32>
    %269 = tpu.matmul %268, %247, %cst_93 {dimension_numbers = #tpu.dot_dimension_numbers<[1], [0], [0], [1], [0, 0, 1, 1], [], []>} : vector<64x64xbf16>, vector<64x5xbf16>, vector<64x5xf32> -> vector<64x5xf32>
    %270 = vector.broadcast %242 : vector<1x5xf32> to vector<64x5xf32>
    %271 = arith.addf %269, %270 : vector<64x5xf32>
    %c0_94 = arith.constant 0 : index
    %c0_95 = arith.constant 0 : index
    %272 = vector.load %arg15[%c0_94, %c0_95] : memref<64x5xf32, #tpu.memory_space<vmem>>, vector<64x5xf32>
    tpu.vector_store %arg15[%c0_94, %c0_95], %271 {strides = array<i32>} : memref<64x5xf32, #tpu.memory_space<vmem>>, vector<64x5xf32>,
    return
  }
  func.func @transform_0(%arg0: i32) -> (i32, i32) {
    %c0_i32 = arith.constant 0 : i32
    %c0_i32_0 = arith.constant 0 : i32
    %c0_i32_1 = arith.constant 0 : i32
    return %c0_i32, %c0_i32_0 : i32, i32
  }
  func.func @transform_1(%arg0: i32) -> (i32, i32) {
    %c0_i32 = arith.constant 0 : i32
    %c0_i32_0 = arith.constant 0 : i32
    %c0_i32_1 = arith.constant 0 : i32
    return %c0_i32, %c0_i32_0 : i32, i32
  }
  func.func @transform_2(%arg0: i32) -> (i32, i32) {
    %c0_i32 = arith.constant 0 : i32
    %c0_i32_0 = arith.constant 0 : i32
    %c0_i32_1 = arith.constant 0 : i32
    return %c0_i32, %c0_i32_0 : i32, i32
  }
  func.func @transform_3(%arg0: i32) -> (i32, i32) {
    %c0_i32 = arith.constant 0 : i32
    %c0_i32_0 = arith.constant 0 : i32
    %c0_i32_1 = arith.constant 0 : i32
    return %c0_i32, %c0_i32_0 : i32, i32
  }
  func.func @transform_4(%arg0: i32) -> (i32, i32) {
    %c0_i32 = arith.constant 0 : i32
    %c0_i32_0 = arith.constant 0 : i32
    %c0_i32_1 = arith.constant 0 : i32
    return %c0_i32, %c0_i32_0 : i32, i32
  }
  func.func @transform_5(%arg0: i32) -> (i32, i32) {
    %c0_i32 = arith.constant 0 : i32
    %c0_i32_0 = arith.constant 0 : i32
    %c0_i32_1 = arith.constant 0 : i32
    return %c0_i32, %c0_i32_0 : i32, i32
  }
  func.func @transform_6(%arg0: i32) -> (i32, i32) {
    %c0_i32 = arith.constant 0 : i32
    %c0_i32_0 = arith.constant 0 : i32
    %c0_i32_1 = arith.constant 0 : i32
    return %c0_i32, %c0_i32_0 : i32, i32
  }
  func.func @transform_7(%arg0: i32) -> (i32, i32) {
    %c0_i32 = arith.constant 0 : i32
    %c0_i32_0 = arith.constant 0 : i32
    %c0_i32_1 = arith.constant 0 : i32
    return %c0_i32, %c0_i32_0 : i32, i32
  }
  func.func @transform_8(%arg0: i32) -> (i32, i32) {
    %c0_i32 = arith.constant 0 : i32
    %c0_i32_0 = arith.constant 0 : i32
    %c0_i32_1 = arith.constant 0 : i32
    return %c0_i32, %c0_i32_0 : i32, i32
  }
  func.func @transform_9(%arg0: i32) -> (i32, i32) {
    %c0_i32 = arith.constant 0 : i32
    %c0_i32_0 = arith.constant 0 : i32
    %c0_i32_1 = arith.constant 0 : i32
    return %c0_i32, %c0_i32_0 : i32, i32
  }
  func.func @transform_10(%arg0: i32) -> (i32, i32) {
    %c0_i32 = arith.constant 0 : i32
    %c0_i32_0 = arith.constant 0 : i32
    %c0_i32_1 = arith.constant 0 : i32
    return %c0_i32, %c0_i32_0 : i32, i32
  }
  func.func @transform_11(%arg0: i32) -> (i32, i32) {
    %c0_i32 = arith.constant 0 : i32
    %c0_i32_0 = arith.constant 0 : i32
    %c0_i32_1 = arith.constant 0 : i32
    return %c0_i32, %c0_i32_0 : i32, i32
  }
  func.func @transform_12(%arg0: i32) -> (i32, i32) {
    %c0_i32 = arith.constant 0 : i32
    %c0_i32_0 = arith.constant 0 : i32
    %c0_i32_1 = arith.constant 0 : i32
    return %c0_i32, %c0_i32_0 : i32, i32
  }
  func.func @transform_13(%arg0: i32) -> (i32, i32) {
    %c0_i32 = arith.constant 0 : i32
    %c0_i32_0 = arith.constant 0 : i32
    %c0_i32_1 = arith.constant 0 : i32
    return %c0_i32, %c0_i32_0 : i32, i32
  }
  func.func @transform_14(%arg0: i32) -> (i32, i32) {
    %c0_i32 = arith.constant 0 : i32
    %c0_i32_0 = arith.constant 0 : i32
    %c0_i32_1 = arith.constant 0 : i32
    return %c0_i32, %c0_i32_0 : i32, i32
  }
}

</mosaic_0001>

<llo_original>
// kernel: gat_forward.1
$region0: #{gat_forward.1}
  #allocation0 [shape = 'u32[]', space=smem, size = 0x4, offset = 0x4, fixed_abs, tag = 'smem constant byte address 0x4 - core index']
  #allocation1 [shape = 'u32[72,128]{1,0:T(1,128)}', space=vmem, size = 0x9000, scoped, tag = 'internal scratch']
  %s0 = inlined_call_operand.vmem [shape: f32[64,16], index: 0, kind: input, shape index: {}]
  %s1 = inlined_call_operand.vmem [shape: bf16[64,64], index: 1, kind: input, shape index: {}]
  %s2 = inlined_call_operand.vmem [shape: f32[16,256], index: 2, kind: input, shape index: {}]
  %s3 = inlined_call_operand.vmem [shape: f32[4,256], index: 3, kind: input, shape index: {}]
  %s4 = inlined_call_operand.vmem [shape: f32[4,256], index: 4, kind: input, shape index: {}]
  %s5 = inlined_call_operand.vmem [shape: f32[1,256], index: 5, kind: input, shape index: {}]
  %s6 = inlined_call_operand.vmem [shape: f32[256,256], index: 6, kind: input, shape index: {}]
  %s7 = inlined_call_operand.vmem [shape: f32[4,256], index: 7, kind: input, shape index: {}]
  %s8 = inlined_call_operand.vmem [shape: f32[4,256], index: 8, kind: input, shape index: {}]
  %s9 = inlined_call_operand.vmem [shape: f32[1,256], index: 9, kind: input, shape index: {}]
  %s10 = inlined_call_operand.vmem [shape: f32[256,5], index: 10, kind: input, shape index: {}]
  %s11 = inlined_call_operand.vmem [shape: f32[1,5], index: 11, kind: input, shape index: {}]
  %s12 = inlined_call_operand.vmem [shape: f32[1,5], index: 12, kind: input, shape index: {}]
  %s13 = inlined_call_operand.vmem [shape: f32[1,5], index: 13, kind: input, shape index: {}]
  %s14 = inlined_call_operand.vmem [shape: f32[64,5], index: 14, kind: output, shape index: {}]
  %s15 = sld [smem:[#allocation0]]
  $region66: #{gat_forward.1} parent=0
    _
  %s17 = ssub.s32 1, %s15
  %s18 = scalar_select 0, %s17, %s15
  // Predicated region
  $region2: #{gat_forward.1} parent=0 // pred_check
    _
  $region3: #{gat_forward.1} parent=0 // pred_check_branch
    %20 = sbr.rel (0) target = $region5
  $region4: #{gat_forward.1} parent=0 // pred_region
    _
  $region5: #{gat_forward.1} parent=0 // pred_fallthru
    _
  // Predicated region
  $region6: #{gat_forward.1} parent=0 // pred_check
    _
  $region7: #{gat_forward.1} parent=0 // pred_check_branch
    %22 = sbr.rel (0) target = $region9
  $region8: #{gat_forward.1} parent=0 // pred_region
    _
  $region9: #{gat_forward.1} parent=0 // pred_fallthru
    _
  // Predicated region
  $region10: #{gat_forward.1} parent=0 // pred_check
    _
  $region11: #{gat_forward.1} parent=0 // pred_check_branch
    %24 = sbr.rel (0) target = $region13
  $region12: #{gat_forward.1} parent=0 // pred_region
    _
  $region13: #{gat_forward.1} parent=0 // pred_fallthru
    _
  // Predicated region
  $region14: #{gat_forward.1} parent=0 // pred_check
    _
  $region15: #{gat_forward.1} parent=0 // pred_check_branch
    %26 = sbr.rel (0) target = $region17
  $region16: #{gat_forward.1} parent=0 // pred_region
    _
  $region17: #{gat_forward.1} parent=0 // pred_fallthru
    _
  // Predicated region
  $region18: #{gat_forward.1} parent=0 // pred_check
    _
  $region19: #{gat_forward.1} parent=0 // pred_check_branch
    %28 = sbr.rel (0) target = $region21
  $region20: #{gat_forward.1} parent=0 // pred_region
    _
  $region21: #{gat_forward.1} parent=0 // pred_fallthru
    _
  // Predicated region
  $region22: #{gat_forward.1} parent=0 // pred_check
    _
  $region23: #{gat_forward.1} parent=0 // pred_check_branch
    %30 = sbr.rel (0) target = $region25
  $region24: #{gat_forward.1} parent=0 // pred_region
    _
  $region25: #{gat_forward.1} parent=0 // pred_fallthru
    _
  // Predicated region
  $region26: #{gat_forward.1} parent=0 // pred_check
    _
  $region27: #{gat_forward.1} parent=0 // pred_check_branch
    %32 = sbr.rel (0) target = $region29
  $region28: #{gat_forward.1} parent=0 // pred_region
    _
  $region29: #{gat_forward.1} parent=0 // pred_fallthru
    _
  // Predicated region
  $region30: #{gat_forward.1} parent=0 // pred_check
    _
  $region31: #{gat_forward.1} parent=0 // pred_check_branch
    %34 = sbr.rel (0) target = $region33
  $region32: #{gat_forward.1} parent=0 // pred_region
    _
  $region33: #{gat_forward.1} parent=0 // pred_fallthru
    _
  // Predicated region
  $region34: #{gat_forward.1} parent=0 // pred_check
    _
  $region35: #{gat_forward.1} parent=0 // pred_check_branch
    %36 = sbr.rel (0) target = $region37
  $region36: #{gat_forward.1} parent=0 // pred_region
    _
  $region37: #{gat_forward.1} parent=0 // pred_fallthru
    _
  // Predicated region
  $region38: #{gat_forward.1} parent=0 // pred_check
    _
  $region39: #{gat_forward.1} parent=0 // pred_check_branch
    %38 = sbr.rel (0) target = $region41
  $region40: #{gat_forward.1} parent=0 // pred_region
    _
  $region41: #{gat_forward.1} parent=0 // pred_fallthru
    _
  // Predicated region
  $region42: #{gat_forward.1} parent=0 // pred_check
    _
  $region43: #{gat_forward.1} parent=0 // pred_check_branch
    %40 = sbr.rel (0) target = $region45
  $region44: #{gat_forward.1} parent=0 // pred_region
    _
  $region45: #{gat_forward.1} parent=0 // pred_fallthru
    _
  // Predicated region
  $region46: #{gat_forward.1} parent=0 // pred_check
    _
  $region47: #{gat_forward.1} parent=0 // pred_check_branch
    %42 = sbr.rel (0) target = $region49
  $region48: #{gat_forward.1} parent=0 // pred_region
    _
  $region49: #{gat_forward.1} parent=0 // pred_fallthru
    _
  // Predicated region
  $region50: #{gat_forward.1} parent=0 // pred_check
    _
  $region51: #{gat_forward.1} parent=0 // pred_check_branch
    %44 = sbr.rel (0) target = $region53
  $region52: #{gat_forward.1} parent=0 // pred_region
    _
  $region53: #{gat_forward.1} parent=0 // pred_fallthru
    _
  // Predicated region
  $region54: #{gat_forward.1} parent=0 // pred_check
    _
  $region55: #{gat_forward.1} parent=0 // pred_check_branch
    %46 = sbr.rel (0) target = $region57
  $region56: #{gat_forward.1} parent=0 // pred_region
    _
  $region57: #{gat_forward.1} parent=0 // pred_fallthru
    _
  %v48 = vld [vmem:[%s1] sm:$0xf]
  %v49 = vld [vmem:[%s1 + $0x4] sm:$0xf]
  %v50 = vld [vmem:[%s1 + $0x8] sm:$0xf]
  %v51 = vld [vmem:[%s1 + $0xc] sm:$0xf]
  %v52 = vld [vmem:[%s1 + $0x10] sm:$0xf]
  %v53 = vld [vmem:[%s1 + $0x14] sm:$0xf]
  %v54 = vld [vmem:[%s1 + $0x18] sm:$0xf]
  %v55 = vld [vmem:[%s1 + $0x1c] sm:$0xf]
  %v56 = vld [vmem:[%s0] sm:$0xff]
  %v57 = vld [vmem:[%s0 + $0x8] sm:$0xff]
  %v58 = vld [vmem:[%s0 + $0x10] sm:$0xff]
  %v59 = vld [vmem:[%s0 + $0x18] sm:$0xff]
  %v60 = vld [vmem:[%s0 + $0x20] sm:$0xff]
  %v61 = vld [vmem:[%s0 + $0x28] sm:$0xff]
  %v62 = vld [vmem:[%s0 + $0x30] sm:$0xff]
  %v63 = vld [vmem:[%s0 + $0x38] sm:$0xff]
  %v64 = vpack.c.bf16 %v57, %v56
  %v65 = vpack.c.bf16 %v59, %v58
  %v66 = vpack.c.bf16 %v61, %v60
  %v67 = vpack.c.bf16 %v63, %v62
  %v68 = vld [vmem:[%s2] sm:$0xff]
  %v69 = vld [vmem:[%s2 + $0x8] sm:$0xff]
  %v70 = vld [vmem:[%s2 + $0x10] sm:$0xff]
  %v71 = vld [vmem:[%s2 + $0x18] sm:$0xff]
  %v72 = vpack.c.bf16 %v70, %v68
  %v73 = vpack.c.bf16 %v71, %v69
  %vm74 = vcmask 130048
  %v76 = vsel %vm74, %v64, 0
  %v79 = vsel %vm74, %v65, 0
  %v82 = vsel %vm74, %v66, 0
  %v85 = vsel %vm74, %v67, 0
  %87 = vmatpush.bf16.msra.mxu0 0
  %88 = vmatpush.bf16.msra.mxu0 0
  %89 = vmatpush.bf16.msra.mxu0 0
  %90 = vmatpush.bf16.msra.mxu0 0
  %91 = vmatpush.bf16.msra.mxu0 0
  %92 = vmatpush.bf16.msra.mxu0 0
  %93 = vmatpush.bf16.msra.mxu0 0
  %94 = vmatpush.bf16.msra.mxu0 %v72
  %95 = vmatmul.bf16.gmra.mxu0 %v76
  %v96 = vpop.f32.mrf.mxu0
  %v97 = vadd.f32 0.0, %v96
  %v98 = vpop.f32.mrf.mxu0
  %v99 = vadd.f32 0.0, %v98
  %100 = vmatmul.bf16.gmra.mxu0 %v79
  %v101 = vpop.f32.mrf.mxu0
  %v102 = vadd.f32 0.0, %v101
  %v103 = vpop.f32.mrf.mxu0
  %v104 = vadd.f32 0.0, %v103
  %105 = vmatmul.bf16.gmra.mxu0 %v82
  %v106 = vpop.f32.mrf.mxu0
  %v107 = vadd.f32 0.0, %v106
  %v108 = vpop.f32.mrf.mxu0
  %v109 = vadd.f32 0.0, %v108
  %110 = vmatmul.bf16.gmra.mxu0 %v85
  %v111 = vpop.f32.mrf.mxu0
  %v112 = vadd.f32 0.0, %v111
  %v113 = vpop.f32.mrf.mxu0
  %v114 = vadd.f32 0.0, %v113
  %115 = vdwg.mxu0
  %116 = vmatpush.bf16.msra.mxu0 0
  %117 = vmatpush.bf16.msra.mxu0 0
  %118 = vmatpush.bf16.msra.mxu0 0
  %119 = vmatpush.bf16.msra.mxu0 0
  %120 = vmatpush.bf16.msra.mxu0 0
  %121 = vmatpush.bf16.msra.mxu0 0
  %122 = vmatpush.bf16.msra.mxu0 0
  %123 = vmatpush.bf16.msra.mxu0 %v73
  %124 = vmatmul.bf16.gmra.mxu0 %v76
  %v125 = vpop.f32.mrf.mxu0
  %v126 = vadd.f32 0.0, %v125
  %v127 = vpop.f32.mrf.mxu0
  %v128 = vadd.f32 0.0, %v127
  %129 = vmatmul.bf16.gmra.mxu0 %v79
  %v130 = vpop.f32.mrf.mxu0
  %v131 = vadd.f32 0.0, %v130
  %v132 = vpop.f32.mrf.mxu0
  %v133 = vadd.f32 0.0, %v132
  %134 = vmatmul.bf16.gmra.mxu0 %v82
  %v135 = vpop.f32.mrf.mxu0
  %v136 = vadd.f32 0.0, %v135
  %v137 = vpop.f32.mrf.mxu0
  %v138 = vadd.f32 0.0, %v137
  %139 = vmatmul.bf16.gmra.mxu0 %v85
  %v140 = vpop.f32.mrf.mxu0
  %v141 = vadd.f32 0.0, %v140
  %v142 = vpop.f32.mrf.mxu0
  %v143 = vadd.f32 0.0, %v142
  %144 = vdwg.mxu0
  %v145 = vld [vmem:[%s3] sm:$0xff]
  %v146 = vld [vmem:[%s4] sm:$0xff]
  %v147 = vld [vmem:[%s5] sm:$0x3]
  %149 = vst [vmem:[#allocation1] ss:$2 sm:$0xff] %v145
  %v150 = vld.sshfl [vmem:[#allocation1] sm:$0xff pattern:$0x75316420]
  %v151 = vld.sshfl [vmem:[#allocation1 + $0x8] sm:$0xff pattern:$0x75316420]
  %154 = vmatpush.xpose.msra.mxu0 0.0
  %155 = vmatpush.xpose.msra.mxu0 0.0
  %156 = vmatpush.xpose.msra.mxu0 0.0
  %157 = vmatpush.xpose.msra.mxu0 0.0
  %158 = vmatpush.xpose.msra.mxu0 0.0
  %159 = vmatpush.xpose.msra.mxu0 0.0
  %160 = vmatpush.xpose.msra.mxu0 0.0
  %161 = vmatpush.xpose.msra.mxu0 0.0
  %162 = vmatpush.xpose.msra.mxu0 %v114
  %163 = vmatpush.xpose.msra.mxu0 %v112
  %164 = vmatpush.xpose.msra.mxu0 %v109
  %165 = vmatpush.xpose.msra.mxu0 %v107
  %166 = vmatpush.xpose.msra.mxu0 %v104
  %167 = vmatpush.xpose.msra.mxu0 %v102
  %168 = vmatpush.xpose.msra.mxu0 %v99
  %169 = vmatpush.xpose.msra.mxu0 %v97
  %170 = vmatmul.f32.gmra.mxu0 %v150
  %v171 = vpop.f32.mrf.mxu0
  %v172 = vadd.f32 0.0, %v171
  %173 = vdwg.mxu0
  %174 = vmatpush.xpose.msra.mxu0 0.0
  %175 = vmatpush.xpose.msra.mxu0 0.0
  %176 = vmatpush.xpose.msra.mxu0 0.0
  %177 = vmatpush.xpose.msra.mxu0 0.0
  %178 = vmatpush.xpose.msra.mxu0 0.0
  %179 = vmatpush.xpose.msra.mxu0 0.0
  %180 = vmatpush.xpose.msra.mxu0 0.0
  %181 = vmatpush.xpose.msra.mxu0 0.0
  %182 = vmatpush.xpose.msra.mxu0 %v143
  %183 = vmatpush.xpose.msra.mxu0 %v141
  %184 = vmatpush.xpose.msra.mxu0 %v138
  %185 = vmatpush.xpose.msra.mxu0 %v136
  %186 = vmatpush.xpose.msra.mxu0 %v133
  %187 = vmatpush.xpose.msra.mxu0 %v131
  %188 = vmatpush.xpose.msra.mxu0 %v128
  %189 = vmatpush.xpose.msra.mxu0 %v126
  %190 = vmatmul.f32.gmra.mxu0 %v151
  %v191 = vpop.f32.mrf.mxu0
  %v192 = vadd.f32 %v172, %v191
  %193 = vdwg.mxu0
  %195 = vst [vmem:[#allocation1] ss:$2 sm:$0xff] %v146
  %v196 = vld.sshfl [vmem:[#allocation1] sm:$0xff pattern:$0x75316420]
  %v197 = vld.sshfl [vmem:[#allocation1 + $0x8] sm:$0xff pattern:$0x75316420]
  %200 = vmatpush.xpose.msra.mxu0 0.0
  %201 = vmatpush.xpose.msra.mxu0 0.0
  %202 = vmatpush.xpose.msra.mxu0 0.0
  %203 = vmatpush.xpose.msra.mxu0 0.0
  %204 = vmatpush.xpose.msra.mxu0 0.0
  %205 = vmatpush.xpose.msra.mxu0 0.0
  %206 = vmatpush.xpose.msra.mxu0 0.0
  %207 = vmatpush.xpose.msra.mxu0 0.0
  %208 = vmatpush.xpose.msra.mxu0 0.0
  %209 = vmatpush.xpose.msra.mxu0 0.0
  %210 = vmatpush.xpose.msra.mxu0 0.0
  %211 = vmatpush.xpose.msra.mxu0 0.0
  %212 = vmatpush.xpose.msra.mxu0 0.0
  %213 = vmatpush.xpose.msra.mxu0 0.0
  %214 = vmatpush.xpose.msra.mxu0 0.0
  %215 = vmatpush.xpose.msra.mxu0 %v196
  %216 = vmatmul.f32.gmra.mxu0 %v97
  %v217 = vpop.f32.mrf.mxu0
  %v218 = vadd.f32 0.0, %v217
  %219 = vmatmul.f32.gmra.mxu0 %v99
  %v220 = vpop.f32.mrf.mxu0
  %v221 = vadd.f32 0.0, %v220
  %222 = vmatmul.f32.gmra.mxu0 %v102
  %v223 = vpop.f32.mrf.mxu0
  %v224 = vadd.f32 0.0, %v223
  %225 = vmatmul.f32.gmra.mxu0 %v104
  %v226 = vpop.f32.mrf.mxu0
  %v227 = vadd.f32 0.0, %v226
  %228 = vmatmul.f32.gmra.mxu0 %v107
  %v229 = vpop.f32.mrf.mxu0
  %v230 = vadd.f32 0.0, %v229
  %231 = vmatmul.f32.gmra.mxu0 %v109
  %v232 = vpop.f32.mrf.mxu0
  %v233 = vadd.f32 0.0, %v232
  %234 = vmatmul.f32.gmra.mxu0 %v112
  %v235 = vpop.f32.mrf.mxu0
  %v236 = vadd.f32 0.0, %v235
  %237 = vmatmul.f32.gmra.mxu0 %v114
  %v238 = vpop.f32.mrf.mxu0
  %v239 = vadd.f32 0.0, %v238
  %240 = vdwg.mxu0
  %241 = vmatpush.xpose.msra.mxu0 0.0
  %242 = vmatpush.xpose.msra.mxu0 0.0
  %243 = vmatpush.xpose.msra.mxu0 0.0
  %244 = vmatpush.xpose.msra.mxu0 0.0
  %245 = vmatpush.xpose.msra.mxu0 0.0
  %246 = vmatpush.xpose.msra.mxu0 0.0
  %247 = vmatpush.xpose.msra.mxu0 0.0
  %248 = vmatpush.xpose.msra.mxu0 0.0
  %249 = vmatpush.xpose.msra.mxu0 0.0
  %250 = vmatpush.xpose.msra.mxu0 0.0
  %251 = vmatpush.xpose.msra.mxu0 0.0
  %252 = vmatpush.xpose.msra.mxu0 0.0
  %253 = vmatpush.xpose.msra.mxu0 0.0
  %254 = vmatpush.xpose.msra.mxu0 0.0
  %255 = vmatpush.xpose.msra.mxu0 0.0
  %256 = vmatpush.xpose.msra.mxu0 %v197
  %257 = vmatmul.f32.gmra.mxu0 %v126
  %v258 = vpop.f32.mrf.mxu0
  %v259 = vadd.f32 %v218, %v258
  %260 = vmatmul.f32.gmra.mxu0 %v128
  %v261 = vpop.f32.mrf.mxu0
  %v262 = vadd.f32 %v221, %v261
  %263 = vmatmul.f32.gmra.mxu0 %v131
  %v264 = vpop.f32.mrf.mxu0
  %v265 = vadd.f32 %v224, %v264
  %266 = vmatmul.f32.gmra.mxu0 %v133
  %v267 = vpop.f32.mrf.mxu0
  %v268 = vadd.f32 %v227, %v267
  %269 = vmatmul.f32.gmra.mxu0 %v136
  %v270 = vpop.f32.mrf.mxu0
  %v271 = vadd.f32 %v230, %v270
  %272 = vmatmul.f32.gmra.mxu0 %v138
  %v273 = vpop.f32.mrf.mxu0
  %v274 = vadd.f32 %v233, %v273
  %275 = vmatmul.f32.gmra.mxu0 %v141
  %v276 = vpop.f32.mrf.mxu0
  %v277 = vadd.f32 %v236, %v276
  %278 = vmatmul.f32.gmra.mxu0 %v143
  %v279 = vpop.f32.mrf.mxu0
  %v280 = vadd.f32 %v239, %v279
  %281 = vdwg.mxu0
  %v282 = vunpack.c.l.bf16 %v48
  %v283 = vunpack.c.l.bf16 %v49
  %v284 = vunpack.c.l.bf16 %v50
  %v285 = vunpack.c.l.bf16 %v51
  %v286 = vunpack.c.l.bf16 %v52
  %v287 = vunpack.c.l.bf16 %v53
  %v288 = vunpack.c.l.bf16 %v54
  %v289 = vunpack.c.l.bf16 %v55
  %vm290 = vcmp.gt.f32.partialorder %v282, 0.0
  %vm291 = vcmp.gt.f32.partialorder %v283, 0.0
  %vm292 = vcmp.gt.f32.partialorder %v284, 0.0
  %vm293 = vcmp.gt.f32.partialorder %v285, 0.0
  %vm294 = vcmp.gt.f32.partialorder %v286, 0.0
  %vm295 = vcmp.gt.f32.partialorder %v287, 0.0
  %vm296 = vcmp.gt.f32.partialorder %v288, 0.0
  %vm297 = vcmp.gt.f32.partialorder %v289, 0.0
  %v298 = vpack.c.bf16 %v126, %v97
  %v299 = vpack.c.bf16 %v128, %v99
  %v300 = vpack.c.bf16 %v131, %v102
  %v301 = vpack.c.bf16 %v133, %v104
  %v302 = vpack.c.bf16 %v136, %v107
  %v303 = vpack.c.bf16 %v138, %v109
  %v304 = vpack.c.bf16 %v141, %v112
  %v305 = vpack.c.bf16 %v143, %v114
  %307 = vset.pattern.permute.xlu0 0
  %308 = vperm.xlu0 %307, %v259
  %v309 = vpop.permute.xlu0 %308
  %312 = vset.pattern.permute.xlu0 0
  %313 = vperm.xlu0 %312, %v262
  %v314 = vpop.permute.xlu0 %313
  %317 = vset.pattern.permute.xlu0 0
  %318 = vperm.xlu0 %317, %v265
  %v319 = vpop.permute.xlu0 %318
  %322 = vset.pattern.permute.xlu0 0
  %323 = vperm.xlu0 %322, %v268
  %v324 = vpop.permute.xlu0 %323
  %327 = vset.pattern.permute.xlu0 0
  %328 = vperm.xlu0 %327, %v271
  %v329 = vpop.permute.xlu0 %328
  %332 = vset.pattern.permute.xlu0 0
  %333 = vperm.xlu0 %332, %v274
  %v334 = vpop.permute.xlu0 %333
  %337 = vset.pattern.permute.xlu0 0
  %338 = vperm.xlu0 %337, %v277
  %v339 = vpop.permute.xlu0 %338
  %342 = vset.pattern.permute.xlu0 0
  %343 = vperm.xlu0 %342, %v280
  %v344 = vpop.permute.xlu0 %343
  %v346 = vperm.slane %v192, 0
  %v347 = vadd.f32 %v309, %v346
  %v348 = vadd.f32 %v314, %v346
  %v349 = vadd.f32 %v319, %v346
  %v350 = vadd.f32 %v324, %v346
  %v351 = vadd.f32 %v329, %v346
  %v352 = vadd.f32 %v334, %v346
  %v353 = vadd.f32 %v339, %v346
  %v354 = vadd.f32 %v344, %v346
  %vm355 = vcmp.gt.f32.partialorder %v347, 0.0
  %vm356 = vcmp.gt.f32.partialorder %v348, 0.0
  %vm357 = vcmp.gt.f32.partialorder %v349, 0.0
  %vm358 = vcmp.gt.f32.partialorder %v350, 0.0
  %vm359 = vcmp.gt.f32.partialorder %v351, 0.0
  %vm360 = vcmp.gt.f32.partialorder %v352, 0.0
  %vm361 = vcmp.gt.f32.partialorder %v353, 0.0
  %vm362 = vcmp.gt.f32.partialorder %v354, 0.0
  %v363 = vmul.f32 %v347, 0.2
  %v364 = vmul.f32 %v348, 0.2
  %v365 = vmul.f32 %v349, 0.2
  %v366 = vmul.f32 %v350, 0.2
  %v367 = vmul.f32 %v351, 0.2
  %v368 = vmul.f32 %v352, 0.2
  %v369 = vmul.f32 %v353, 0.2
  %v370 = vmul.f32 %v354, 0.2
  %v371 = vsel %vm355, %v347, %v363
  %v372 = vsel %vm356, %v348, %v364
  %v373 = vsel %vm357, %v349, %v365
  %v374 = vsel %vm358, %v350, %v366
  %v375 = vsel %vm359, %v351, %v367
  %v376 = vsel %vm360, %v352, %v368
  %v377 = vsel %vm361, %v353, %v369
  %v378 = vsel %vm362, %v354, %v370
  %v379 = vsel %vm290, %v371, -1e+30
  %v380 = vsel %vm291, %v372, -1e+30
  %v381 = vsel %vm292, %v373, -1e+30
  %v382 = vsel %vm293, %v374, -1e+30
  %v383 = vsel %vm294, %v375, -1e+30
  %v384 = vsel %vm295, %v376, -1e+30
  %v385 = vsel %vm296, %v377, -1e+30
  %v386 = vsel %vm297, %v378, -1e+30
  %vm387 = vcmask 523264
  %v388 = vsel %vm387, %v379, -inf
  %389 = vmax.xlane.f32.xlu0 %v388
  %v390 = vpop.xlane.xlu0 %389
  %v391 = vsel %vm387, %v380, -inf
  %392 = vmax.xlane.f32.xlu0 %v391
  %v393 = vpop.xlane.xlu0 %392
  %v394 = vsel %vm387, %v381, -inf
  %395 = vmax.xlane.f32.xlu0 %v394
  %v396 = vpop.xlane.xlu0 %395
  %v397 = vsel %vm387, %v382, -inf
  %398 = vmax.xlane.f32.xlu0 %v397
  %v399 = vpop.xlane.xlu0 %398
  %v400 = vsel %vm387, %v383, -inf
  %401 = vmax.xlane.f32.xlu0 %v400
  %v402 = vpop.xlane.xlu0 %401
  %v403 = vsel %vm387, %v384, -inf
  %404 = vmax.xlane.f32.xlu0 %v403
  %v405 = vpop.xlane.xlu0 %404
  %v406 = vsel %vm387, %v385, -inf
  %407 = vmax.xlane.f32.xlu0 %v406
  %v408 = vpop.xlane.xlu0 %407
  %v409 = vsel %vm387, %v386, -inf
  %410 = vmax.xlane.f32.xlu0 %v409
  %v411 = vpop.xlane.xlu0 %410
  %v412 = vsub.f32 %v379, %v390
  %v413 = vsub.f32 %v380, %v393
  %v414 = vsub.f32 %v381, %v396
  %v415 = vsub.f32 %v382, %v399
  %v416 = vsub.f32 %v383, %v402
  %v417 = vsub.f32 %v384, %v405
  %v418 = vsub.f32 %v385, %v408
  %v419 = vsub.f32 %v386, %v411
  %v420 = vmul.f32 %v412, 1.442695
  %v421 = vpow.pop %v420
  %v422 = vmul.f32 %v413, 1.442695
  %v423 = vpow.pop %v422
  %v424 = vmul.f32 %v414, 1.442695
  %v425 = vpow.pop %v424
  %v426 = vmul.f32 %v415, 1.442695
  %v427 = vpow.pop %v426
  %v428 = vmul.f32 %v416, 1.442695
  %v429 = vpow.pop %v428
  %v430 = vmul.f32 %v417, 1.442695
  %v431 = vpow.pop %v430
  %v432 = vmul.f32 %v418, 1.442695
  %v433 = vpow.pop %v432
  %v434 = vmul.f32 %v419, 1.442695
  %v435 = vpow.pop %v434
  %v436 = vsel %vm387, %v421, 0.0
  %437 = vadd.xlane.f32.xlu0 %v436
  %v438 = vpop.xlane.xlu0 %437
  %v439 = vsel %vm387, %v423, 0.0
  %440 = vadd.xlane.f32.xlu0 %v439
  %v441 = vpop.xlane.xlu0 %440
  %v442 = vsel %vm387, %v425, 0.0
  %443 = vadd.xlane.f32.xlu0 %v442
  %v444 = vpop.xlane.xlu0 %443
  %v445 = vsel %vm387, %v427, 0.0
  %446 = vadd.xlane.f32.xlu0 %v445
  %v447 = vpop.xlane.xlu0 %446
  %v448 = vsel %vm387, %v429, 0.0
  %449 = vadd.xlane.f32.xlu0 %v448
  %v450 = vpop.xlane.xlu0 %449
  %v451 = vsel %vm387, %v431, 0.0
  %452 = vadd.xlane.f32.xlu0 %v451
  %v453 = vpop.xlane.xlu0 %452
  %v454 = vsel %vm387, %v433, 0.0
  %455 = vadd.xlane.f32.xlu0 %v454
  %v456 = vpop.xlane.xlu0 %455
  %v457 = vsel %vm387, %v435, 0.0
  %458 = vadd.xlane.f32.xlu0 %v457
  %v459 = vpop.xlane.xlu0 %458
  %v460 = vrcp.pop %v438
  %v461 = vrcp.pop %v441
  %v462 = vrcp.pop %v444
  %v463 = vrcp.pop %v447
  %v464 = vrcp.pop %v450
  %v465 = vrcp.pop %v453
  %v466 = vrcp.pop %v456
  %v467 = vrcp.pop %v459
  %v468 = vmul.f32 %v421, %v460
  %v469 = vmul.f32 %v423, %v461
  %v470 = vmul.f32 %v425, %v462
  %v471 = vmul.f32 %v427, %v463
  %v472 = vmul.f32 %v429, %v464
  %v473 = vmul.f32 %v431, %v465
  %v474 = vmul.f32 %v433, %v466
  %v475 = vmul.f32 %v435, %v467
  %v476 = vpack.c.bf16 %v469, %v468
  %v477 = vpack.c.bf16 %v471, %v470
  %v478 = vpack.c.bf16 %v473, %v472
  %v479 = vpack.c.bf16 %v475, %v474
  %v488 = vunpack.c.l.b16 %v298
  %v489 = vunpack.c.l.b16 %v299
  %v490 = vunpack.c.l.b16 %v300
  %v491 = vunpack.c.l.b16 %v301
  %v492 = vunpack.c.l.b16 %v302
  %v493 = vunpack.c.l.b16 %v303
  %v494 = vunpack.c.l.b16 %v304
  %v495 = vunpack.c.l.b16 %v305
  %v496 = vpack.c.b16 %v489, %v488
  %v497 = vpack.c.b16 %v491, %v490
  %v498 = vpack.c.b16 %v493, %v492
  %v499 = vpack.c.b16 %v495, %v494
  %v505 = vsel %vm387, %v476, 0
  %v508 = vsel %vm387, %v477, 0
  %v511 = vsel %vm387, %v478, 0
  %v514 = vsel %vm387, %v479, 0
  %516 = vmatpush.bf16.msra.mxu0 0
  %517 = vmatpush.bf16.msra.mxu0 0
  %518 = vmatpush.bf16.msra.mxu0 0
  %519 = vmatpush.bf16.msra.mxu0 0
  %520 = vmatpush.bf16.msra.mxu0 %v499
  %521 = vmatpush.bf16.msra.mxu0 %v498
  %522 = vmatpush.bf16.msra.mxu0 %v497
  %523 = vmatpush.bf16.msra.mxu0 %v496
  %524 = vmatmul.bf16.gmra.mxu0 %v505
  %v525 = vpop.f32.mrf.mxu0
  %v526 = vadd.f32 0.0, %v525
  %v527 = vpop.f32.mrf.mxu0
  %v528 = vadd.f32 0.0, %v527
  %529 = vmatmul.bf16.gmra.mxu0 %v508
  %v530 = vpop.f32.mrf.mxu0
  %v531 = vadd.f32 0.0, %v530
  %v532 = vpop.f32.mrf.mxu0
  %v533 = vadd.f32 0.0, %v532
  %534 = vmatmul.bf16.gmra.mxu0 %v511
  %v535 = vpop.f32.mrf.mxu0
  %v536 = vadd.f32 0.0, %v535
  %v537 = vpop.f32.mrf.mxu0
  %v538 = vadd.f32 0.0, %v537
  %539 = vmatmul.bf16.gmra.mxu0 %v514
  %v540 = vpop.f32.mrf.mxu0
  %v541 = vadd.f32 0.0, %v540
  %v542 = vpop.f32.mrf.mxu0
  %v543 = vadd.f32 0.0, %v542
  %544 = vdwg.mxu0
  %545 = vset.pattern.permute.xlu0 1
  %546 = vperm.xlu0 %545, %v259
  %v547 = vpop.permute.xlu0 %546
  %549 = vset.pattern.permute.xlu0 1
  %550 = vperm.xlu0 %549, %v262
  %v551 = vpop.permute.xlu0 %550
  %553 = vset.pattern.permute.xlu0 1
  %554 = vperm.xlu0 %553, %v265
  %v555 = vpop.permute.xlu0 %554
  %557 = vset.pattern.permute.xlu0 1
  %558 = vperm.xlu0 %557, %v268
  %v559 = vpop.permute.xlu0 %558
  %561 = vset.pattern.permute.xlu0 1
  %562 = vperm.xlu0 %561, %v271
  %v563 = vpop.permute.xlu0 %562
  %565 = vset.pattern.permute.xlu0 1
  %566 = vperm.xlu0 %565, %v274
  %v567 = vpop.permute.xlu0 %566
  %569 = vset.pattern.permute.xlu0 1
  %570 = vperm.xlu0 %569, %v277
  %v571 = vpop.permute.xlu0 %570
  %573 = vset.pattern.permute.xlu0 1
  %574 = vperm.xlu0 %573, %v280
  %v575 = vpop.permute.xlu0 %574
  %v577 = vperm.slane %v192, 1
  %v578 = vadd.f32 %v547, %v577
  %v579 = vadd.f32 %v551, %v577
  %v580 = vadd.f32 %v555, %v577
  %v581 = vadd.f32 %v559, %v577
  %v582 = vadd.f32 %v563, %v577
  %v583 = vadd.f32 %v567, %v577
  %v584 = vadd.f32 %v571, %v577
  %v585 = vadd.f32 %v575, %v577
  %vm586 = vcmp.gt.f32.partialorder %v578, 0.0
  %vm587 = vcmp.gt.f32.partialorder %v579, 0.0
  %vm588 = vcmp.gt.f32.partialorder %v580, 0.0
  %vm589 = vcmp.gt.f32.partialorder %v581, 0.0
  %vm590 = vcmp.gt.f32.partialorder %v582, 0.0
  %vm591 = vcmp.gt.f32.partialorder %v583, 0.0
  %vm592 = vcmp.gt.f32.partialorder %v584, 0.0
  %vm593 = vcmp.gt.f32.partialorder %v585, 0.0
  %v594 = vmul.f32 %v578, 0.2
  %v595 = vmul.f32 %v579, 0.2
  %v596 = vmul.f32 %v580, 0.2
  %v597 = vmul.f32 %v581, 0.2
  %v598 = vmul.f32 %v582, 0.2
  %v599 = vmul.f32 %v583, 0.2
  %v600 = vmul.f32 %v584, 0.2
  %v601 = vmul.f32 %v585, 0.2
  %v602 = vsel %vm586, %v578, %v594
  %v603 = vsel %vm587, %v579, %v595
  %v604 = vsel %vm588, %v580, %v596
  %v605 = vsel %vm589, %v581, %v597
  %v606 = vsel %vm590, %v582, %v598
  %v607 = vsel %vm591, %v583, %v599
  %v608 = vsel %vm592, %v584, %v600
  %v609 = vsel %vm593, %v585, %v601
  %v610 = vsel %vm290, %v602, -1e+30
  %v611 = vsel %vm291, %v603, -1e+30
  %v612 = vsel %vm292, %v604, -1e+30
  %v613 = vsel %vm293, %v605, -1e+30
  %v614 = vsel %vm294, %v606, -1e+30
  %v615 = vsel %vm295, %v607, -1e+30
  %v616 = vsel %vm296, %v608, -1e+30
  %v617 = vsel %vm297, %v609, -1e+30
  %v618 = vsel %vm387, %v610, -inf
  %619 = vmax.xlane.f32.xlu0 %v618
  %v620 = vpop.xlane.xlu0 %619
  %v621 = vsel %vm387, %v611, -inf
  %622 = vmax.xlane.f32.xlu0 %v621
  %v623 = vpop.xlane.xlu0 %622
  %v624 = vsel %vm387, %v612, -inf
  %625 = vmax.xlane.f32.xlu0 %v624
  %v626 = vpop.xlane.xlu0 %625
  %v627 = vsel %vm387, %v613, -inf
  %628 = vmax.xlane.f32.xlu0 %v627
  %v629 = vpop.xlane.xlu0 %628
  %v630 = vsel %vm387, %v614, -inf
  %631 = vmax.xlane.f32.xlu0 %v630
  %v632 = vpop.xlane.xlu0 %631
  %v633 = vsel %vm387, %v615, -inf
  %634 = vmax.xlane.f32.xlu0 %v633
  %v635 = vpop.xlane.xlu0 %634
  %v636 = vsel %vm387, %v616, -inf
  %637 = vmax.xlane.f32.xlu0 %v636
  %v638 = vpop.xlane.xlu0 %637
  %v639 = vsel %vm387, %v617, -inf
  %640 = vmax.xlane.f32.xlu0 %v639
  %v641 = vpop.xlane.xlu0 %640
  %v642 = vsub.f32 %v610, %v620
  %v643 = vsub.f32 %v611, %v623
  %v644 = vsub.f32 %v612, %v626
  %v645 = vsub.f32 %v613, %v629
  %v646 = vsub.f32 %v614, %v632
  %v647 = vsub.f32 %v615, %v635
  %v648 = vsub.f32 %v616, %v638
  %v649 = vsub.f32 %v617, %v641
  %v650 = vmul.f32 %v642, 1.442695
  %v651 = vpow.pop %v650
  %v652 = vmul.f32 %v643, 1.442695
  %v653 = vpow.pop %v652
  %v654 = vmul.f32 %v644, 1.442695
  %v655 = vpow.pop %v654
  %v656 = vmul.f32 %v645, 1.442695
  %v657 = vpow.pop %v656
  %v658 = vmul.f32 %v646, 1.442695
  %v659 = vpow.pop %v658
  %v660 = vmul.f32 %v647, 1.442695
  %v661 = vpow.pop %v660
  %v662 = vmul.f32 %v648, 1.442695
  %v663 = vpow.pop %v662
  %v664 = vmul.f32 %v649, 1.442695
  %v665 = vpow.pop %v664
  %v666 = vsel %vm387, %v651, 0.0
  %667 = vadd.xlane.f32.xlu0 %v666
  %v668 = vpop.xlane.xlu0 %667
  %v669 = vsel %vm387, %v653, 0.0
  %670 = vadd.xlane.f32.xlu0 %v669
  %v671 = vpop.xlane.xlu0 %670
  %v672 = vsel %vm387, %v655, 0.0
  %673 = vadd.xlane.f32.xlu0 %v672
  %v674 = vpop.xlane.xlu0 %673
  %v675 = vsel %vm387, %v657, 0.0
  %676 = vadd.xlane.f32.xlu0 %v675
  %v677 = vpop.xlane.xlu0 %676
  %v678 = vsel %vm387, %v659, 0.0
  %679 = vadd.xlane.f32.xlu0 %v678
  %v680 = vpop.xlane.xlu0 %679
  %v681 = vsel %vm387, %v661, 0.0
  %682 = vadd.xlane.f32.xlu0 %v681
  %v683 = vpop.xlane.xlu0 %682
  %v684 = vsel %vm387, %v663, 0.0
  %685 = vadd.xlane.f32.xlu0 %v684
  %v686 = vpop.xlane.xlu0 %685
  %v687 = vsel %vm387, %v665, 0.0
  %688 = vadd.xlane.f32.xlu0 %v687
  %v689 = vpop.xlane.xlu0 %688
  %v690 = vrcp.pop %v668
  %v691 = vrcp.pop %v671
  %v692 = vrcp.pop %v674
  %v693 = vrcp.pop %v677
  %v694 = vrcp.pop %v680
  %v695 = vrcp.pop %v683
  %v696 = vrcp.pop %v686
  %v697 = vrcp.pop %v689
  %v698 = vmul.f32 %v651, %v690
  %v699 = vmul.f32 %v653, %v691
  %v700 = vmul.f32 %v655, %v692
  %v701 = vmul.f32 %v657, %v693
  %v702 = vmul.f32 %v659, %v694
  %v703 = vmul.f32 %v661, %v695
  %v704 = vmul.f32 %v663, %v696
  %v705 = vmul.f32 %v665, %v697
  %v706 = vpack.c.bf16 %v699, %v698
  %v707 = vpack.c.bf16 %v701, %v700
  %v708 = vpack.c.bf16 %v703, %v702
  %v709 = vpack.c.bf16 %v705, %v704
  %710 = vrot.lane.b32.xlu0 %v496, 64
  %v711 = vpop.permute.xlu0 %710
  %712 = vrot.lane.b32.xlu0 %v497, 64
  %v713 = vpop.permute.xlu0 %712
  %714 = vrot.lane.b32.xlu0 %v498, 64
  %v715 = vpop.permute.xlu0 %714
  %716 = vrot.lane.b32.xlu0 %v499, 64
  %v717 = vpop.permute.xlu0 %716
  %v723 = vsel %vm387, %v706, 0
  %v726 = vsel %vm387, %v707, 0
  %v729 = vsel %vm387, %v708, 0
  %v732 = vsel %vm387, %v709, 0
  %734 = vmatpush.bf16.msra.mxu0 0
  %735 = vmatpush.bf16.msra.mxu0 0
  %736 = vmatpush.bf16.msra.mxu0 0
  %737 = vmatpush.bf16.msra.mxu0 0
  %738 = vmatpush.bf16.msra.mxu0 %v717
  %739 = vmatpush.bf16.msra.mxu0 %v715
  %740 = vmatpush.bf16.msra.mxu0 %v713
  %741 = vmatpush.bf16.msra.mxu0 %v711
  %742 = vmatmul.bf16.gmra.mxu0 %v723
  %v743 = vpop.f32.mrf.mxu0
  %v744 = vadd.f32 0.0, %v743
  %v745 = vpop.f32.mrf.mxu0
  %v746 = vadd.f32 0.0, %v745
  %747 = vmatmul.bf16.gmra.mxu0 %v726
  %v748 = vpop.f32.mrf.mxu0
  %v749 = vadd.f32 0.0, %v748
  %v750 = vpop.f32.mrf.mxu0
  %v751 = vadd.f32 0.0, %v750
  %752 = vmatmul.bf16.gmra.mxu0 %v729
  %v753 = vpop.f32.mrf.mxu0
  %v754 = vadd.f32 0.0, %v753
  %v755 = vpop.f32.mrf.mxu0
  %v756 = vadd.f32 0.0, %v755
  %757 = vmatmul.bf16.gmra.mxu0 %v732
  %v758 = vpop.f32.mrf.mxu0
  %v759 = vadd.f32 0.0, %v758
  %v760 = vpop.f32.mrf.mxu0
  %v761 = vadd.f32 0.0, %v760
  %762 = vdwg.mxu0
  %763 = vset.pattern.permute.xlu0 2
  %764 = vperm.xlu0 %763, %v259
  %v765 = vpop.permute.xlu0 %764
  %767 = vset.pattern.permute.xlu0 2
  %768 = vperm.xlu0 %767, %v262
  %v769 = vpop.permute.xlu0 %768
  %771 = vset.pattern.permute.xlu0 2
  %772 = vperm.xlu0 %771, %v265
  %v773 = vpop.permute.xlu0 %772
  %775 = vset.pattern.permute.xlu0 2
  %776 = vperm.xlu0 %775, %v268
  %v777 = vpop.permute.xlu0 %776
  %779 = vset.pattern.permute.xlu0 2
  %780 = vperm.xlu0 %779, %v271
  %v781 = vpop.permute.xlu0 %780
  %783 = vset.pattern.permute.xlu0 2
  %784 = vperm.xlu0 %783, %v274
  %v785 = vpop.permute.xlu0 %784
  %787 = vset.pattern.permute.xlu0 2
  %788 = vperm.xlu0 %787, %v277
  %v789 = vpop.permute.xlu0 %788
  %791 = vset.pattern.permute.xlu0 2
  %792 = vperm.xlu0 %791, %v280
  %v793 = vpop.permute.xlu0 %792
  %v795 = vperm.slane %v192, 2
  %v796 = vadd.f32 %v765, %v795
  %v797 = vadd.f32 %v769, %v795
  %v798 = vadd.f32 %v773, %v795
  %v799 = vadd.f32 %v777, %v795
  %v800 = vadd.f32 %v781, %v795
  %v801 = vadd.f32 %v785, %v795
  %v802 = vadd.f32 %v789, %v795
  %v803 = vadd.f32 %v793, %v795
  %vm804 = vcmp.gt.f32.partialorder %v796, 0.0
  %vm805 = vcmp.gt.f32.partialorder %v797, 0.0
  %vm806 = vcmp.gt.f32.partialorder %v798, 0.0
  %vm807 = vcmp.gt.f32.partialorder %v799, 0.0
  %vm808 = vcmp.gt.f32.partialorder %v800, 0.0
  %vm809 = vcmp.gt.f32.partialorder %v801, 0.0
  %vm810 = vcmp.gt.f32.partialorder %v802, 0.0
  %vm811 = vcmp.gt.f32.partialorder %v803, 0.0
  %v812 = vmul.f32 %v796, 0.2
  %v813 = vmul.f32 %v797, 0.2
  %v814 = vmul.f32 %v798, 0.2
  %v815 = vmul.f32 %v799, 0.2
  %v816 = vmul.f32 %v800, 0.2
  %v817 = vmul.f32 %v801, 0.2
  %v818 = vmul.f32 %v802, 0.2
  %v819 = vmul.f32 %v803, 0.2
  %v820 = vsel %vm804, %v796, %v812
  %v821 = vsel %vm805, %v797, %v813
  %v822 = vsel %vm806, %v798, %v814
  %v823 = vsel %vm807, %v799, %v815
  %v824 = vsel %vm808, %v800, %v816
  %v825 = vsel %vm809, %v801, %v817
  %v826 = vsel %vm810, %v802, %v818
  %v827 = vsel %vm811, %v803, %v819
  %v828 = vsel %vm290, %v820, -1e+30
  %v829 = vsel %vm291, %v821, -1e+30
  %v830 = vsel %vm292, %v822, -1e+30
  %v831 = vsel %vm293, %v823, -1e+30
  %v832 = vsel %vm294, %v824, -1e+30
  %v833 = vsel %vm295, %v825, -1e+30
  %v834 = vsel %vm296, %v826, -1e+30
  %v835 = vsel %vm297, %v827, -1e+30
  %v836 = vsel %vm387, %v828, -inf
  %837 = vmax.xlane.f32.xlu0 %v836
  %v838 = vpop.xlane.xlu0 %837
  %v839 = vsel %vm387, %v829, -inf
  %840 = vmax.xlane.f32.xlu0 %v839
  %v841 = vpop.xlane.xlu0 %840
  %v842 = vsel %vm387, %v830, -inf
  %843 = vmax.xlane.f32.xlu0 %v842
  %v844 = vpop.xlane.xlu0 %843
  %v845 = vsel %vm387, %v831, -inf
  %846 = vmax.xlane.f32.xlu0 %v845
  %v847 = vpop.xlane.xlu0 %846
  %v848 = vsel %vm387, %v832, -inf
  %849 = vmax.xlane.f32.xlu0 %v848
  %v850 = vpop.xlane.xlu0 %849
  %v851 = vsel %vm387, %v833, -inf
  %852 = vmax.xlane.f32.xlu0 %v851
  %v853 = vpop.xlane.xlu0 %852
  %v854 = vsel %vm387, %v834, -inf
  %855 = vmax.xlane.f32.xlu0 %v854
  %v856 = vpop.xlane.xlu0 %855
  %v857 = vsel %vm387, %v835, -inf
  %858 = vmax.xlane.f32.xlu0 %v857
  %v859 = vpop.xlane.xlu0 %858
  %v860 = vsub.f32 %v828, %v838
  %v861 = vsub.f32 %v829, %v841
  %v862 = vsub.f32 %v830, %v844
  %v863 = vsub.f32 %v831, %v847
  %v864 = vsub.f32 %v832, %v850
  %v865 = vsub.f32 %v833, %v853
  %v866 = vsub.f32 %v834, %v856
  %v867 = vsub.f32 %v835, %v859
  %v868 = vmul.f32 %v860, 1.442695
  %v869 = vpow.pop %v868
  %v870 = vmul.f32 %v861, 1.442695
  %v871 = vpow.pop %v870
  %v872 = vmul.f32 %v862, 1.442695
  %v873 = vpow.pop %v872
  %v874 = vmul.f32 %v863, 1.442695
  %v875 = vpow.pop %v874
  %v876 = vmul.f32 %v864, 1.442695
  %v877 = vpow.pop %v876
  %v878 = vmul.f32 %v865, 1.442695
  %v879 = vpow.pop %v878
  %v880 = vmul.f32 %v866, 1.442695
  %v881 = vpow.pop %v880
  %v882 = vmul.f32 %v867, 1.442695
  %v883 = vpow.pop %v882
  %v884 = vsel %vm387, %v869, 0.0
  %885 = vadd.xlane.f32.xlu0 %v884
  %v886 = vpop.xlane.xlu0 %885
  %v887 = vsel %vm387, %v871, 0.0
  %888 = vadd.xlane.f32.xlu0 %v887
  %v889 = vpop.xlane.xlu0 %888
  %v890 = vsel %vm387, %v873, 0.0
  %891 = vadd.xlane.f32.xlu0 %v890
  %v892 = vpop.xlane.xlu0 %891
  %v893 = vsel %vm387, %v875, 0.0
  %894 = vadd.xlane.f32.xlu0 %v893
  %v895 = vpop.xlane.xlu0 %894
  %v896 = vsel %vm387, %v877, 0.0
  %897 = vadd.xlane.f32.xlu0 %v896
  %v898 = vpop.xlane.xlu0 %897
  %v899 = vsel %vm387, %v879, 0.0
  %900 = vadd.xlane.f32.xlu0 %v899
  %v901 = vpop.xlane.xlu0 %900
  %v902 = vsel %vm387, %v881, 0.0
  %903 = vadd.xlane.f32.xlu0 %v902
  %v904 = vpop.xlane.xlu0 %903
  %v905 = vsel %vm387, %v883, 0.0
  %906 = vadd.xlane.f32.xlu0 %v905
  %v907 = vpop.xlane.xlu0 %906
  %v908 = vrcp.pop %v886
  %v909 = vrcp.pop %v889
  %v910 = vrcp.pop %v892
  %v911 = vrcp.pop %v895
  %v912 = vrcp.pop %v898
  %v913 = vrcp.pop %v901
  %v914 = vrcp.pop %v904
  %v915 = vrcp.pop %v907
  %v916 = vmul.f32 %v869, %v908
  %v917 = vmul.f32 %v871, %v909
  %v918 = vmul.f32 %v873, %v910
  %v919 = vmul.f32 %v875, %v911
  %v920 = vmul.f32 %v877, %v912
  %v921 = vmul.f32 %v879, %v913
  %v922 = vmul.f32 %v881, %v914
  %v923 = vmul.f32 %v883, %v915
  %v924 = vpack.c.bf16 %v917, %v916
  %v925 = vpack.c.bf16 %v919, %v918
  %v926 = vpack.c.bf16 %v921, %v920
  %v927 = vpack.c.bf16 %v923, %v922
  %v928 = vunpack.c.h.b16 %v298
  %v929 = vunpack.c.h.b16 %v299
  %v930 = vunpack.c.h.b16 %v300
  %v931 = vunpack.c.h.b16 %v301
  %v932 = vunpack.c.h.b16 %v302
  %v933 = vunpack.c.h.b16 %v303
  %v934 = vunpack.c.h.b16 %v304
  %v935 = vunpack.c.h.b16 %v305
  %v936 = vpack.c.b16 %v929, %v928
  %v937 = vpack.c.b16 %v931, %v930
  %v938 = vpack.c.b16 %v933, %v932
  %v939 = vpack.c.b16 %v935, %v934
  %v945 = vsel %vm387, %v924, 0
  %v948 = vsel %vm387, %v925, 0
  %v951 = vsel %vm387, %v926, 0
  %v954 = vsel %vm387, %v927, 0
  %956 = vmatpush.bf16.msra.mxu0 0
  %957 = vmatpush.bf16.msra.mxu0 0
  %958 = vmatpush.bf16.msra.mxu0 0
  %959 = vmatpush.bf16.msra.mxu0 0
  %960 = vmatpush.bf16.msra.mxu0 %v939
  %961 = vmatpush.bf16.msra.mxu0 %v938
  %962 = vmatpush.bf16.msra.mxu0 %v937
  %963 = vmatpush.bf16.msra.mxu0 %v936
  %964 = vmatmul.bf16.gmra.mxu0 %v945
  %v965 = vpop.f32.mrf.mxu0
  %v966 = vadd.f32 0.0, %v965
  %v967 = vpop.f32.mrf.mxu0
  %v968 = vadd.f32 0.0, %v967
  %969 = vmatmul.bf16.gmra.mxu0 %v948
  %v970 = vpop.f32.mrf.mxu0
  %v971 = vadd.f32 0.0, %v970
  %v972 = vpop.f32.mrf.mxu0
  %v973 = vadd.f32 0.0, %v972
  %974 = vmatmul.bf16.gmra.mxu0 %v951
  %v975 = vpop.f32.mrf.mxu0
  %v976 = vadd.f32 0.0, %v975
  %v977 = vpop.f32.mrf.mxu0
  %v978 = vadd.f32 0.0, %v977
  %979 = vmatmul.bf16.gmra.mxu0 %v954
  %v980 = vpop.f32.mrf.mxu0
  %v981 = vadd.f32 0.0, %v980
  %v982 = vpop.f32.mrf.mxu0
  %v983 = vadd.f32 0.0, %v982
  %984 = vdwg.mxu0
  %985 = vset.pattern.permute.xlu0 3
  %986 = vperm.xlu0 %985, %v259
  %v987 = vpop.permute.xlu0 %986
  %989 = vset.pattern.permute.xlu0 3
  %990 = vperm.xlu0 %989, %v262
  %v991 = vpop.permute.xlu0 %990
  %993 = vset.pattern.permute.xlu0 3
  %994 = vperm.xlu0 %993, %v265
  %v995 = vpop.permute.xlu0 %994
  %997 = vset.pattern.permute.xlu0 3
  %998 = vperm.xlu0 %997, %v268
  %v999 = vpop.permute.xlu0 %998
  %1001 = vset.pattern.permute.xlu0 3
  %1002 = vperm.xlu0 %1001, %v271
  %v1003 = vpop.permute.xlu0 %1002
  %1005 = vset.pattern.permute.xlu0 3
  %1006 = vperm.xlu0 %1005, %v274
  %v1007 = vpop.permute.xlu0 %1006
  %1009 = vset.pattern.permute.xlu0 3
  %1010 = vperm.xlu0 %1009, %v277
  %v1011 = vpop.permute.xlu0 %1010
  %1013 = vset.pattern.permute.xlu0 3
  %1014 = vperm.xlu0 %1013, %v280
  %v1015 = vpop.permute.xlu0 %1014
  %v1017 = vperm.slane %v192, 3
  %v1018 = vadd.f32 %v987, %v1017
  %v1019 = vadd.f32 %v991, %v1017
  %v1020 = vadd.f32 %v995, %v1017
  %v1021 = vadd.f32 %v999, %v1017
  %v1022 = vadd.f32 %v1003, %v1017
  %v1023 = vadd.f32 %v1007, %v1017
  %v1024 = vadd.f32 %v1011, %v1017
  %v1025 = vadd.f32 %v1015, %v1017
  %vm1026 = vcmp.gt.f32.partialorder %v1018, 0.0
  %vm1027 = vcmp.gt.f32.partialorder %v1019, 0.0
  %vm1028 = vcmp.gt.f32.partialorder %v1020, 0.0
  %vm1029 = vcmp.gt.f32.partialorder %v1021, 0.0
  %vm1030 = vcmp.gt.f32.partialorder %v1022, 0.0
  %vm1031 = vcmp.gt.f32.partialorder %v1023, 0.0
  %vm1032 = vcmp.gt.f32.partialorder %v1024, 0.0
  %vm1033 = vcmp.gt.f32.partialorder %v1025, 0.0
  %v1034 = vmul.f32 %v1018, 0.2
  %v1035 = vmul.f32 %v1019, 0.2
  %v1036 = vmul.f32 %v1020, 0.2
  %v1037 = vmul.f32 %v1021, 0.2
  %v1038 = vmul.f32 %v1022, 0.2
  %v1039 = vmul.f32 %v1023, 0.2
  %v1040 = vmul.f32 %v1024, 0.2
  %v1041 = vmul.f32 %v1025, 0.2
  %v1042 = vsel %vm1026, %v1018, %v1034
  %v1043 = vsel %vm1027, %v1019, %v1035
  %v1044 = vsel %vm1028, %v1020, %v1036
  %v1045 = vsel %vm1029, %v1021, %v1037
  %v1046 = vsel %vm1030, %v1022, %v1038
  %v1047 = vsel %vm1031, %v1023, %v1039
  %v1048 = vsel %vm1032, %v1024, %v1040
  %v1049 = vsel %vm1033, %v1025, %v1041
  %v1050 = vsel %vm290, %v1042, -1e+30
  %v1051 = vsel %vm291, %v1043, -1e+30
  %v1052 = vsel %vm292, %v1044, -1e+30
  %v1053 = vsel %vm293, %v1045, -1e+30
  %v1054 = vsel %vm294, %v1046, -1e+30
  %v1055 = vsel %vm295, %v1047, -1e+30
  %v1056 = vsel %vm296, %v1048, -1e+30
  %v1057 = vsel %vm297, %v1049, -1e+30
  %v1058 = vsel %vm387, %v1050, -inf
  %1059 = vmax.xlane.f32.xlu0 %v1058
  %v1060 = vpop.xlane.xlu0 %1059
  %v1061 = vsel %vm387, %v1051, -inf
  %1062 = vmax.xlane.f32.xlu0 %v1061
  %v1063 = vpop.xlane.xlu0 %1062
  %v1064 = vsel %vm387, %v1052, -inf
  %1065 = vmax.xlane.f32.xlu0 %v1064
  %v1066 = vpop.xlane.xlu0 %1065
  %v1067 = vsel %vm387, %v1053, -inf
  %1068 = vmax.xlane.f32.xlu0 %v1067
  %v1069 = vpop.xlane.xlu0 %1068
  %v1070 = vsel %vm387, %v1054, -inf
  %1071 = vmax.xlane.f32.xlu0 %v1070
  %v1072 = vpop.xlane.xlu0 %1071
  %v1073 = vsel %vm387, %v1055, -inf
  %1074 = vmax.xlane.f32.xlu0 %v1073
  %v1075 = vpop.xlane.xlu0 %1074
  %v1076 = vsel %vm387, %v1056, -inf
  %1077 = vmax.xlane.f32.xlu0 %v1076
  %v1078 = vpop.xlane.xlu0 %1077
  %v1079 = vsel %vm387, %v1057, -inf
  %1080 = vmax.xlane.f32.xlu0 %v1079
  %v1081 = vpop.xlane.xlu0 %1080
  %v1082 = vsub.f32 %v1050, %v1060
  %v1083 = vsub.f32 %v1051, %v1063
  %v1084 = vsub.f32 %v1052, %v1066
  %v1085 = vsub.f32 %v1053, %v1069
  %v1086 = vsub.f32 %v1054, %v1072
  %v1087 = vsub.f32 %v1055, %v1075
  %v1088 = vsub.f32 %v1056, %v1078
  %v1089 = vsub.f32 %v1057, %v1081
  %v1090 = vmul.f32 %v1082, 1.442695
  %v1091 = vpow.pop %v1090
  %v1092 = vmul.f32 %v1083, 1.442695
  %v1093 = vpow.pop %v1092
  %v1094 = vmul.f32 %v1084, 1.442695
  %v1095 = vpow.pop %v1094
  %v1096 = vmul.f32 %v1085, 1.442695
  %v1097 = vpow.pop %v1096
  %v1098 = vmul.f32 %v1086, 1.442695
  %v1099 = vpow.pop %v1098
  %v1100 = vmul.f32 %v1087, 1.442695
  %v1101 = vpow.pop %v1100
  %v1102 = vmul.f32 %v1088, 1.442695
  %v1103 = vpow.pop %v1102
  %v1104 = vmul.f32 %v1089, 1.442695
  %v1105 = vpow.pop %v1104
  %v1106 = vsel %vm387, %v1091, 0.0
  %1107 = vadd.xlane.f32.xlu0 %v1106
  %v1108 = vpop.xlane.xlu0 %1107
  %v1109 = vsel %vm387, %v1093, 0.0
  %1110 = vadd.xlane.f32.xlu0 %v1109
  %v1111 = vpop.xlane.xlu0 %1110
  %v1112 = vsel %vm387, %v1095, 0.0
  %1113 = vadd.xlane.f32.xlu0 %v1112
  %v1114 = vpop.xlane.xlu0 %1113
  %v1115 = vsel %vm387, %v1097, 0.0
  %1116 = vadd.xlane.f32.xlu0 %v1115
  %v1117 = vpop.xlane.xlu0 %1116
  %v1118 = vsel %vm387, %v1099, 0.0
  %1119 = vadd.xlane.f32.xlu0 %v1118
  %v1120 = vpop.xlane.xlu0 %1119
  %v1121 = vsel %vm387, %v1101, 0.0
  %1122 = vadd.xlane.f32.xlu0 %v1121
  %v1123 = vpop.xlane.xlu0 %1122
  %v1124 = vsel %vm387, %v1103, 0.0
  %1125 = vadd.xlane.f32.xlu0 %v1124
  %v1126 = vpop.xlane.xlu0 %1125
  %v1127 = vsel %vm387, %v1105, 0.0
  %1128 = vadd.xlane.f32.xlu0 %v1127
  %v1129 = vpop.xlane.xlu0 %1128
  %v1130 = vrcp.pop %v1108
  %v1131 = vrcp.pop %v1111
  %v1132 = vrcp.pop %v1114
  %v1133 = vrcp.pop %v1117
  %v1134 = vrcp.pop %v1120
  %v1135 = vrcp.pop %v1123
  %v1136 = vrcp.pop %v1126
  %v1137 = vrcp.pop %v1129
  %v1138 = vmul.f32 %v1091, %v1130
  %v1139 = vmul.f32 %v1093, %v1131
  %v1140 = vmul.f32 %v1095, %v1132
  %v1141 = vmul.f32 %v1097, %v1133
  %v1142 = vmul.f32 %v1099, %v1134
  %v1143 = vmul.f32 %v1101, %v1135
  %v1144 = vmul.f32 %v1103, %v1136
  %v1145 = vmul.f32 %v1105, %v1137
  %v1146 = vpack.c.bf16 %v1139, %v1138
  %v1147 = vpack.c.bf16 %v1141, %v1140
  %v1148 = vpack.c.bf16 %v1143, %v1142
  %v1149 = vpack.c.bf16 %v1145, %v1144
  %1150 = vrot.lane.b32.xlu0 %v936, 64
  %v1151 = vpop.permute.xlu0 %1150
  %1152 = vrot.lane.b32.xlu0 %v937, 64
  %v1153 = vpop.permute.xlu0 %1152
  %1154 = vrot.lane.b32.xlu0 %v938, 64
  %v1155 = vpop.permute.xlu0 %1154
  %1156 = vrot.lane.b32.xlu0 %v939, 64
  %v1157 = vpop.permute.xlu0 %1156
  %v1163 = vsel %vm387, %v1146, 0
  %v1166 = vsel %vm387, %v1147, 0
  %v1169 = vsel %vm387, %v1148, 0
  %v1172 = vsel %vm387, %v1149, 0
  %1174 = vmatpush.bf16.msra.mxu0 0
  %1175 = vmatpush.bf16.msra.mxu0 0
  %1176 = vmatpush.bf16.msra.mxu0 0
  %1177 = vmatpush.bf16.msra.mxu0 0
  %1178 = vmatpush.bf16.msra.mxu0 %v1157
  %1179 = vmatpush.bf16.msra.mxu0 %v1155
  %1180 = vmatpush.bf16.msra.mxu0 %v1153
  %1181 = vmatpush.bf16.msra.mxu0 %v1151
  %1182 = vmatmul.bf16.gmra.mxu0 %v1163
  %v1183 = vpop.f32.mrf.mxu0
  %v1184 = vadd.f32 0.0, %v1183
  %v1185 = vpop.f32.mrf.mxu0
  %v1186 = vadd.f32 0.0, %v1185
  %1187 = vmatmul.bf16.gmra.mxu0 %v1166
  %v1188 = vpop.f32.mrf.mxu0
  %v1189 = vadd.f32 0.0, %v1188
  %v1190 = vpop.f32.mrf.mxu0
  %v1191 = vadd.f32 0.0, %v1190
  %1192 = vmatmul.bf16.gmra.mxu0 %v1169
  %v1193 = vpop.f32.mrf.mxu0
  %v1194 = vadd.f32 0.0, %v1193
  %v1195 = vpop.f32.mrf.mxu0
  %v1196 = vadd.f32 0.0, %v1195
  %1197 = vmatmul.bf16.gmra.mxu0 %v1172
  %v1198 = vpop.f32.mrf.mxu0
  %v1199 = vadd.f32 0.0, %v1198
  %v1200 = vpop.f32.mrf.mxu0
  %v1201 = vadd.f32 0.0, %v1200
  %1202 = vdwg.mxu0
  %1211 = vrot.lane.b32.xlu0 %v744, 64
  %v1212 = vpop.permute.xlu0 %1211
  %1213 = vrot.lane.b32.xlu0 %v746, 64
  %v1214 = vpop.permute.xlu0 %1213
  %1215 = vrot.lane.b32.xlu0 %v749, 64
  %v1216 = vpop.permute.xlu0 %1215
  %1217 = vrot.lane.b32.xlu0 %v751, 64
  %v1218 = vpop.permute.xlu0 %1217
  %1219 = vrot.lane.b32.xlu0 %v754, 64
  %v1220 = vpop.permute.xlu0 %1219
  %1221 = vrot.lane.b32.xlu0 %v756, 64
  %v1222 = vpop.permute.xlu0 %1221
  %1223 = vrot.lane.b32.xlu0 %v759, 64
  %v1224 = vpop.permute.xlu0 %1223
  %1225 = vrot.lane.b32.xlu0 %v761, 64
  %v1226 = vpop.permute.xlu0 %1225
  %1243 = vrot.lane.b32.xlu0 %v1184, 64
  %v1244 = vpop.permute.xlu0 %1243
  %1245 = vrot.lane.b32.xlu0 %v1186, 64
  %v1246 = vpop.permute.xlu0 %1245
  %1247 = vrot.lane.b32.xlu0 %v1189, 64
  %v1248 = vpop.permute.xlu0 %1247
  %1249 = vrot.lane.b32.xlu0 %v1191, 64
  %v1250 = vpop.permute.xlu0 %1249
  %1251 = vrot.lane.b32.xlu0 %v1194, 64
  %v1252 = vpop.permute.xlu0 %1251
  %1253 = vrot.lane.b32.xlu0 %v1196, 64
  %v1254 = vpop.permute.xlu0 %1253
  %1255 = vrot.lane.b32.xlu0 %v1199, 64
  %v1256 = vpop.permute.xlu0 %1255
  %1257 = vrot.lane.b32.xlu0 %v1201, 64
  %v1258 = vpop.permute.xlu0 %1257
  %v1267 = vsel %vm387, %v526, %v1212
  %v1268 = vsel %vm387, %v528, %v1214
  %v1269 = vsel %vm387, %v531, %v1216
  %v1270 = vsel %vm387, %v533, %v1218
  %v1271 = vsel %vm387, %v536, %v1220
  %v1272 = vsel %vm387, %v538, %v1222
  %v1273 = vsel %vm387, %v541, %v1224
  %v1274 = vsel %vm387, %v543, %v1226
  %v1275 = vsel %vm387, %v966, %v1244
  %v1276 = vsel %vm387, %v968, %v1246
  %v1277 = vsel %vm387, %v971, %v1248
  %v1278 = vsel %vm387, %v973, %v1250
  %v1279 = vsel %vm387, %v976, %v1252
  %v1280 = vsel %vm387, %v978, %v1254
  %v1281 = vsel %vm387, %v981, %v1256
  %v1282 = vsel %vm387, %v983, %v1258
  %v1284 = vperm.slane %v147, 0
  %v1285 = vperm.slane %v147, 1
  %v1288 = vadd.f32 %v1267, %v1284
  %v1289 = vadd.f32 %v1275, %v1285
  %v1290 = vadd.f32 %v1268, %v1284
  %v1291 = vadd.f32 %v1276, %v1285
  %v1292 = vadd.f32 %v1269, %v1284
  %v1293 = vadd.f32 %v1277, %v1285
  %v1294 = vadd.f32 %v1270, %v1284
  %v1295 = vadd.f32 %v1278, %v1285
  %v1296 = vadd.f32 %v1271, %v1284
  %v1297 = vadd.f32 %v1279, %v1285
  %v1298 = vadd.f32 %v1272, %v1284
  %v1299 = vadd.f32 %v1280, %v1285
  %v1300 = vadd.f32 %v1273, %v1284
  %v1301 = vadd.f32 %v1281, %v1285
  %v1302 = vadd.f32 %v1274, %v1284
  %v1303 = vadd.f32 %v1282, %v1285
  %v1304 = vmax.f32 %v1288, 0.0
  %v1305 = vmax.f32 %v1289, 0.0
  %v1306 = vmax.f32 %v1290, 0.0
  %v1307 = vmax.f32 %v1291, 0.0
  %v1308 = vmax.f32 %v1292, 0.0
  %v1309 = vmax.f32 %v1293, 0.0
  %v1310 = vmax.f32 %v1294, 0.0
  %v1311 = vmax.f32 %v1295, 0.0
  %v1312 = vmax.f32 %v1296, 0.0
  %v1313 = vmax.f32 %v1297, 0.0
  %v1314 = vmax.f32 %v1298, 0.0
  %v1315 = vmax.f32 %v1299, 0.0
  %v1316 = vmax.f32 %v1300, 0.0
  %v1317 = vmax.f32 %v1301, 0.0
  %v1318 = vmax.f32 %v1302, 0.0
  %v1319 = vmax.f32 %v1303, 0.0
  %v1320 = vpack.c.bf16 %v1306, %v1304
  %v1321 = vpack.c.bf16 %v1307, %v1305
  %v1322 = vpack.c.bf16 %v1310, %v1308
  %v1323 = vpack.c.bf16 %v1311, %v1309
  %v1324 = vpack.c.bf16 %v1314, %v1312
  %v1325 = vpack.c.bf16 %v1315, %v1313
  %v1326 = vpack.c.bf16 %v1318, %v1316
  %v1327 = vpack.c.bf16 %v1319, %v1317
  %v1328 = vld [vmem:[%s6] sm:$0xff]
  %v1329 = vld [vmem:[%s6 + $0x8] sm:$0xff]
  %v1330 = vld [vmem:[%s6 + $0x10] sm:$0xff]
  %v1331 = vld [vmem:[%s6 + $0x18] sm:$0xff]
  %v1332 = vld [vmem:[%s6 + $0x20] sm:$0xff]
  %v1333 = vld [vmem:[%s6 + $0x28] sm:$0xff]
  %v1334 = vld [vmem:[%s6 + $0x30] sm:$0xff]
  %v1335 = vld [vmem:[%s6 + $0x38] sm:$0xff]
  %v1336 = vld [vmem:[%s6 + $0x40] sm:$0xff]
  %v1337 = vld [vmem:[%s6 + $0x48] sm:$0xff]
  %v1338 = vld [vmem:[%s6 + $0x50] sm:$0xff]
  %v1339 = vld [vmem:[%s6 + $0x58] sm:$0xff]
  %v1340 = vld [vmem:[%s6 + $0x60] sm:$0xff]
  %v1341 = vld [vmem:[%s6 + $0x68] sm:$0xff]
  %v1342 = vld [vmem:[%s6 + $0x70] sm:$0xff]
  %v1343 = vld [vmem:[%s6 + $0x78] sm:$0xff]
  %v1344 = vld [vmem:[%s6 + $0x80] sm:$0xff]
  %v1345 = vld [vmem:[%s6 + $0x88] sm:$0xff]
  %v1346 = vld [vmem:[%s6 + $0x90] sm:$0xff]
  %v1347 = vld [vmem:[%s6 + $0x98] sm:$0xff]
  %v1348 = vld [vmem:[%s6 + $0xa0] sm:$0xff]
  %v1349 = vld [vmem:[%s6 + $0xa8] sm:$0xff]
  %v1350 = vld [vmem:[%s6 + $0xb0] sm:$0xff]
  %v1351 = vld [vmem:[%s6 + $0xb8] sm:$0xff]
  %v1352 = vld [vmem:[%s6 + $0xc0] sm:$0xff]
  %v1353 = vld [vmem:[%s6 + $0xc8] sm:$0xff]
  %v1354 = vld [vmem:[%s6 + $0xd0] sm:$0xff]
  %v1355 = vld [vmem:[%s6 + $0xd8] sm:$0xff]
  %v1356 = vld [vmem:[%s6 + $0xe0] sm:$0xff]
  %v1357 = vld [vmem:[%s6 + $0xe8] sm:$0xff]
  %v1358 = vld [vmem:[%s6 + $0xf0] sm:$0xff]
  %v1359 = vld [vmem:[%s6 + $0xf8] sm:$0xff]
  %v1360 = vld [vmem:[%s6 + $0x100] sm:$0xff]
  %v1361 = vld [vmem:[%s6 + $0x108] sm:$0xff]
  %v1362 = vld [vmem:[%s6 + $0x110] sm:$0xff]
  %v1363 = vld [vmem:[%s6 + $0x118] sm:$0xff]
  %v1364 = vld [vmem:[%s6 + $0x120] sm:$0xff]
  %v1365 = vld [vmem:[%s6 + $0x128] sm:$0xff]
  %v1366 = vld [vmem:[%s6 + $0x130] sm:$0xff]
  %v1367 = vld [vmem:[%s6 + $0x138] sm:$0xff]
  %v1368 = vld [vmem:[%s6 + $0x140] sm:$0xff]
  %v1369 = vld [vmem:[%s6 + $0x148] sm:$0xff]
  %v1370 = vld [vmem:[%s6 + $0x150] sm:$0xff]
  %v1371 = vld [vmem:[%s6 + $0x158] sm:$0xff]
  %v1372 = vld [vmem:[%s6 + $0x160] sm:$0xff]
  %v1373 = vld [vmem:[%s6 + $0x168] sm:$0xff]
  %v1374 = vld [vmem:[%s6 + $0x170] sm:$0xff]
  %v1375 = vld [vmem:[%s6 + $0x178] sm:$0xff]
  %v1376 = vld [vmem:[%s6 + $0x180] sm:$0xff]
  %v1377 = vld [vmem:[%s6 + $0x188] sm:$0xff]
  %v1378 = vld [vmem:[%s6 + $0x190] sm:$0xff]
  %v1379 = vld [vmem:[%s6 + $0x198] sm:$0xff]
  %v1380 = vld [vmem:[%s6 + $0x1a0] sm:$0xff]
  %v1381 = vld [vmem:[%s6 + $0x1a8] sm:$0xff]
  %v1382 = vld [vmem:[%s6 + $0x1b0] sm:$0xff]
  %v1383 = vld [vmem:[%s6 + $0x1b8] sm:$0xff]
  %v1384 = vld [vmem:[%s6 + $0x1c0] sm:$0xff]
  %v1385 = vld [vmem:[%s6 + $0x1c8] sm:$0xff]
  %v1386 = vld [vmem:[%s6 + $0x1d0] sm:$0xff]
  %v1387 = vld [vmem:[%s6 + $0x1d8] sm:$0xff]
  %v1388 = vld [vmem:[%s6 + $0x1e0] sm:$0xff]
  %v1389 = vld [vmem:[%s6 + $0x1e8] sm:$0xff]
  %v1390 = vld [vmem:[%s6 + $0x1f0] sm:$0xff]
  %v1391 = vld [vmem:[%s6 + $0x1f8] sm:$0xff]
  %v1392 = vpack.c.bf16 %v1330, %v1328
  %v1393 = vpack.c.bf16 %v1331, %v1329
  %v1394 = vpack.c.bf16 %v1334, %v1332
  %v1395 = vpack.c.bf16 %v1335, %v1333
  %v1396 = vpack.c.bf16 %v1338, %v1336
  %v1397 = vpack.c.bf16 %v1339, %v1337
  %v1398 = vpack.c.bf16 %v1342, %v1340
  %v1399 = vpack.c.bf16 %v1343, %v1341
  %v1400 = vpack.c.bf16 %v1346, %v1344
  %v1401 = vpack.c.bf16 %v1347, %v1345
  %v1402 = vpack.c.bf16 %v1350, %v1348
  %v1403 = vpack.c.bf16 %v1351, %v1349
  %v1404 = vpack.c.bf16 %v1354, %v1352
  %v1405 = vpack.c.bf16 %v1355, %v1353
  %v1406 = vpack.c.bf16 %v1358, %v1356
  %v1407 = vpack.c.bf16 %v1359, %v1357
  %v1408 = vpack.c.bf16 %v1362, %v1360
  %v1409 = vpack.c.bf16 %v1363, %v1361
  %v1410 = vpack.c.bf16 %v1366, %v1364
  %v1411 = vpack.c.bf16 %v1367, %v1365
  %v1412 = vpack.c.bf16 %v1370, %v1368
  %v1413 = vpack.c.bf16 %v1371, %v1369
  %v1414 = vpack.c.bf16 %v1374, %v1372
  %v1415 = vpack.c.bf16 %v1375, %v1373
  %v1416 = vpack.c.bf16 %v1378, %v1376
  %v1417 = vpack.c.bf16 %v1379, %v1377
  %v1418 = vpack.c.bf16 %v1382, %v1380
  %v1419 = vpack.c.bf16 %v1383, %v1381
  %v1420 = vpack.c.bf16 %v1386, %v1384
  %v1421 = vpack.c.bf16 %v1387, %v1385
  %v1422 = vpack.c.bf16 %v1390, %v1388
  %v1423 = vpack.c.bf16 %v1391, %v1389
  %1424 = vmatpush.bf16.msra.mxu0 %v1406
  %1425 = vmatpush.bf16.msra.mxu0 %v1404
  %1426 = vmatpush.bf16.msra.mxu0 %v1402
  %1427 = vmatpush.bf16.msra.mxu0 %v1400
  %1428 = vmatpush.bf16.msra.mxu0 %v1398
  %1429 = vmatpush.bf16.msra.mxu0 %v1396
  %1430 = vmatpush.bf16.msra.mxu0 %v1394
  %1431 = vmatpush.bf16.msra.mxu0 %v1392
  %1432 = vmatmul.bf16.gmra.mxu0 %v1320
  %v1433 = vpop.f32.mrf.mxu0
  %v1434 = vadd.f32 0.0, %v1433
  %v1435 = vpop.f32.mrf.mxu0
  %v1436 = vadd.f32 0.0, %v1435
  %1437 = vmatmul.bf16.gmra.mxu0 %v1322
  %v1438 = vpop.f32.mrf.mxu0
  %v1439 = vadd.f32 0.0, %v1438
  %v1440 = vpop.f32.mrf.mxu0
  %v1441 = vadd.f32 0.0, %v1440
  %1442 = vmatmul.bf16.gmra.mxu0 %v1324
  %v1443 = vpop.f32.mrf.mxu0
  %v1444 = vadd.f32 0.0, %v1443
  %v1445 = vpop.f32.mrf.mxu0
  %v1446 = vadd.f32 0.0, %v1445
  %1447 = vmatmul.bf16.gmra.mxu0 %v1326
  %v1448 = vpop.f32.mrf.mxu0
  %v1449 = vadd.f32 0.0, %v1448
  %v1450 = vpop.f32.mrf.mxu0
  %v1451 = vadd.f32 0.0, %v1450
  %1452 = vdwg.mxu0
  %1453 = vmatpush.bf16.msra.mxu0 %v1422
  %1454 = vmatpush.bf16.msra.mxu0 %v1420
  %1455 = vmatpush.bf16.msra.mxu0 %v1418
  %1456 = vmatpush.bf16.msra.mxu0 %v1416
  %1457 = vmatpush.bf16.msra.mxu0 %v1414
  %1458 = vmatpush.bf16.msra.mxu0 %v1412
  %1459 = vmatpush.bf16.msra.mxu0 %v1410
  %1460 = vmatpush.bf16.msra.mxu0 %v1408
  %1461 = vmatmul.bf16.gmra.mxu0 %v1321
  %v1462 = vpop.f32.mrf.mxu0
  %v1463 = vadd.f32 %v1434, %v1462
  %v1464 = vpop.f32.mrf.mxu0
  %v1465 = vadd.f32 %v1436, %v1464
  %1466 = vmatmul.bf16.gmra.mxu0 %v1323
  %v1467 = vpop.f32.mrf.mxu0
  %v1468 = vadd.f32 %v1439, %v1467
  %v1469 = vpop.f32.mrf.mxu0
  %v1470 = vadd.f32 %v1441, %v1469
  %1471 = vmatmul.bf16.gmra.mxu0 %v1325
  %v1472 = vpop.f32.mrf.mxu0
  %v1473 = vadd.f32 %v1444, %v1472
  %v1474 = vpop.f32.mrf.mxu0
  %v1475 = vadd.f32 %v1446, %v1474
  %1476 = vmatmul.bf16.gmra.mxu0 %v1327
  %v1477 = vpop.f32.mrf.mxu0
  %v1478 = vadd.f32 %v1449, %v1477
  %v1479 = vpop.f32.mrf.mxu0
  %v1480 = vadd.f32 %v1451, %v1479
  %1481 = vdwg.mxu0
  %1482 = vmatpush.bf16.msra.mxu0 %v1407
  %1483 = vmatpush.bf16.msra.mxu0 %v1405
  %1484 = vmatpush.bf16.msra.mxu0 %v1403
  %1485 = vmatpush.bf16.msra.mxu0 %v1401
  %1486 = vmatpush.bf16.msra.mxu0 %v1399
  %1487 = vmatpush.bf16.msra.mxu0 %v1397
  %1488 = vmatpush.bf16.msra.mxu0 %v1395
  %1489 = vmatpush.bf16.msra.mxu0 %v1393
  %1490 = vmatmul.bf16.gmra.mxu0 %v1320
  %v1491 = vpop.f32.mrf.mxu0
  %v1492 = vadd.f32 0.0, %v1491
  %v1493 = vpop.f32.mrf.mxu0
  %v1494 = vadd.f32 0.0, %v1493
  %1495 = vmatmul.bf16.gmra.mxu0 %v1322
  %v1496 = vpop.f32.mrf.mxu0
  %v1497 = vadd.f32 0.0, %v1496
  %v1498 = vpop.f32.mrf.mxu0
  %v1499 = vadd.f32 0.0, %v1498
  %1500 = vmatmul.bf16.gmra.mxu0 %v1324
  %v1501 = vpop.f32.mrf.mxu0
  %v1502 = vadd.f32 0.0, %v1501
  %v1503 = vpop.f32.mrf.mxu0
  %v1504 = vadd.f32 0.0, %v1503
  %1505 = vmatmul.bf16.gmra.mxu0 %v1326
  %v1506 = vpop.f32.mrf.mxu0
  %v1507 = vadd.f32 0.0, %v1506
  %v1508 = vpop.f32.mrf.mxu0
  %v1509 = vadd.f32 0.0, %v1508
  %1510 = vdwg.mxu0
  %1511 = vmatpush.bf16.msra.mxu0 %v1423
  %1512 = vmatpush.bf16.msra.mxu0 %v1421
  %1513 = vmatpush.bf16.msra.mxu0 %v1419
  %1514 = vmatpush.bf16.msra.mxu0 %v1417
  %1515 = vmatpush.bf16.msra.mxu0 %v1415
  %1516 = vmatpush.bf16.msra.mxu0 %v1413
  %1517 = vmatpush.bf16.msra.mxu0 %v1411
  %1518 = vmatpush.bf16.msra.mxu0 %v1409
  %1519 = vmatmul.bf16.gmra.mxu0 %v1321
  %v1520 = vpop.f32.mrf.mxu0
  %v1521 = vadd.f32 %v1492, %v1520
  %v1522 = vpop.f32.mrf.mxu0
  %v1523 = vadd.f32 %v1494, %v1522
  %1524 = vmatmul.bf16.gmra.mxu0 %v1323
  %v1525 = vpop.f32.mrf.mxu0
  %v1526 = vadd.f32 %v1497, %v1525
  %v1527 = vpop.f32.mrf.mxu0
  %v1528 = vadd.f32 %v1499, %v1527
  %1529 = vmatmul.bf16.gmra.mxu0 %v1325
  %v1530 = vpop.f32.mrf.mxu0
  %v1531 = vadd.f32 %v1502, %v1530
  %v1532 = vpop.f32.mrf.mxu0
  %v1533 = vadd.f32 %v1504, %v1532
  %1534 = vmatmul.bf16.gmra.mxu0 %v1327
  %v1535 = vpop.f32.mrf.mxu0
  %v1536 = vadd.f32 %v1507, %v1535
  %v1537 = vpop.f32.mrf.mxu0
  %v1538 = vadd.f32 %v1509, %v1537
  %1539 = vdwg.mxu0
  %v1540 = vld [vmem:[%s7] sm:$0xff]
  %v1541 = vld [vmem:[%s8] sm:$0xff]
  %v1542 = vld [vmem:[%s9] sm:$0x3]
  %1544 = vst [vmem:[#allocation1] ss:$2 sm:$0xff] %v1540
  %v1545 = vld.sshfl [vmem:[#allocation1] sm:$0xff pattern:$0x75316420]
  %v1546 = vld.sshfl [vmem:[#allocation1 + $0x8] sm:$0xff pattern:$0x75316420]
  %1549 = vmatpush.xpose.msra.mxu0 0.0
  %1550 = vmatpush.xpose.msra.mxu0 0.0
  %1551 = vmatpush.xpose.msra.mxu0 0.0
  %1552 = vmatpush.xpose.msra.mxu0 0.0
  %1553 = vmatpush.xpose.msra.mxu0 0.0
  %1554 = vmatpush.xpose.msra.mxu0 0.0
  %1555 = vmatpush.xpose.msra.mxu0 0.0
  %1556 = vmatpush.xpose.msra.mxu0 0.0
  %1557 = vmatpush.xpose.msra.mxu0 %v1480
  %1558 = vmatpush.xpose.msra.mxu0 %v1478
  %1559 = vmatpush.xpose.msra.mxu0 %v1475
  %1560 = vmatpush.xpose.msra.mxu0 %v1473
  %1561 = vmatpush.xpose.msra.mxu0 %v1470
  %1562 = vmatpush.xpose.msra.mxu0 %v1468
  %1563 = vmatpush.xpose.msra.mxu0 %v1465
  %1564 = vmatpush.xpose.msra.mxu0 %v1463
  %1565 = vmatmul.f32.gmra.mxu0 %v1545
  %v1566 = vpop.f32.mrf.mxu0
  %v1567 = vadd.f32 0.0, %v1566
  %1568 = vdwg.mxu0
  %1569 = vmatpush.xpose.msra.mxu0 0.0
  %1570 = vmatpush.xpose.msra.mxu0 0.0
  %1571 = vmatpush.xpose.msra.mxu0 0.0
  %1572 = vmatpush.xpose.msra.mxu0 0.0
  %1573 = vmatpush.xpose.msra.mxu0 0.0
  %1574 = vmatpush.xpose.msra.mxu0 0.0
  %1575 = vmatpush.xpose.msra.mxu0 0.0
  %1576 = vmatpush.xpose.msra.mxu0 0.0
  %1577 = vmatpush.xpose.msra.mxu0 %v1538
  %1578 = vmatpush.xpose.msra.mxu0 %v1536
  %1579 = vmatpush.xpose.msra.mxu0 %v1533
  %1580 = vmatpush.xpose.msra.mxu0 %v1531
  %1581 = vmatpush.xpose.msra.mxu0 %v1528
  %1582 = vmatpush.xpose.msra.mxu0 %v1526
  %1583 = vmatpush.xpose.msra.mxu0 %v1523
  %1584 = vmatpush.xpose.msra.mxu0 %v1521
  %1585 = vmatmul.f32.gmra.mxu0 %v1546
  %v1586 = vpop.f32.mrf.mxu0
  %v1587 = vadd.f32 %v1567, %v1586
  %1588 = vdwg.mxu0
  %1590 = vst [vmem:[#allocation1] ss:$2 sm:$0xff] %v1541
  %v1591 = vld.sshfl [vmem:[#allocation1] sm:$0xff pattern:$0x75316420]
  %v1592 = vld.sshfl [vmem:[#allocation1 + $0x8] sm:$0xff pattern:$0x75316420]
  %1595 = vmatpush.xpose.msra.mxu0 0.0
  %1596 = vmatpush.xpose.msra.mxu0 0.0
  %1597 = vmatpush.xpose.msra.mxu0 0.0
  %1598 = vmatpush.xpose.msra.mxu0 0.0
  %1599 = vmatpush.xpose.msra.mxu0 0.0
  %1600 = vmatpush.xpose.msra.mxu0 0.0
  %1601 = vmatpush.xpose.msra.mxu0 0.0
  %1602 = vmatpush.xpose.msra.mxu0 0.0
  %1603 = vmatpush.xpose.msra.mxu0 0.0
  %1604 = vmatpush.xpose.msra.mxu0 0.0
  %1605 = vmatpush.xpose.msra.mxu0 0.0
  %1606 = vmatpush.xpose.msra.mxu0 0.0
  %1607 = vmatpush.xpose.msra.mxu0 0.0
  %1608 = vmatpush.xpose.msra.mxu0 0.0
  %1609 = vmatpush.xpose.msra.mxu0 0.0
  %1610 = vmatpush.xpose.msra.mxu0 %v1591
  %1611 = vmatmul.f32.gmra.mxu0 %v1463
  %v1612 = vpop.f32.mrf.mxu0
  %v1613 = vadd.f32 0.0, %v1612
  %1614 = vmatmul.f32.gmra.mxu0 %v1465
  %v1615 = vpop.f32.mrf.mxu0
  %v1616 = vadd.f32 0.0, %v1615
  %1617 = vmatmul.f32.gmra.mxu0 %v1468
  %v1618 = vpop.f32.mrf.mxu0
  %v1619 = vadd.f32 0.0, %v1618
  %1620 = vmatmul.f32.gmra.mxu0 %v1470
  %v1621 = vpop.f32.mrf.mxu0
  %v1622 = vadd.f32 0.0, %v1621
  %1623 = vmatmul.f32.gmra.mxu0 %v1473
  %v1624 = vpop.f32.mrf.mxu0
  %v1625 = vadd.f32 0.0, %v1624
  %1626 = vmatmul.f32.gmra.mxu0 %v1475
  %v1627 = vpop.f32.mrf.mxu0
  %v1628 = vadd.f32 0.0, %v1627
  %1629 = vmatmul.f32.gmra.mxu0 %v1478
  %v1630 = vpop.f32.mrf.mxu0
  %v1631 = vadd.f32 0.0, %v1630
  %1632 = vmatmul.f32.gmra.mxu0 %v1480
  %v1633 = vpop.f32.mrf.mxu0
  %v1634 = vadd.f32 0.0, %v1633
  %1635 = vdwg.mxu0
  %1636 = vmatpush.xpose.msra.mxu0 0.0
  %1637 = vmatpush.xpose.msra.mxu0 0.0
  %1638 = vmatpush.xpose.msra.mxu0 0.0
  %1639 = vmatpush.xpose.msra.mxu0 0.0
  %1640 = vmatpush.xpose.msra.mxu0 0.0
  %1641 = vmatpush.xpose.msra.mxu0 0.0
  %1642 = vmatpush.xpose.msra.mxu0 0.0
  %1643 = vmatpush.xpose.msra.mxu0 0.0
  %1644 = vmatpush.xpose.msra.mxu0 0.0
  %1645 = vmatpush.xpose.msra.mxu0 0.0
  %1646 = vmatpush.xpose.msra.mxu0 0.0
  %1647 = vmatpush.xpose.msra.mxu0 0.0
  %1648 = vmatpush.xpose.msra.mxu0 0.0
  %1649 = vmatpush.xpose.msra.mxu0 0.0
  %1650 = vmatpush.xpose.msra.mxu0 0.0
  %1651 = vmatpush.xpose.msra.mxu0 %v1592
  %1652 = vmatmul.f32.gmra.mxu0 %v1521
  %v1653 = vpop.f32.mrf.mxu0
  %v1654 = vadd.f32 %v1613, %v1653
  %1655 = vmatmul.f32.gmra.mxu0 %v1523
  %v1656 = vpop.f32.mrf.mxu0
  %v1657 = vadd.f32 %v1616, %v1656
  %1658 = vmatmul.f32.gmra.mxu0 %v1526
  %v1659 = vpop.f32.mrf.mxu0
  %v1660 = vadd.f32 %v1619, %v1659
  %1661 = vmatmul.f32.gmra.mxu0 %v1528
  %v1662 = vpop.f32.mrf.mxu0
  %v1663 = vadd.f32 %v1622, %v1662
  %1664 = vmatmul.f32.gmra.mxu0 %v1531
  %v1665 = vpop.f32.mrf.mxu0
  %v1666 = vadd.f32 %v1625, %v1665
  %1667 = vmatmul.f32.gmra.mxu0 %v1533
  %v1668 = vpop.f32.mrf.mxu0
  %v1669 = vadd.f32 %v1628, %v1668
  %1670 = vmatmul.f32.gmra.mxu0 %v1536
  %v1671 = vpop.f32.mrf.mxu0
  %v1672 = vadd.f32 %v1631, %v1671
  %1673 = vmatmul.f32.gmra.mxu0 %v1538
  %v1674 = vpop.f32.mrf.mxu0
  %v1675 = vadd.f32 %v1634, %v1674
  %1676 = vdwg.mxu0
  %v1677 = vpack.c.bf16 %v1521, %v1463
  %v1678 = vpack.c.bf16 %v1523, %v1465
  %v1679 = vpack.c.bf16 %v1526, %v1468
  %v1680 = vpack.c.bf16 %v1528, %v1470
  %v1681 = vpack.c.bf16 %v1531, %v1473
  %v1682 = vpack.c.bf16 %v1533, %v1475
  %v1683 = vpack.c.bf16 %v1536, %v1478
  %v1684 = vpack.c.bf16 %v1538, %v1480
  %1686 = vset.pattern.permute.xlu0 0
  %1687 = vperm.xlu0 %1686, %v1654
  %v1688 = vpop.permute.xlu0 %1687
  %1691 = vset.pattern.permute.xlu0 0
  %1692 = vperm.xlu0 %1691, %v1657
  %v1693 = vpop.permute.xlu0 %1692
  %1696 = vset.pattern.permute.xlu0 0
  %1697 = vperm.xlu0 %1696, %v1660
  %v1698 = vpop.permute.xlu0 %1697
  %1701 = vset.pattern.permute.xlu0 0
  %1702 = vperm.xlu0 %1701, %v1663
  %v1703 = vpop.permute.xlu0 %1702
  %1706 = vset.pattern.permute.xlu0 0
  %1707 = vperm.xlu0 %1706, %v1666
  %v1708 = vpop.permute.xlu0 %1707
  %1711 = vset.pattern.permute.xlu0 0
  %1712 = vperm.xlu0 %1711, %v1669
  %v1713 = vpop.permute.xlu0 %1712
  %1716 = vset.pattern.permute.xlu0 0
  %1717 = vperm.xlu0 %1716, %v1672
  %v1718 = vpop.permute.xlu0 %1717
  %1721 = vset.pattern.permute.xlu0 0
  %1722 = vperm.xlu0 %1721, %v1675
  %v1723 = vpop.permute.xlu0 %1722
  %v1725 = vperm.slane %v1587, 0
  %v1726 = vadd.f32 %v1688, %v1725
  %v1727 = vadd.f32 %v1693, %v1725
  %v1728 = vadd.f32 %v1698, %v1725
  %v1729 = vadd.f32 %v1703, %v1725
  %v1730 = vadd.f32 %v1708, %v1725
  %v1731 = vadd.f32 %v1713, %v1725
  %v1732 = vadd.f32 %v1718, %v1725
  %v1733 = vadd.f32 %v1723, %v1725
  %vm1734 = vcmp.gt.f32.partialorder %v1726, 0.0
  %vm1735 = vcmp.gt.f32.partialorder %v1727, 0.0
  %vm1736 = vcmp.gt.f32.partialorder %v1728, 0.0
  %vm1737 = vcmp.gt.f32.partialorder %v1729, 0.0
  %vm1738 = vcmp.gt.f32.partialorder %v1730, 0.0
  %vm1739 = vcmp.gt.f32.partialorder %v1731, 0.0
  %vm1740 = vcmp.gt.f32.partialorder %v1732, 0.0
  %vm1741 = vcmp.gt.f32.partialorder %v1733, 0.0
  %v1742 = vmul.f32 %v1726, 0.2
  %v1743 = vmul.f32 %v1727, 0.2
  %v1744 = vmul.f32 %v1728, 0.2
  %v1745 = vmul.f32 %v1729, 0.2
  %v1746 = vmul.f32 %v1730, 0.2
  %v1747 = vmul.f32 %v1731, 0.2
  %v1748 = vmul.f32 %v1732, 0.2
  %v1749 = vmul.f32 %v1733, 0.2
  %v1750 = vsel %vm1734, %v1726, %v1742
  %v1751 = vsel %vm1735, %v1727, %v1743
  %v1752 = vsel %vm1736, %v1728, %v1744
  %v1753 = vsel %vm1737, %v1729, %v1745
  %v1754 = vsel %vm1738, %v1730, %v1746
  %v1755 = vsel %vm1739, %v1731, %v1747
  %v1756 = vsel %vm1740, %v1732, %v1748
  %v1757 = vsel %vm1741, %v1733, %v1749
  %v1758 = vsel %vm290, %v1750, -1e+30
  %v1759 = vsel %vm291, %v1751, -1e+30
  %v1760 = vsel %vm292, %v1752, -1e+30
  %v1761 = vsel %vm293, %v1753, -1e+30
  %v1762 = vsel %vm294, %v1754, -1e+30
  %v1763 = vsel %vm295, %v1755, -1e+30
  %v1764 = vsel %vm296, %v1756, -1e+30
  %v1765 = vsel %vm297, %v1757, -1e+30
  %v1766 = vsel %vm387, %v1758, -inf
  %1767 = vmax.xlane.f32.xlu0 %v1766
  %v1768 = vpop.xlane.xlu0 %1767
  %v1769 = vsel %vm387, %v1759, -inf
  %1770 = vmax.xlane.f32.xlu0 %v1769
  %v1771 = vpop.xlane.xlu0 %1770
  %v1772 = vsel %vm387, %v1760, -inf
  %1773 = vmax.xlane.f32.xlu0 %v1772
  %v1774 = vpop.xlane.xlu0 %1773
  %v1775 = vsel %vm387, %v1761, -inf
  %1776 = vmax.xlane.f32.xlu0 %v1775
  %v1777 = vpop.xlane.xlu0 %1776
  %v1778 = vsel %vm387, %v1762, -inf
  %1779 = vmax.xlane.f32.xlu0 %v1778
  %v1780 = vpop.xlane.xlu0 %1779
  %v1781 = vsel %vm387, %v1763, -inf
  %1782 = vmax.xlane.f32.xlu0 %v1781
  %v1783 = vpop.xlane.xlu0 %1782
  %v1784 = vsel %vm387, %v1764, -inf
  %1785 = vmax.xlane.f32.xlu0 %v1784
  %v1786 = vpop.xlane.xlu0 %1785
  %v1787 = vsel %vm387, %v1765, -inf
  %1788 = vmax.xlane.f32.xlu0 %v1787
  %v1789 = vpop.xlane.xlu0 %1788
  %v1790 = vsub.f32 %v1758, %v1768
  %v1791 = vsub.f32 %v1759, %v1771
  %v1792 = vsub.f32 %v1760, %v1774
  %v1793 = vsub.f32 %v1761, %v1777
  %v1794 = vsub.f32 %v1762, %v1780
  %v1795 = vsub.f32 %v1763, %v1783
  %v1796 = vsub.f32 %v1764, %v1786
  %v1797 = vsub.f32 %v1765, %v1789
  %v1798 = vmul.f32 %v1790, 1.442695
  %v1799 = vpow.pop %v1798
  %v1800 = vmul.f32 %v1791, 1.442695
  %v1801 = vpow.pop %v1800
  %v1802 = vmul.f32 %v1792, 1.442695
  %v1803 = vpow.pop %v1802
  %v1804 = vmul.f32 %v1793, 1.442695
  %v1805 = vpow.pop %v1804
  %v1806 = vmul.f32 %v1794, 1.442695
  %v1807 = vpow.pop %v1806
  %v1808 = vmul.f32 %v1795, 1.442695
  %v1809 = vpow.pop %v1808
  %v1810 = vmul.f32 %v1796, 1.442695
  %v1811 = vpow.pop %v1810
  %v1812 = vmul.f32 %v1797, 1.442695
  %v1813 = vpow.pop %v1812
  %v1814 = vsel %vm387, %v1799, 0.0
  %1815 = vadd.xlane.f32.xlu0 %v1814
  %v1816 = vpop.xlane.xlu0 %1815
  %v1817 = vsel %vm387, %v1801, 0.0
  %1818 = vadd.xlane.f32.xlu0 %v1817
  %v1819 = vpop.xlane.xlu0 %1818
  %v1820 = vsel %vm387, %v1803, 0.0
  %1821 = vadd.xlane.f32.xlu0 %v1820
  %v1822 = vpop.xlane.xlu0 %1821
  %v1823 = vsel %vm387, %v1805, 0.0
  %1824 = vadd.xlane.f32.xlu0 %v1823
  %v1825 = vpop.xlane.xlu0 %1824
  %v1826 = vsel %vm387, %v1807, 0.0
  %1827 = vadd.xlane.f32.xlu0 %v1826
  %v1828 = vpop.xlane.xlu0 %1827
  %v1829 = vsel %vm387, %v1809, 0.0
  %1830 = vadd.xlane.f32.xlu0 %v1829
  %v1831 = vpop.xlane.xlu0 %1830
  %v1832 = vsel %vm387, %v1811, 0.0
  %1833 = vadd.xlane.f32.xlu0 %v1832
  %v1834 = vpop.xlane.xlu0 %1833
  %v1835 = vsel %vm387, %v1813, 0.0
  %1836 = vadd.xlane.f32.xlu0 %v1835
  %v1837 = vpop.xlane.xlu0 %1836
  %v1838 = vrcp.pop %v1816
  %v1839 = vrcp.pop %v1819
  %v1840 = vrcp.pop %v1822
  %v1841 = vrcp.pop %v1825
  %v1842 = vrcp.pop %v1828
  %v1843 = vrcp.pop %v1831
  %v1844 = vrcp.pop %v1834
  %v1845 = vrcp.pop %v1837
  %v1846 = vmul.f32 %v1799, %v1838
  %v1847 = vmul.f32 %v1801, %v1839
  %v1848 = vmul.f32 %v1803, %v1840
  %v1849 = vmul.f32 %v1805, %v1841
  %v1850 = vmul.f32 %v1807, %v1842
  %v1851 = vmul.f32 %v1809, %v1843
  %v1852 = vmul.f32 %v1811, %v1844
  %v1853 = vmul.f32 %v1813, %v1845
  %v1854 = vpack.c.bf16 %v1847, %v1846
  %v1855 = vpack.c.bf16 %v1849, %v1848
  %v1856 = vpack.c.bf16 %v1851, %v1850
  %v1857 = vpack.c.bf16 %v1853, %v1852
  %v1866 = vunpack.c.l.b16 %v1677
  %v1867 = vunpack.c.l.b16 %v1678
  %v1868 = vunpack.c.l.b16 %v1679
  %v1869 = vunpack.c.l.b16 %v1680
  %v1870 = vunpack.c.l.b16 %v1681
  %v1871 = vunpack.c.l.b16 %v1682
  %v1872 = vunpack.c.l.b16 %v1683
  %v1873 = vunpack.c.l.b16 %v1684
  %v1874 = vpack.c.b16 %v1867, %v1866
  %v1875 = vpack.c.b16 %v1869, %v1868
  %v1876 = vpack.c.b16 %v1871, %v1870
  %v1877 = vpack.c.b16 %v1873, %v1872
  %v1883 = vsel %vm387, %v1854, 0
  %v1886 = vsel %vm387, %v1855, 0
  %v1889 = vsel %vm387, %v1856, 0
  %v1892 = vsel %vm387, %v1857, 0
  %1894 = vmatpush.bf16.msra.mxu0 0
  %1895 = vmatpush.bf16.msra.mxu0 0
  %1896 = vmatpush.bf16.msra.mxu0 0
  %1897 = vmatpush.bf16.msra.mxu0 0
  %1898 = vmatpush.bf16.msra.mxu0 %v1877
  %1899 = vmatpush.bf16.msra.mxu0 %v1876
  %1900 = vmatpush.bf16.msra.mxu0 %v1875
  %1901 = vmatpush.bf16.msra.mxu0 %v1874
  %1902 = vmatmul.bf16.gmra.mxu0 %v1883
  %v1903 = vpop.f32.mrf.mxu0
  %v1904 = vadd.f32 0.0, %v1903
  %v1905 = vpop.f32.mrf.mxu0
  %v1906 = vadd.f32 0.0, %v1905
  %1907 = vmatmul.bf16.gmra.mxu0 %v1886
  %v1908 = vpop.f32.mrf.mxu0
  %v1909 = vadd.f32 0.0, %v1908
  %v1910 = vpop.f32.mrf.mxu0
  %v1911 = vadd.f32 0.0, %v1910
  %1912 = vmatmul.bf16.gmra.mxu0 %v1889
  %v1913 = vpop.f32.mrf.mxu0
  %v1914 = vadd.f32 0.0, %v1913
  %v1915 = vpop.f32.mrf.mxu0
  %v1916 = vadd.f32 0.0, %v1915
  %1917 = vmatmul.bf16.gmra.mxu0 %v1892
  %v1918 = vpop.f32.mrf.mxu0
  %v1919 = vadd.f32 0.0, %v1918
  %v1920 = vpop.f32.mrf.mxu0
  %v1921 = vadd.f32 0.0, %v1920
  %1922 = vdwg.mxu0
  %1923 = vset.pattern.permute.xlu0 1
  %1924 = vperm.xlu0 %1923, %v1654
  %v1925 = vpop.permute.xlu0 %1924
  %1927 = vset.pattern.permute.xlu0 1
  %1928 = vperm.xlu0 %1927, %v1657
  %v1929 = vpop.permute.xlu0 %1928
  %1931 = vset.pattern.permute.xlu0 1
  %1932 = vperm.xlu0 %1931, %v1660
  %v1933 = vpop.permute.xlu0 %1932
  %1935 = vset.pattern.permute.xlu0 1
  %1936 = vperm.xlu0 %1935, %v1663
  %v1937 = vpop.permute.xlu0 %1936
  %1939 = vset.pattern.permute.xlu0 1
  %1940 = vperm.xlu0 %1939, %v1666
  %v1941 = vpop.permute.xlu0 %1940
  %1943 = vset.pattern.permute.xlu0 1
  %1944 = vperm.xlu0 %1943, %v1669
  %v1945 = vpop.permute.xlu0 %1944
  %1947 = vset.pattern.permute.xlu0 1
  %1948 = vperm.xlu0 %1947, %v1672
  %v1949 = vpop.permute.xlu0 %1948
  %1951 = vset.pattern.permute.xlu0 1
  %1952 = vperm.xlu0 %1951, %v1675
  %v1953 = vpop.permute.xlu0 %1952
  %v1955 = vperm.slane %v1587, 1
  %v1956 = vadd.f32 %v1925, %v1955
  %v1957 = vadd.f32 %v1929, %v1955
  %v1958 = vadd.f32 %v1933, %v1955
  %v1959 = vadd.f32 %v1937, %v1955
  %v1960 = vadd.f32 %v1941, %v1955
  %v1961 = vadd.f32 %v1945, %v1955
  %v1962 = vadd.f32 %v1949, %v1955
  %v1963 = vadd.f32 %v1953, %v1955
  %vm1964 = vcmp.gt.f32.partialorder %v1956, 0.0
  %vm1965 = vcmp.gt.f32.partialorder %v1957, 0.0
  %vm1966 = vcmp.gt.f32.partialorder %v1958, 0.0
  %vm1967 = vcmp.gt.f32.partialorder %v1959, 0.0
  %vm1968 = vcmp.gt.f32.partialorder %v1960, 0.0
  %vm1969 = vcmp.gt.f32.partialorder %v1961, 0.0
  %vm1970 = vcmp.gt.f32.partialorder %v1962, 0.0
  %vm1971 = vcmp.gt.f32.partialorder %v1963, 0.0
  %v1972 = vmul.f32 %v1956, 0.2
  %v1973 = vmul.f32 %v1957, 0.2
  %v1974 = vmul.f32 %v1958, 0.2
  %v1975 = vmul.f32 %v1959, 0.2
  %v1976 = vmul.f32 %v1960, 0.2
  %v1977 = vmul.f32 %v1961, 0.2
  %v1978 = vmul.f32 %v1962, 0.2
  %v1979 = vmul.f32 %v1963, 0.2
  %v1980 = vsel %vm1964, %v1956, %v1972
  %v1981 = vsel %vm1965, %v1957, %v1973
  %v1982 = vsel %vm1966, %v1958, %v1974
  %v1983 = vsel %vm1967, %v1959, %v1975
  %v1984 = vsel %vm1968, %v1960, %v1976
  %v1985 = vsel %vm1969, %v1961, %v1977
  %v1986 = vsel %vm1970, %v1962, %v1978
  %v1987 = vsel %vm1971, %v1963, %v1979
  %v1988 = vsel %vm290, %v1980, -1e+30
  %v1989 = vsel %vm291, %v1981, -1e+30
  %v1990 = vsel %vm292, %v1982, -1e+30
  %v1991 = vsel %vm293, %v1983, -1e+30
  %v1992 = vsel %vm294, %v1984, -1e+30
  %v1993 = vsel %vm295, %v1985, -1e+30
  %v1994 = vsel %vm296, %v1986, -1e+30
  %v1995 = vsel %vm297, %v1987, -1e+30
  %v1996 = vsel %vm387, %v1988, -inf
  %1997 = vmax.xlane.f32.xlu0 %v1996
  %v1998 = vpop.xlane.xlu0 %1997
  %v1999 = vsel %vm387, %v1989, -inf
  %2000 = vmax.xlane.f32.xlu0 %v1999
  %v2001 = vpop.xlane.xlu0 %2000
  %v2002 = vsel %vm387, %v1990, -inf
  %2003 = vmax.xlane.f32.xlu0 %v2002
  %v2004 = vpop.xlane.xlu0 %2003
  %v2005 = vsel %vm387, %v1991, -inf
  %2006 = vmax.xlane.f32.xlu0 %v2005
  %v2007 = vpop.xlane.xlu0 %2006
  %v2008 = vsel %vm387, %v1992, -inf
  %2009 = vmax.xlane.f32.xlu0 %v2008
  %v2010 = vpop.xlane.xlu0 %2009
  %v2011 = vsel %vm387, %v1993, -inf
  %2012 = vmax.xlane.f32.xlu0 %v2011
  %v2013 = vpop.xlane.xlu0 %2012
  %v2014 = vsel %vm387, %v1994, -inf
  %2015 = vmax.xlane.f32.xlu0 %v2014
  %v2016 = vpop.xlane.xlu0 %2015
  %v2017 = vsel %vm387, %v1995, -inf
  %2018 = vmax.xlane.f32.xlu0 %v2017
  %v2019 = vpop.xlane.xlu0 %2018
  %v2020 = vsub.f32 %v1988, %v1998
  %v2021 = vsub.f32 %v1989, %v2001
  %v2022 = vsub.f32 %v1990, %v2004
  %v2023 = vsub.f32 %v1991, %v2007
  %v2024 = vsub.f32 %v1992, %v2010
  %v2025 = vsub.f32 %v1993, %v2013
  %v2026 = vsub.f32 %v1994, %v2016
  %v2027 = vsub.f32 %v1995, %v2019
  %v2028 = vmul.f32 %v2020, 1.442695
  %v2029 = vpow.pop %v2028
  %v2030 = vmul.f32 %v2021, 1.442695
  %v2031 = vpow.pop %v2030
  %v2032 = vmul.f32 %v2022, 1.442695
  %v2033 = vpow.pop %v2032
  %v2034 = vmul.f32 %v2023, 1.442695
  %v2035 = vpow.pop %v2034
  %v2036 = vmul.f32 %v2024, 1.442695
  %v2037 = vpow.pop %v2036
  %v2038 = vmul.f32 %v2025, 1.442695
  %v2039 = vpow.pop %v2038
  %v2040 = vmul.f32 %v2026, 1.442695
  %v2041 = vpow.pop %v2040
  %v2042 = vmul.f32 %v2027, 1.442695
  %v2043 = vpow.pop %v2042
  %v2044 = vsel %vm387, %v2029, 0.0
  %2045 = vadd.xlane.f32.xlu0 %v2044
  %v2046 = vpop.xlane.xlu0 %2045
  %v2047 = vsel %vm387, %v2031, 0.0
  %2048 = vadd.xlane.f32.xlu0 %v2047
  %v2049 = vpop.xlane.xlu0 %2048
  %v2050 = vsel %vm387, %v2033, 0.0
  %2051 = vadd.xlane.f32.xlu0 %v2050
  %v2052 = vpop.xlane.xlu0 %2051
  %v2053 = vsel %vm387, %v2035, 0.0
  %2054 = vadd.xlane.f32.xlu0 %v2053
  %v2055 = vpop.xlane.xlu0 %2054
  %v2056 = vsel %vm387, %v2037, 0.0
  %2057 = vadd.xlane.f32.xlu0 %v2056
  %v2058 = vpop.xlane.xlu0 %2057
  %v2059 = vsel %vm387, %v2039, 0.0
  %2060 = vadd.xlane.f32.xlu0 %v2059
  %v2061 = vpop.xlane.xlu0 %2060
  %v2062 = vsel %vm387, %v2041, 0.0
  %2063 = vadd.xlane.f32.xlu0 %v2062
  %v2064 = vpop.xlane.xlu0 %2063
  %v2065 = vsel %vm387, %v2043, 0.0
  %2066 = vadd.xlane.f32.xlu0 %v2065
  %v2067 = vpop.xlane.xlu0 %2066
  %v2068 = vrcp.pop %v2046
  %v2069 = vrcp.pop %v2049
  %v2070 = vrcp.pop %v2052
  %v2071 = vrcp.pop %v2055
  %v2072 = vrcp.pop %v2058
  %v2073 = vrcp.pop %v2061
  %v2074 = vrcp.pop %v2064
  %v2075 = vrcp.pop %v2067
  %v2076 = vmul.f32 %v2029, %v2068
  %v2077 = vmul.f32 %v2031, %v2069
  %v2078 = vmul.f32 %v2033, %v2070
  %v2079 = vmul.f32 %v2035, %v2071
  %v2080 = vmul.f32 %v2037, %v2072
  %v2081 = vmul.f32 %v2039, %v2073
  %v2082 = vmul.f32 %v2041, %v2074
  %v2083 = vmul.f32 %v2043, %v2075
  %v2084 = vpack.c.bf16 %v2077, %v2076
  %v2085 = vpack.c.bf16 %v2079, %v2078
  %v2086 = vpack.c.bf16 %v2081, %v2080
  %v2087 = vpack.c.bf16 %v2083, %v2082
  %2088 = vrot.lane.b32.xlu0 %v1874, 64
  %v2089 = vpop.permute.xlu0 %2088
  %2090 = vrot.lane.b32.xlu0 %v1875, 64
  %v2091 = vpop.permute.xlu0 %2090
  %2092 = vrot.lane.b32.xlu0 %v1876, 64
  %v2093 = vpop.permute.xlu0 %2092
  %2094 = vrot.lane.b32.xlu0 %v1877, 64
  %v2095 = vpop.permute.xlu0 %2094
  %v2101 = vsel %vm387, %v2084, 0
  %v2104 = vsel %vm387, %v2085, 0
  %v2107 = vsel %vm387, %v2086, 0
  %v2110 = vsel %vm387, %v2087, 0
  %2112 = vmatpush.bf16.msra.mxu0 0
  %2113 = vmatpush.bf16.msra.mxu0 0
  %2114 = vmatpush.bf16.msra.mxu0 0
  %2115 = vmatpush.bf16.msra.mxu0 0
  %2116 = vmatpush.bf16.msra.mxu0 %v2095
  %2117 = vmatpush.bf16.msra.mxu0 %v2093
  %2118 = vmatpush.bf16.msra.mxu0 %v2091
  %2119 = vmatpush.bf16.msra.mxu0 %v2089
  %2120 = vmatmul.bf16.gmra.mxu0 %v2101
  %v2121 = vpop.f32.mrf.mxu0
  %v2122 = vadd.f32 0.0, %v2121
  %v2123 = vpop.f32.mrf.mxu0
  %v2124 = vadd.f32 0.0, %v2123
  %2125 = vmatmul.bf16.gmra.mxu0 %v2104
  %v2126 = vpop.f32.mrf.mxu0
  %v2127 = vadd.f32 0.0, %v2126
  %v2128 = vpop.f32.mrf.mxu0
  %v2129 = vadd.f32 0.0, %v2128
  %2130 = vmatmul.bf16.gmra.mxu0 %v2107
  %v2131 = vpop.f32.mrf.mxu0
  %v2132 = vadd.f32 0.0, %v2131
  %v2133 = vpop.f32.mrf.mxu0
  %v2134 = vadd.f32 0.0, %v2133
  %2135 = vmatmul.bf16.gmra.mxu0 %v2110
  %v2136 = vpop.f32.mrf.mxu0
  %v2137 = vadd.f32 0.0, %v2136
  %v2138 = vpop.f32.mrf.mxu0
  %v2139 = vadd.f32 0.0, %v2138
  %2140 = vdwg.mxu0
  %2141 = vset.pattern.permute.xlu0 2
  %2142 = vperm.xlu0 %2141, %v1654
  %v2143 = vpop.permute.xlu0 %2142
  %2145 = vset.pattern.permute.xlu0 2
  %2146 = vperm.xlu0 %2145, %v1657
  %v2147 = vpop.permute.xlu0 %2146
  %2149 = vset.pattern.permute.xlu0 2
  %2150 = vperm.xlu0 %2149, %v1660
  %v2151 = vpop.permute.xlu0 %2150
  %2153 = vset.pattern.permute.xlu0 2
  %2154 = vperm.xlu0 %2153, %v1663
  %v2155 = vpop.permute.xlu0 %2154
  %2157 = vset.pattern.permute.xlu0 2
  %2158 = vperm.xlu0 %2157, %v1666
  %v2159 = vpop.permute.xlu0 %2158
  %2161 = vset.pattern.permute.xlu0 2
  %2162 = vperm.xlu0 %2161, %v1669
  %v2163 = vpop.permute.xlu0 %2162
  %2165 = vset.pattern.permute.xlu0 2
  %2166 = vperm.xlu0 %2165, %v1672
  %v2167 = vpop.permute.xlu0 %2166
  %2169 = vset.pattern.permute.xlu0 2
  %2170 = vperm.xlu0 %2169, %v1675
  %v2171 = vpop.permute.xlu0 %2170
  %v2173 = vperm.slane %v1587, 2
  %v2174 = vadd.f32 %v2143, %v2173
  %v2175 = vadd.f32 %v2147, %v2173
  %v2176 = vadd.f32 %v2151, %v2173
  %v2177 = vadd.f32 %v2155, %v2173
  %v2178 = vadd.f32 %v2159, %v2173
  %v2179 = vadd.f32 %v2163, %v2173
  %v2180 = vadd.f32 %v2167, %v2173
  %v2181 = vadd.f32 %v2171, %v2173
  %vm2182 = vcmp.gt.f32.partialorder %v2174, 0.0
  %vm2183 = vcmp.gt.f32.partialorder %v2175, 0.0
  %vm2184 = vcmp.gt.f32.partialorder %v2176, 0.0
  %vm2185 = vcmp.gt.f32.partialorder %v2177, 0.0
  %vm2186 = vcmp.gt.f32.partialorder %v2178, 0.0
  %vm2187 = vcmp.gt.f32.partialorder %v2179, 0.0
  %vm2188 = vcmp.gt.f32.partialorder %v2180, 0.0
  %vm2189 = vcmp.gt.f32.partialorder %v2181, 0.0
  %v2190 = vmul.f32 %v2174, 0.2
  %v2191 = vmul.f32 %v2175, 0.2
  %v2192 = vmul.f32 %v2176, 0.2
  %v2193 = vmul.f32 %v2177, 0.2
  %v2194 = vmul.f32 %v2178, 0.2
  %v2195 = vmul.f32 %v2179, 0.2
  %v2196 = vmul.f32 %v2180, 0.2
  %v2197 = vmul.f32 %v2181, 0.2
  %v2198 = vsel %vm2182, %v2174, %v2190
  %v2199 = vsel %vm2183, %v2175, %v2191
  %v2200 = vsel %vm2184, %v2176, %v2192
  %v2201 = vsel %vm2185, %v2177, %v2193
  %v2202 = vsel %vm2186, %v2178, %v2194
  %v2203 = vsel %vm2187, %v2179, %v2195
  %v2204 = vsel %vm2188, %v2180, %v2196
  %v2205 = vsel %vm2189, %v2181, %v2197
  %v2206 = vsel %vm290, %v2198, -1e+30
  %v2207 = vsel %vm291, %v2199, -1e+30
  %v2208 = vsel %vm292, %v2200, -1e+30
  %v2209 = vsel %vm293, %v2201, -1e+30
  %v2210 = vsel %vm294, %v2202, -1e+30
  %v2211 = vsel %vm295, %v2203, -1e+30
  %v2212 = vsel %vm296, %v2204, -1e+30
  %v2213 = vsel %vm297, %v2205, -1e+30
  %v2214 = vsel %vm387, %v2206, -inf
  %2215 = vmax.xlane.f32.xlu0 %v2214
  %v2216 = vpop.xlane.xlu0 %2215
  %v2217 = vsel %vm387, %v2207, -inf
  %2218 = vmax.xlane.f32.xlu0 %v2217
  %v2219 = vpop.xlane.xlu0 %2218
  %v2220 = vsel %vm387, %v2208, -inf
  %2221 = vmax.xlane.f32.xlu0 %v2220
  %v2222 = vpop.xlane.xlu0 %2221
  %v2223 = vsel %vm387, %v2209, -inf
  %2224 = vmax.xlane.f32.xlu0 %v2223
  %v2225 = vpop.xlane.xlu0 %2224
  %v2226 = vsel %vm387, %v2210, -inf
  %2227 = vmax.xlane.f32.xlu0 %v2226
  %v2228 = vpop.xlane.xlu0 %2227
  %v2229 = vsel %vm387, %v2211, -inf
  %2230 = vmax.xlane.f32.xlu0 %v2229
  %v2231 = vpop.xlane.xlu0 %2230
  %v2232 = vsel %vm387, %v2212, -inf
  %2233 = vmax.xlane.f32.xlu0 %v2232
  %v2234 = vpop.xlane.xlu0 %2233
  %v2235 = vsel %vm387, %v2213, -inf
  %2236 = vmax.xlane.f32.xlu0 %v2235
  %v2237 = vpop.xlane.xlu0 %2236
  %v2238 = vsub.f32 %v2206, %v2216
  %v2239 = vsub.f32 %v2207, %v2219
  %v2240 = vsub.f32 %v2208, %v2222
  %v2241 = vsub.f32 %v2209, %v2225
  %v2242 = vsub.f32 %v2210, %v2228
  %v2243 = vsub.f32 %v2211, %v2231
  %v2244 = vsub.f32 %v2212, %v2234
  %v2245 = vsub.f32 %v2213, %v2237
  %v2246 = vmul.f32 %v2238, 1.442695
  %v2247 = vpow.pop %v2246
  %v2248 = vmul.f32 %v2239, 1.442695
  %v2249 = vpow.pop %v2248
  %v2250 = vmul.f32 %v2240, 1.442695
  %v2251 = vpow.pop %v2250
  %v2252 = vmul.f32 %v2241, 1.442695
  %v2253 = vpow.pop %v2252
  %v2254 = vmul.f32 %v2242, 1.442695
  %v2255 = vpow.pop %v2254
  %v2256 = vmul.f32 %v2243, 1.442695
  %v2257 = vpow.pop %v2256
  %v2258 = vmul.f32 %v2244, 1.442695
  %v2259 = vpow.pop %v2258
  %v2260 = vmul.f32 %v2245, 1.442695
  %v2261 = vpow.pop %v2260
  %v2262 = vsel %vm387, %v2247, 0.0
  %2263 = vadd.xlane.f32.xlu0 %v2262
  %v2264 = vpop.xlane.xlu0 %2263
  %v2265 = vsel %vm387, %v2249, 0.0
  %2266 = vadd.xlane.f32.xlu0 %v2265
  %v2267 = vpop.xlane.xlu0 %2266
  %v2268 = vsel %vm387, %v2251, 0.0
  %2269 = vadd.xlane.f32.xlu0 %v2268
  %v2270 = vpop.xlane.xlu0 %2269
  %v2271 = vsel %vm387, %v2253, 0.0
  %2272 = vadd.xlane.f32.xlu0 %v2271
  %v2273 = vpop.xlane.xlu0 %2272
  %v2274 = vsel %vm387, %v2255, 0.0
  %2275 = vadd.xlane.f32.xlu0 %v2274
  %v2276 = vpop.xlane.xlu0 %2275
  %v2277 = vsel %vm387, %v2257, 0.0
  %2278 = vadd.xlane.f32.xlu0 %v2277
  %v2279 = vpop.xlane.xlu0 %2278
  %v2280 = vsel %vm387, %v2259, 0.0
  %2281 = vadd.xlane.f32.xlu0 %v2280
  %v2282 = vpop.xlane.xlu0 %2281
  %v2283 = vsel %vm387, %v2261, 0.0
  %2284 = vadd.xlane.f32.xlu0 %v2283
  %v2285 = vpop.xlane.xlu0 %2284
  %v2286 = vrcp.pop %v2264
  %v2287 = vrcp.pop %v2267
  %v2288 = vrcp.pop %v2270
  %v2289 = vrcp.pop %v2273
  %v2290 = vrcp.pop %v2276
  %v2291 = vrcp.pop %v2279
  %v2292 = vrcp.pop %v2282
  %v2293 = vrcp.pop %v2285
  %v2294 = vmul.f32 %v2247, %v2286
  %v2295 = vmul.f32 %v2249, %v2287
  %v2296 = vmul.f32 %v2251, %v2288
  %v2297 = vmul.f32 %v2253, %v2289
  %v2298 = vmul.f32 %v2255, %v2290
  %v2299 = vmul.f32 %v2257, %v2291
  %v2300 = vmul.f32 %v2259, %v2292
  %v2301 = vmul.f32 %v2261, %v2293
  %v2302 = vpack.c.bf16 %v2295, %v2294
  %v2303 = vpack.c.bf16 %v2297, %v2296
  %v2304 = vpack.c.bf16 %v2299, %v2298
  %v2305 = vpack.c.bf16 %v2301, %v2300
  %v2306 = vunpack.c.h.b16 %v1677
  %v2307 = vunpack.c.h.b16 %v1678
  %v2308 = vunpack.c.h.b16 %v1679
  %v2309 = vunpack.c.h.b16 %v1680
  %v2310 = vunpack.c.h.b16 %v1681
  %v2311 = vunpack.c.h.b16 %v1682
  %v2312 = vunpack.c.h.b16 %v1683
  %v2313 = vunpack.c.h.b16 %v1684
  %v2314 = vpack.c.b16 %v2307, %v2306
  %v2315 = vpack.c.b16 %v2309, %v2308
  %v2316 = vpack.c.b16 %v2311, %v2310
  %v2317 = vpack.c.b16 %v2313, %v2312
  %v2323 = vsel %vm387, %v2302, 0
  %v2326 = vsel %vm387, %v2303, 0
  %v2329 = vsel %vm387, %v2304, 0
  %v2332 = vsel %vm387, %v2305, 0
  %2334 = vmatpush.bf16.msra.mxu0 0
  %2335 = vmatpush.bf16.msra.mxu0 0
  %2336 = vmatpush.bf16.msra.mxu0 0
  %2337 = vmatpush.bf16.msra.mxu0 0
  %2338 = vmatpush.bf16.msra.mxu0 %v2317
  %2339 = vmatpush.bf16.msra.mxu0 %v2316
  %2340 = vmatpush.bf16.msra.mxu0 %v2315
  %2341 = vmatpush.bf16.msra.mxu0 %v2314
  %2342 = vmatmul.bf16.gmra.mxu0 %v2323
  %v2343 = vpop.f32.mrf.mxu0
  %v2344 = vadd.f32 0.0, %v2343
  %v2345 = vpop.f32.mrf.mxu0
  %v2346 = vadd.f32 0.0, %v2345
  %2347 = vmatmul.bf16.gmra.mxu0 %v2326
  %v2348 = vpop.f32.mrf.mxu0
  %v2349 = vadd.f32 0.0, %v2348
  %v2350 = vpop.f32.mrf.mxu0
  %v2351 = vadd.f32 0.0, %v2350
  %2352 = vmatmul.bf16.gmra.mxu0 %v2329
  %v2353 = vpop.f32.mrf.mxu0
  %v2354 = vadd.f32 0.0, %v2353
  %v2355 = vpop.f32.mrf.mxu0
  %v2356 = vadd.f32 0.0, %v2355
  %2357 = vmatmul.bf16.gmra.mxu0 %v2332
  %v2358 = vpop.f32.mrf.mxu0
  %v2359 = vadd.f32 0.0, %v2358
  %v2360 = vpop.f32.mrf.mxu0
  %v2361 = vadd.f32 0.0, %v2360
  %2362 = vdwg.mxu0
  %2363 = vset.pattern.permute.xlu0 3
  %2364 = vperm.xlu0 %2363, %v1654
  %v2365 = vpop.permute.xlu0 %2364
  %2367 = vset.pattern.permute.xlu0 3
  %2368 = vperm.xlu0 %2367, %v1657
  %v2369 = vpop.permute.xlu0 %2368
  %2371 = vset.pattern.permute.xlu0 3
  %2372 = vperm.xlu0 %2371, %v1660
  %v2373 = vpop.permute.xlu0 %2372
  %2375 = vset.pattern.permute.xlu0 3
  %2376 = vperm.xlu0 %2375, %v1663
  %v2377 = vpop.permute.xlu0 %2376
  %2379 = vset.pattern.permute.xlu0 3
  %2380 = vperm.xlu0 %2379, %v1666
  %v2381 = vpop.permute.xlu0 %2380
  %2383 = vset.pattern.permute.xlu0 3
  %2384 = vperm.xlu0 %2383, %v1669
  %v2385 = vpop.permute.xlu0 %2384
  %2387 = vset.pattern.permute.xlu0 3
  %2388 = vperm.xlu0 %2387, %v1672
  %v2389 = vpop.permute.xlu0 %2388
  %2391 = vset.pattern.permute.xlu0 3
  %2392 = vperm.xlu0 %2391, %v1675
  %v2393 = vpop.permute.xlu0 %2392
  %v2395 = vperm.slane %v1587, 3
  %v2396 = vadd.f32 %v2365, %v2395
  %v2397 = vadd.f32 %v2369, %v2395
  %v2398 = vadd.f32 %v2373, %v2395
  %v2399 = vadd.f32 %v2377, %v2395
  %v2400 = vadd.f32 %v2381, %v2395
  %v2401 = vadd.f32 %v2385, %v2395
  %v2402 = vadd.f32 %v2389, %v2395
  %v2403 = vadd.f32 %v2393, %v2395
  %vm2404 = vcmp.gt.f32.partialorder %v2396, 0.0
  %vm2405 = vcmp.gt.f32.partialorder %v2397, 0.0
  %vm2406 = vcmp.gt.f32.partialorder %v2398, 0.0
  %vm2407 = vcmp.gt.f32.partialorder %v2399, 0.0
  %vm2408 = vcmp.gt.f32.partialorder %v2400, 0.0
  %vm2409 = vcmp.gt.f32.partialorder %v2401, 0.0
  %vm2410 = vcmp.gt.f32.partialorder %v2402, 0.0
  %vm2411 = vcmp.gt.f32.partialorder %v2403, 0.0
  %v2412 = vmul.f32 %v2396, 0.2
  %v2413 = vmul.f32 %v2397, 0.2
  %v2414 = vmul.f32 %v2398, 0.2
  %v2415 = vmul.f32 %v2399, 0.2
  %v2416 = vmul.f32 %v2400, 0.2
  %v2417 = vmul.f32 %v2401, 0.2
  %v2418 = vmul.f32 %v2402, 0.2
  %v2419 = vmul.f32 %v2403, 0.2
  %v2420 = vsel %vm2404, %v2396, %v2412
  %v2421 = vsel %vm2405, %v2397, %v2413
  %v2422 = vsel %vm2406, %v2398, %v2414
  %v2423 = vsel %vm2407, %v2399, %v2415
  %v2424 = vsel %vm2408, %v2400, %v2416
  %v2425 = vsel %vm2409, %v2401, %v2417
  %v2426 = vsel %vm2410, %v2402, %v2418
  %v2427 = vsel %vm2411, %v2403, %v2419
  %v2428 = vsel %vm290, %v2420, -1e+30
  %v2429 = vsel %vm291, %v2421, -1e+30
  %v2430 = vsel %vm292, %v2422, -1e+30
  %v2431 = vsel %vm293, %v2423, -1e+30
  %v2432 = vsel %vm294, %v2424, -1e+30
  %v2433 = vsel %vm295, %v2425, -1e+30
  %v2434 = vsel %vm296, %v2426, -1e+30
  %v2435 = vsel %vm297, %v2427, -1e+30
  %v2436 = vsel %vm387, %v2428, -inf
  %2437 = vmax.xlane.f32.xlu0 %v2436
  %v2438 = vpop.xlane.xlu0 %2437
  %v2439 = vsel %vm387, %v2429, -inf
  %2440 = vmax.xlane.f32.xlu0 %v2439
  %v2441 = vpop.xlane.xlu0 %2440
  %v2442 = vsel %vm387, %v2430, -inf
  %2443 = vmax.xlane.f32.xlu0 %v2442
  %v2444 = vpop.xlane.xlu0 %2443
  %v2445 = vsel %vm387, %v2431, -inf
  %2446 = vmax.xlane.f32.xlu0 %v2445
  %v2447 = vpop.xlane.xlu0 %2446
  %v2448 = vsel %vm387, %v2432, -inf
  %2449 = vmax.xlane.f32.xlu0 %v2448
  %v2450 = vpop.xlane.xlu0 %2449
  %v2451 = vsel %vm387, %v2433, -inf
  %2452 = vmax.xlane.f32.xlu0 %v2451
  %v2453 = vpop.xlane.xlu0 %2452
  %v2454 = vsel %vm387, %v2434, -inf
  %2455 = vmax.xlane.f32.xlu0 %v2454
  %v2456 = vpop.xlane.xlu0 %2455
  %v2457 = vsel %vm387, %v2435, -inf
  %2458 = vmax.xlane.f32.xlu0 %v2457
  %v2459 = vpop.xlane.xlu0 %2458
  %v2460 = vsub.f32 %v2428, %v2438
  %v2461 = vsub.f32 %v2429, %v2441
  %v2462 = vsub.f32 %v2430, %v2444
  %v2463 = vsub.f32 %v2431, %v2447
  %v2464 = vsub.f32 %v2432, %v2450
  %v2465 = vsub.f32 %v2433, %v2453
  %v2466 = vsub.f32 %v2434, %v2456
  %v2467 = vsub.f32 %v2435, %v2459
  %v2468 = vmul.f32 %v2460, 1.442695
  %v2469 = vpow.pop %v2468
  %v2470 = vmul.f32 %v2461, 1.442695
  %v2471 = vpow.pop %v2470
  %v2472 = vmul.f32 %v2462, 1.442695
  %v2473 = vpow.pop %v2472
  %v2474 = vmul.f32 %v2463, 1.442695
  %v2475 = vpow.pop %v2474
  %v2476 = vmul.f32 %v2464, 1.442695
  %v2477 = vpow.pop %v2476
  %v2478 = vmul.f32 %v2465, 1.442695
  %v2479 = vpow.pop %v2478
  %v2480 = vmul.f32 %v2466, 1.442695
  %v2481 = vpow.pop %v2480
  %v2482 = vmul.f32 %v2467, 1.442695
  %v2483 = vpow.pop %v2482
  %v2484 = vsel %vm387, %v2469, 0.0
  %2485 = vadd.xlane.f32.xlu0 %v2484
  %v2486 = vpop.xlane.xlu0 %2485
  %v2487 = vsel %vm387, %v2471, 0.0
  %2488 = vadd.xlane.f32.xlu0 %v2487
  %v2489 = vpop.xlane.xlu0 %2488
  %v2490 = vsel %vm387, %v2473, 0.0
  %2491 = vadd.xlane.f32.xlu0 %v2490
  %v2492 = vpop.xlane.xlu0 %2491
  %v2493 = vsel %vm387, %v2475, 0.0
  %2494 = vadd.xlane.f32.xlu0 %v2493
  %v2495 = vpop.xlane.xlu0 %2494
  %v2496 = vsel %vm387, %v2477, 0.0
  %2497 = vadd.xlane.f32.xlu0 %v2496
  %v2498 = vpop.xlane.xlu0 %2497
  %v2499 = vsel %vm387, %v2479, 0.0
  %2500 = vadd.xlane.f32.xlu0 %v2499
  %v2501 = vpop.xlane.xlu0 %2500
  %v2502 = vsel %vm387, %v2481, 0.0
  %2503 = vadd.xlane.f32.xlu0 %v2502
  %v2504 = vpop.xlane.xlu0 %2503
  %v2505 = vsel %vm387, %v2483, 0.0
  %2506 = vadd.xlane.f32.xlu0 %v2505
  %v2507 = vpop.xlane.xlu0 %2506
  %v2508 = vrcp.pop %v2486
  %v2509 = vrcp.pop %v2489
  %v2510 = vrcp.pop %v2492
  %v2511 = vrcp.pop %v2495
  %v2512 = vrcp.pop %v2498
  %v2513 = vrcp.pop %v2501
  %v2514 = vrcp.pop %v2504
  %v2515 = vrcp.pop %v2507
  %v2516 = vmul.f32 %v2469, %v2508
  %v2517 = vmul.f32 %v2471, %v2509
  %v2518 = vmul.f32 %v2473, %v2510
  %v2519 = vmul.f32 %v2475, %v2511
  %v2520 = vmul.f32 %v2477, %v2512
  %v2521 = vmul.f32 %v2479, %v2513
  %v2522 = vmul.f32 %v2481, %v2514
  %v2523 = vmul.f32 %v2483, %v2515
  %v2524 = vpack.c.bf16 %v2517, %v2516
  %v2525 = vpack.c.bf16 %v2519, %v2518
  %v2526 = vpack.c.bf16 %v2521, %v2520
  %v2527 = vpack.c.bf16 %v2523, %v2522
  %2528 = vrot.lane.b32.xlu0 %v2314, 64
  %v2529 = vpop.permute.xlu0 %2528
  %2530 = vrot.lane.b32.xlu0 %v2315, 64
  %v2531 = vpop.permute.xlu0 %2530
  %2532 = vrot.lane.b32.xlu0 %v2316, 64
  %v2533 = vpop.permute.xlu0 %2532
  %2534 = vrot.lane.b32.xlu0 %v2317, 64
  %v2535 = vpop.permute.xlu0 %2534
  %v2541 = vsel %vm387, %v2524, 0
  %v2544 = vsel %vm387, %v2525, 0
  %v2547 = vsel %vm387, %v2526, 0
  %v2550 = vsel %vm387, %v2527, 0
  %2552 = vmatpush.bf16.msra.mxu0 0
  %2553 = vmatpush.bf16.msra.mxu0 0
  %2554 = vmatpush.bf16.msra.mxu0 0
  %2555 = vmatpush.bf16.msra.mxu0 0
  %2556 = vmatpush.bf16.msra.mxu0 %v2535
  %2557 = vmatpush.bf16.msra.mxu0 %v2533
  %2558 = vmatpush.bf16.msra.mxu0 %v2531
  %2559 = vmatpush.bf16.msra.mxu0 %v2529
  %2560 = vmatmul.bf16.gmra.mxu0 %v2541
  %v2561 = vpop.f32.mrf.mxu0
  %v2562 = vadd.f32 0.0, %v2561
  %v2563 = vpop.f32.mrf.mxu0
  %v2564 = vadd.f32 0.0, %v2563
  %2565 = vmatmul.bf16.gmra.mxu0 %v2544
  %v2566 = vpop.f32.mrf.mxu0
  %v2567 = vadd.f32 0.0, %v2566
  %v2568 = vpop.f32.mrf.mxu0
  %v2569 = vadd.f32 0.0, %v2568
  %2570 = vmatmul.bf16.gmra.mxu0 %v2547
  %v2571 = vpop.f32.mrf.mxu0
  %v2572 = vadd.f32 0.0, %v2571
  %v2573 = vpop.f32.mrf.mxu0
  %v2574 = vadd.f32 0.0, %v2573
  %2575 = vmatmul.bf16.gmra.mxu0 %v2550
  %v2576 = vpop.f32.mrf.mxu0
  %v2577 = vadd.f32 0.0, %v2576
  %v2578 = vpop.f32.mrf.mxu0
  %v2579 = vadd.f32 0.0, %v2578
  %2580 = vdwg.mxu0
  %2589 = vrot.lane.b32.xlu0 %v2122, 64
  %v2590 = vpop.permute.xlu0 %2589
  %2591 = vrot.lane.b32.xlu0 %v2124, 64
  %v2592 = vpop.permute.xlu0 %2591
  %2593 = vrot.lane.b32.xlu0 %v2127, 64
  %v2594 = vpop.permute.xlu0 %2593
  %2595 = vrot.lane.b32.xlu0 %v2129, 64
  %v2596 = vpop.permute.xlu0 %2595
  %2597 = vrot.lane.b32.xlu0 %v2132, 64
  %v2598 = vpop.permute.xlu0 %2597
  %2599 = vrot.lane.b32.xlu0 %v2134, 64
  %v2600 = vpop.permute.xlu0 %2599
  %2601 = vrot.lane.b32.xlu0 %v2137, 64
  %v2602 = vpop.permute.xlu0 %2601
  %2603 = vrot.lane.b32.xlu0 %v2139, 64
  %v2604 = vpop.permute.xlu0 %2603
  %2621 = vrot.lane.b32.xlu0 %v2562, 64
  %v2622 = vpop.permute.xlu0 %2621
  %2623 = vrot.lane.b32.xlu0 %v2564, 64
  %v2624 = vpop.permute.xlu0 %2623
  %2625 = vrot.lane.b32.xlu0 %v2567, 64
  %v2626 = vpop.permute.xlu0 %2625
  %2627 = vrot.lane.b32.xlu0 %v2569, 64
  %v2628 = vpop.permute.xlu0 %2627
  %2629 = vrot.lane.b32.xlu0 %v2572, 64
  %v2630 = vpop.permute.xlu0 %2629
  %2631 = vrot.lane.b32.xlu0 %v2574, 64
  %v2632 = vpop.permute.xlu0 %2631
  %2633 = vrot.lane.b32.xlu0 %v2577, 64
  %v2634 = vpop.permute.xlu0 %2633
  %2635 = vrot.lane.b32.xlu0 %v2579, 64
  %v2636 = vpop.permute.xlu0 %2635
  %v2645 = vsel %vm387, %v1904, %v2590
  %v2646 = vsel %vm387, %v1906, %v2592
  %v2647 = vsel %vm387, %v1909, %v2594
  %v2648 = vsel %vm387, %v1911, %v2596
  %v2649 = vsel %vm387, %v1914, %v2598
  %v2650 = vsel %vm387, %v1916, %v2600
  %v2651 = vsel %vm387, %v1919, %v2602
  %v2652 = vsel %vm387, %v1921, %v2604
  %v2653 = vsel %vm387, %v2344, %v2622
  %v2654 = vsel %vm387, %v2346, %v2624
  %v2655 = vsel %vm387, %v2349, %v2626
  %v2656 = vsel %vm387, %v2351, %v2628
  %v2657 = vsel %vm387, %v2354, %v2630
  %v2658 = vsel %vm387, %v2356, %v2632
  %v2659 = vsel %vm387, %v2359, %v2634
  %v2660 = vsel %vm387, %v2361, %v2636
  %v2662 = vperm.slane %v1542, 0
  %v2663 = vperm.slane %v1542, 1
  %v2666 = vadd.f32 %v2645, %v2662
  %v2667 = vadd.f32 %v2653, %v2663
  %v2668 = vadd.f32 %v2646, %v2662
  %v2669 = vadd.f32 %v2654, %v2663
  %v2670 = vadd.f32 %v2647, %v2662
  %v2671 = vadd.f32 %v2655, %v2663
  %v2672 = vadd.f32 %v2648, %v2662
  %v2673 = vadd.f32 %v2656, %v2663
  %v2674 = vadd.f32 %v2649, %v2662
  %v2675 = vadd.f32 %v2657, %v2663
  %v2676 = vadd.f32 %v2650, %v2662
  %v2677 = vadd.f32 %v2658, %v2663
  %v2678 = vadd.f32 %v2651, %v2662
  %v2679 = vadd.f32 %v2659, %v2663
  %v2680 = vadd.f32 %v2652, %v2662
  %v2681 = vadd.f32 %v2660, %v2663
  %v2682 = vmax.f32 %v2666, 0.0
  %v2683 = vmax.f32 %v2667, 0.0
  %v2684 = vmax.f32 %v2668, 0.0
  %v2685 = vmax.f32 %v2669, 0.0
  %v2686 = vmax.f32 %v2670, 0.0
  %v2687 = vmax.f32 %v2671, 0.0
  %v2688 = vmax.f32 %v2672, 0.0
  %v2689 = vmax.f32 %v2673, 0.0
  %v2690 = vmax.f32 %v2674, 0.0
  %v2691 = vmax.f32 %v2675, 0.0
  %v2692 = vmax.f32 %v2676, 0.0
  %v2693 = vmax.f32 %v2677, 0.0
  %v2694 = vmax.f32 %v2678, 0.0
  %v2695 = vmax.f32 %v2679, 0.0
  %v2696 = vmax.f32 %v2680, 0.0
  %v2697 = vmax.f32 %v2681, 0.0
  %v2698 = vpack.c.bf16 %v2684, %v2682
  %v2699 = vpack.c.bf16 %v2685, %v2683
  %v2700 = vpack.c.bf16 %v2688, %v2686
  %v2701 = vpack.c.bf16 %v2689, %v2687
  %v2702 = vpack.c.bf16 %v2692, %v2690
  %v2703 = vpack.c.bf16 %v2693, %v2691
  %v2704 = vpack.c.bf16 %v2696, %v2694
  %v2705 = vpack.c.bf16 %v2697, %v2695
  %v2706 = vld [vmem:[%s10] sm:$0xff]
  %v2707 = vld [vmem:[%s10 + $0x8] sm:$0xff]
  %v2708 = vld [vmem:[%s10 + $0x10] sm:$0xff]
  %v2709 = vld [vmem:[%s10 + $0x18] sm:$0xff]
  %v2710 = vld [vmem:[%s10 + $0x20] sm:$0xff]
  %v2711 = vld [vmem:[%s10 + $0x28] sm:$0xff]
  %v2712 = vld [vmem:[%s10 + $0x30] sm:$0xff]
  %v2713 = vld [vmem:[%s10 + $0x38] sm:$0xff]
  %v2714 = vld [vmem:[%s10 + $0x40] sm:$0xff]
  %v2715 = vld [vmem:[%s10 + $0x48] sm:$0xff]
  %v2716 = vld [vmem:[%s10 + $0x50] sm:$0xff]
  %v2717 = vld [vmem:[%s10 + $0x58] sm:$0xff]
  %v2718 = vld [vmem:[%s10 + $0x60] sm:$0xff]
  %v2719 = vld [vmem:[%s10 + $0x68] sm:$0xff]
  %v2720 = vld [vmem:[%s10 + $0x70] sm:$0xff]
  %v2721 = vld [vmem:[%s10 + $0x78] sm:$0xff]
  %v2722 = vld [vmem:[%s10 + $0x80] sm:$0xff]
  %v2723 = vld [vmem:[%s10 + $0x88] sm:$0xff]
  %v2724 = vld [vmem:[%s10 + $0x90] sm:$0xff]
  %v2725 = vld [vmem:[%s10 + $0x98] sm:$0xff]
  %v2726 = vld [vmem:[%s10 + $0xa0] sm:$0xff]
  %v2727 = vld [vmem:[%s10 + $0xa8] sm:$0xff]
  %v2728 = vld [vmem:[%s10 + $0xb0] sm:$0xff]
  %v2729 = vld [vmem:[%s10 + $0xb8] sm:$0xff]
  %v2730 = vld [vmem:[%s10 + $0xc0] sm:$0xff]
  %v2731 = vld [vmem:[%s10 + $0xc8] sm:$0xff]
  %v2732 = vld [vmem:[%s10 + $0xd0] sm:$0xff]
  %v2733 = vld [vmem:[%s10 + $0xd8] sm:$0xff]
  %v2734 = vld [vmem:[%s10 + $0xe0] sm:$0xff]
  %v2735 = vld [vmem:[%s10 + $0xe8] sm:$0xff]
  %v2736 = vld [vmem:[%s10 + $0xf0] sm:$0xff]
  %v2737 = vld [vmem:[%s10 + $0xf8] sm:$0xff]
  %v2738 = vpack.c.bf16 %v2707, %v2706
  %v2739 = vpack.c.bf16 %v2709, %v2708
  %v2740 = vpack.c.bf16 %v2711, %v2710
  %v2741 = vpack.c.bf16 %v2713, %v2712
  %v2742 = vpack.c.bf16 %v2715, %v2714
  %v2743 = vpack.c.bf16 %v2717, %v2716
  %v2744 = vpack.c.bf16 %v2719, %v2718
  %v2745 = vpack.c.bf16 %v2721, %v2720
  %v2746 = vpack.c.bf16 %v2723, %v2722
  %v2747 = vpack.c.bf16 %v2725, %v2724
  %v2748 = vpack.c.bf16 %v2727, %v2726
  %v2749 = vpack.c.bf16 %v2729, %v2728
  %v2750 = vpack.c.bf16 %v2731, %v2730
  %v2751 = vpack.c.bf16 %v2733, %v2732
  %v2752 = vpack.c.bf16 %v2735, %v2734
  %v2753 = vpack.c.bf16 %v2737, %v2736
  %2754 = vmatpush.bf16.msra.mxu0 %v2745
  %2755 = vmatpush.bf16.msra.mxu0 %v2744
  %2756 = vmatpush.bf16.msra.mxu0 %v2743
  %2757 = vmatpush.bf16.msra.mxu0 %v2742
  %2758 = vmatpush.bf16.msra.mxu0 %v2741
  %2759 = vmatpush.bf16.msra.mxu0 %v2740
  %2760 = vmatpush.bf16.msra.mxu0 %v2739
  %2761 = vmatpush.bf16.msra.mxu0 %v2738
  %2762 = vmatmul.bf16.gmra.mxu0 %v2698
  %v2763 = vpop.f32.mrf.mxu0
  %v2764 = vadd.f32 0.0, %v2763
  %v2765 = vpop.f32.mrf.mxu0
  %v2766 = vadd.f32 0.0, %v2765
  %2767 = vmatmul.bf16.gmra.mxu0 %v2700
  %v2768 = vpop.f32.mrf.mxu0
  %v2769 = vadd.f32 0.0, %v2768
  %v2770 = vpop.f32.mrf.mxu0
  %v2771 = vadd.f32 0.0, %v2770
  %2772 = vmatmul.bf16.gmra.mxu0 %v2702
  %v2773 = vpop.f32.mrf.mxu0
  %v2774 = vadd.f32 0.0, %v2773
  %v2775 = vpop.f32.mrf.mxu0
  %v2776 = vadd.f32 0.0, %v2775
  %2777 = vmatmul.bf16.gmra.mxu0 %v2704
  %v2778 = vpop.f32.mrf.mxu0
  %v2779 = vadd.f32 0.0, %v2778
  %v2780 = vpop.f32.mrf.mxu0
  %v2781 = vadd.f32 0.0, %v2780
  %2782 = vdwg.mxu0
  %2783 = vmatpush.bf16.msra.mxu0 %v2753
  %2784 = vmatpush.bf16.msra.mxu0 %v2752
  %2785 = vmatpush.bf16.msra.mxu0 %v2751
  %2786 = vmatpush.bf16.msra.mxu0 %v2750
  %2787 = vmatpush.bf16.msra.mxu0 %v2749
  %2788 = vmatpush.bf16.msra.mxu0 %v2748
  %2789 = vmatpush.bf16.msra.mxu0 %v2747
  %2790 = vmatpush.bf16.msra.mxu0 %v2746
  %2791 = vmatmul.bf16.gmra.mxu0 %v2699
  %v2792 = vpop.f32.mrf.mxu0
  %v2793 = vadd.f32 %v2764, %v2792
  %v2794 = vpop.f32.mrf.mxu0
  %v2795 = vadd.f32 %v2766, %v2794
  %2796 = vmatmul.bf16.gmra.mxu0 %v2701
  %v2797 = vpop.f32.mrf.mxu0
  %v2798 = vadd.f32 %v2769, %v2797
  %v2799 = vpop.f32.mrf.mxu0
  %v2800 = vadd.f32 %v2771, %v2799
  %2801 = vmatmul.bf16.gmra.mxu0 %v2703
  %v2802 = vpop.f32.mrf.mxu0
  %v2803 = vadd.f32 %v2774, %v2802
  %v2804 = vpop.f32.mrf.mxu0
  %v2805 = vadd.f32 %v2776, %v2804
  %2806 = vmatmul.bf16.gmra.mxu0 %v2705
  %v2807 = vpop.f32.mrf.mxu0
  %v2808 = vadd.f32 %v2779, %v2807
  %v2809 = vpop.f32.mrf.mxu0
  %v2810 = vadd.f32 %v2781, %v2809
  %2811 = vdwg.mxu0
  %v2812 = vld [vmem:[%s11] sm:$0x1]
  %v2813 = vld [vmem:[%s12] sm:$0x1]
  %v2814 = vld [vmem:[%s13] sm:$0x1]
  %vm2815 = vcmask 39936
  %v2817 = vsel %vm2815, %v2812, 0
  %v2820 = vsel %vm2815, %v2793, 0
  %v2823 = vsel %vm2815, %v2795, 0
  %v2826 = vsel %vm2815, %v2798, 0
  %v2829 = vsel %vm2815, %v2800, 0
  %v2832 = vsel %vm2815, %v2803, 0
  %v2835 = vsel %vm2815, %v2805, 0
  %v2838 = vsel %vm2815, %v2808, 0
  %v2841 = vsel %vm2815, %v2810, 0
  %2843 = vmatpush.xpose.msra.mxu0 0.0
  %2844 = vmatpush.xpose.msra.mxu0 0.0
  %2845 = vmatpush.xpose.msra.mxu0 0.0
  %2846 = vmatpush.xpose.msra.mxu0 0.0
  %2847 = vmatpush.xpose.msra.mxu0 0.0
  %2848 = vmatpush.xpose.msra.mxu0 0.0
  %2849 = vmatpush.xpose.msra.mxu0 0.0
  %2850 = vmatpush.xpose.msra.mxu0 0.0
  %2851 = vmatpush.xpose.msra.mxu0 %v2841
  %2852 = vmatpush.xpose.msra.mxu0 %v2838
  %2853 = vmatpush.xpose.msra.mxu0 %v2835
  %2854 = vmatpush.xpose.msra.mxu0 %v2832
  %2855 = vmatpush.xpose.msra.mxu0 %v2829
  %2856 = vmatpush.xpose.msra.mxu0 %v2826
  %2857 = vmatpush.xpose.msra.mxu0 %v2823
  %2858 = vmatpush.xpose.msra.mxu0 %v2820
  %2859 = vmatmul.f32.gmra.mxu0 %v2817
  %v2860 = vpop.f32.mrf.mxu0
  %v2861 = vadd.f32 0.0, %v2860
  %2862 = vdwg.mxu0
  %v2864 = vperm.slane %v2813, 0
  %v2866 = vmul.f32 %v2793, %v2864
  %v2867 = vmul.f32 %v2795, %v2864
  %v2868 = vmul.f32 %v2798, %v2864
  %v2869 = vmul.f32 %v2800, %v2864
  %v2870 = vmul.f32 %v2803, %v2864
  %v2871 = vmul.f32 %v2805, %v2864
  %v2872 = vmul.f32 %v2808, %v2864
  %v2873 = vmul.f32 %v2810, %v2864
  %v2874 = vsel %vm2815, %v2866, 0.0
  %2875 = vadd.xlane.f32.xlu0 %v2874
  %v2876 = vpop.xlane.xlu0 %2875
  %v2877 = vsel %vm2815, %v2867, 0.0
  %2878 = vadd.xlane.f32.xlu0 %v2877
  %v2879 = vpop.xlane.xlu0 %2878
  %v2880 = vsel %vm2815, %v2868, 0.0
  %2881 = vadd.xlane.f32.xlu0 %v2880
  %v2882 = vpop.xlane.xlu0 %2881
  %v2883 = vsel %vm2815, %v2869, 0.0
  %2884 = vadd.xlane.f32.xlu0 %v2883
  %v2885 = vpop.xlane.xlu0 %2884
  %v2886 = vsel %vm2815, %v2870, 0.0
  %2887 = vadd.xlane.f32.xlu0 %v2886
  %v2888 = vpop.xlane.xlu0 %2887
  %v2889 = vsel %vm2815, %v2871, 0.0
  %2890 = vadd.xlane.f32.xlu0 %v2889
  %v2891 = vpop.xlane.xlu0 %2890
  %v2892 = vsel %vm2815, %v2872, 0.0
  %2893 = vadd.xlane.f32.xlu0 %v2892
  %v2894 = vpop.xlane.xlu0 %2893
  %v2895 = vsel %vm2815, %v2873, 0.0
  %2896 = vadd.xlane.f32.xlu0 %v2895
  %v2897 = vpop.xlane.xlu0 %2896
  %v2898 = vpack.c.bf16 %v2795, %v2793
  %v2899 = vpack.c.bf16 %v2800, %v2798
  %v2900 = vpack.c.bf16 %v2805, %v2803
  %v2901 = vpack.c.bf16 %v2810, %v2808
  %v2902 = vperm.slane %v2861, 0
  %v2903 = vadd.f32 %v2876, %v2902
  %v2904 = vadd.f32 %v2879, %v2902
  %v2905 = vadd.f32 %v2882, %v2902
  %v2906 = vadd.f32 %v2885, %v2902
  %v2907 = vadd.f32 %v2888, %v2902
  %v2908 = vadd.f32 %v2891, %v2902
  %v2909 = vadd.f32 %v2894, %v2902
  %v2910 = vadd.f32 %v2897, %v2902
  %vm2911 = vcmp.gt.f32.partialorder %v2903, 0.0
  %vm2912 = vcmp.gt.f32.partialorder %v2904, 0.0
  %vm2913 = vcmp.gt.f32.partialorder %v2905, 0.0
  %vm2914 = vcmp.gt.f32.partialorder %v2906, 0.0
  %vm2915 = vcmp.gt.f32.partialorder %v2907, 0.0
  %vm2916 = vcmp.gt.f32.partialorder %v2908, 0.0
  %vm2917 = vcmp.gt.f32.partialorder %v2909, 0.0
  %vm2918 = vcmp.gt.f32.partialorder %v2910, 0.0
  %v2919 = vmul.f32 %v2903, 0.2
  %v2920 = vmul.f32 %v2904, 0.2
  %v2921 = vmul.f32 %v2905, 0.2
  %v2922 = vmul.f32 %v2906, 0.2
  %v2923 = vmul.f32 %v2907, 0.2
  %v2924 = vmul.f32 %v2908, 0.2
  %v2925 = vmul.f32 %v2909, 0.2
  %v2926 = vmul.f32 %v2910, 0.2
  %v2927 = vsel %vm2911, %v2903, %v2919
  %v2928 = vsel %vm2912, %v2904, %v2920
  %v2929 = vsel %vm2913, %v2905, %v2921
  %v2930 = vsel %vm2914, %v2906, %v2922
  %v2931 = vsel %vm2915, %v2907, %v2923
  %v2932 = vsel %vm2916, %v2908, %v2924
  %v2933 = vsel %vm2917, %v2909, %v2925
  %v2934 = vsel %vm2918, %v2910, %v2926
  %v2935 = vsel %vm290, %v2927, -1e+30
  %v2936 = vsel %vm291, %v2928, -1e+30
  %v2937 = vsel %vm292, %v2929, -1e+30
  %v2938 = vsel %vm293, %v2930, -1e+30
  %v2939 = vsel %vm294, %v2931, -1e+30
  %v2940 = vsel %vm295, %v2932, -1e+30
  %v2941 = vsel %vm296, %v2933, -1e+30
  %v2942 = vsel %vm297, %v2934, -1e+30
  %v2943 = vsel %vm387, %v2935, -inf
  %2944 = vmax.xlane.f32.xlu0 %v2943
  %v2945 = vpop.xlane.xlu0 %2944
  %v2946 = vsel %vm387, %v2936, -inf
  %2947 = vmax.xlane.f32.xlu0 %v2946
  %v2948 = vpop.xlane.xlu0 %2947
  %v2949 = vsel %vm387, %v2937, -inf
  %2950 = vmax.xlane.f32.xlu0 %v2949
  %v2951 = vpop.xlane.xlu0 %2950
  %v2952 = vsel %vm387, %v2938, -inf
  %2953 = vmax.xlane.f32.xlu0 %v2952
  %v2954 = vpop.xlane.xlu0 %2953
  %v2955 = vsel %vm387, %v2939, -inf
  %2956 = vmax.xlane.f32.xlu0 %v2955
  %v2957 = vpop.xlane.xlu0 %2956
  %v2958 = vsel %vm387, %v2940, -inf
  %2959 = vmax.xlane.f32.xlu0 %v2958
  %v2960 = vpop.xlane.xlu0 %2959
  %v2961 = vsel %vm387, %v2941, -inf
  %2962 = vmax.xlane.f32.xlu0 %v2961
  %v2963 = vpop.xlane.xlu0 %2962
  %v2964 = vsel %vm387, %v2942, -inf
  %2965 = vmax.xlane.f32.xlu0 %v2964
  %v2966 = vpop.xlane.xlu0 %2965
  %v2967 = vsub.f32 %v2935, %v2945
  %v2968 = vsub.f32 %v2936, %v2948
  %v2969 = vsub.f32 %v2937, %v2951
  %v2970 = vsub.f32 %v2938, %v2954
  %v2971 = vsub.f32 %v2939, %v2957
  %v2972 = vsub.f32 %v2940, %v2960
  %v2973 = vsub.f32 %v2941, %v2963
  %v2974 = vsub.f32 %v2942, %v2966
  %v2975 = vmul.f32 %v2967, 1.442695
  %v2976 = vpow.pop %v2975
  %v2977 = vmul.f32 %v2968, 1.442695
  %v2978 = vpow.pop %v2977
  %v2979 = vmul.f32 %v2969, 1.442695
  %v2980 = vpow.pop %v2979
  %v2981 = vmul.f32 %v2970, 1.442695
  %v2982 = vpow.pop %v2981
  %v2983 = vmul.f32 %v2971, 1.442695
  %v2984 = vpow.pop %v2983
  %v2985 = vmul.f32 %v2972, 1.442695
  %v2986 = vpow.pop %v2985
  %v2987 = vmul.f32 %v2973, 1.442695
  %v2988 = vpow.pop %v2987
  %v2989 = vmul.f32 %v2974, 1.442695
  %v2990 = vpow.pop %v2989
  %v2991 = vsel %vm387, %v2976, 0.0
  %2992 = vadd.xlane.f32.xlu0 %v2991
  %v2993 = vpop.xlane.xlu0 %2992
  %v2994 = vsel %vm387, %v2978, 0.0
  %2995 = vadd.xlane.f32.xlu0 %v2994
  %v2996 = vpop.xlane.xlu0 %2995
  %v2997 = vsel %vm387, %v2980, 0.0
  %2998 = vadd.xlane.f32.xlu0 %v2997
  %v2999 = vpop.xlane.xlu0 %2998
  %v3000 = vsel %vm387, %v2982, 0.0
  %3001 = vadd.xlane.f32.xlu0 %v3000
  %v3002 = vpop.xlane.xlu0 %3001
  %v3003 = vsel %vm387, %v2984, 0.0
  %3004 = vadd.xlane.f32.xlu0 %v3003
  %v3005 = vpop.xlane.xlu0 %3004
  %v3006 = vsel %vm387, %v2986, 0.0
  %3007 = vadd.xlane.f32.xlu0 %v3006
  %v3008 = vpop.xlane.xlu0 %3007
  %v3009 = vsel %vm387, %v2988, 0.0
  %3010 = vadd.xlane.f32.xlu0 %v3009
  %v3011 = vpop.xlane.xlu0 %3010
  %v3012 = vsel %vm387, %v2990, 0.0
  %3013 = vadd.xlane.f32.xlu0 %v3012
  %v3014 = vpop.xlane.xlu0 %3013
  %v3015 = vrcp.pop %v2993
  %v3016 = vrcp.pop %v2996
  %v3017 = vrcp.pop %v2999
  %v3018 = vrcp.pop %v3002
  %v3019 = vrcp.pop %v3005
  %v3020 = vrcp.pop %v3008
  %v3021 = vrcp.pop %v3011
  %v3022 = vrcp.pop %v3014
  %v3023 = vmul.f32 %v2976, %v3015
  %v3024 = vmul.f32 %v2978, %v3016
  %v3025 = vmul.f32 %v2980, %v3017
  %v3026 = vmul.f32 %v2982, %v3018
  %v3027 = vmul.f32 %v2984, %v3019
  %v3028 = vmul.f32 %v2986, %v3020
  %v3029 = vmul.f32 %v2988, %v3021
  %v3030 = vmul.f32 %v2990, %v3022
  %v3031 = vpack.c.bf16 %v3024, %v3023
  %v3032 = vpack.c.bf16 %v3026, %v3025
  %v3033 = vpack.c.bf16 %v3028, %v3027
  %v3034 = vpack.c.bf16 %v3030, %v3029
  %v3036 = vperm.slane %v2814, 0
  %v3039 = vsel %vm387, %v3031, 0
  %v3042 = vsel %vm387, %v3032, 0
  %v3045 = vsel %vm387, %v3033, 0
  %v3048 = vsel %vm387, %v3034, 0
  %3050 = vmatpush.bf16.msra.mxu0 0
  %3051 = vmatpush.bf16.msra.mxu0 0
  %3052 = vmatpush.bf16.msra.mxu0 0
  %3053 = vmatpush.bf16.msra.mxu0 0
  %3054 = vmatpush.bf16.msra.mxu0 %v2901
  %3055 = vmatpush.bf16.msra.mxu0 %v2900
  %3056 = vmatpush.bf16.msra.mxu0 %v2899
  %3057 = vmatpush.bf16.msra.mxu0 %v2898
  %3058 = vmatmul.bf16.gmra.mxu0 %v3039
  %v3059 = vpop.f32.mrf.mxu0
  %v3060 = vadd.f32 %v3036, %v3059
  %v3061 = vpop.f32.mrf.mxu0
  %v3062 = vadd.f32 %v3036, %v3061
  %3063 = vmatmul.bf16.gmra.mxu0 %v3042
  %v3064 = vpop.f32.mrf.mxu0
  %v3065 = vadd.f32 %v3036, %v3064
  %v3066 = vpop.f32.mrf.mxu0
  %v3067 = vadd.f32 %v3036, %v3066
  %3068 = vmatmul.bf16.gmra.mxu0 %v3045
  %v3069 = vpop.f32.mrf.mxu0
  %v3070 = vadd.f32 %v3036, %v3069
  %v3071 = vpop.f32.mrf.mxu0
  %v3072 = vadd.f32 %v3036, %v3071
  %3073 = vmatmul.bf16.gmra.mxu0 %v3048
  %v3074 = vpop.f32.mrf.mxu0
  %v3075 = vadd.f32 %v3036, %v3074
  %v3076 = vpop.f32.mrf.mxu0
  %v3077 = vadd.f32 %v3036, %v3076
  %3078 = vdwg.mxu0
  %3079 = vst.msk [vmem:[%s14] sm:$0xff] %vm2815, %v3060
  %3080 = vst.msk [vmem:[%s14 + $0x8] sm:$0xff] %vm2815, %v3062
  %3081 = vst.msk [vmem:[%s14 + $0x10] sm:$0xff] %vm2815, %v3065
  %3082 = vst.msk [vmem:[%s14 + $0x18] sm:$0xff] %vm2815, %v3067
  %3083 = vst.msk [vmem:[%s14 + $0x20] sm:$0xff] %vm2815, %v3070
  %3084 = vst.msk [vmem:[%s14 + $0x28] sm:$0xff] %vm2815, %v3072
  %3085 = vst.msk [vmem:[%s14 + $0x30] sm:$0xff] %vm2815, %v3075
  %3086 = vst.msk [vmem:[%s14 + $0x38] sm:$0xff] %vm2815, %v3077
  // Predicated region
  $region58: #{gat_forward.1} parent=0 // pred_check
    _
  $region59: #{gat_forward.1} parent=0 // pred_check_branch
    %3088 = sbr.rel (0) target = $region61
  $region60: #{gat_forward.1} parent=0 // pred_region
    _
  $region61: #{gat_forward.1} parent=0 // pred_fallthru
    _
  // Predicated region
  $region62: #{gat_forward.1} parent=0 // pred_check
    _
  $region63: #{gat_forward.1} parent=0 // pred_check_branch
    %3090 = sbr.rel (0) target = $region65
  $region64: #{gat_forward.1} parent=0 // pred_region
    _
  $region65: #{gat_forward.1} parent=0 // pred_fallthru
    _

</llo_original>
